<compile_context>
chip_gen: v6e
topology: v6e:2x2x1
jax: 0.10.0
libtpu: 0.0.40
codegen_flags: <defaults>
</compile_context>

<pallas_src>
import functools

import jax
import jax.numpy as jnp
from jax.experimental import pallas as pl
from jax.experimental.pallas import tpu as pltpu

EPS = 1e-5
TN = 512        # output-feature tile for the standalone first/last layers
TN_MID = 512    # output-feature tile inside the fused 6-layer kernel
D_MID = 1024    # width of the fused middle layers
L_MID = 6       # number of fused middle layers


# ----------------------------------------------------------------------------
# Standalone layer: BN1d(train) + Linear (+ReLU), grid over output features.
# BN statistics are recomputed per N-tile (x is tiny: (2, K) in VMEM, and the
# recompute keeps the N axis fully independent => safe to mark "parallel").
# ----------------------------------------------------------------------------
def _bn_linear_kernel(x_ref, gamma_ref, beta_ref, w_ref, b_ref, o_ref, *, apply_relu):
    x = x_ref[...]                                        # (R, K) f32, resident
    mean = jnp.mean(x, axis=0, keepdims=True)             # biased batch stats
    var = jnp.mean((x - mean) ** 2, axis=0, keepdims=True)
    s = gamma_ref[...] * jax.lax.rsqrt(var + EPS)         # folded BN scale
    t = beta_ref[...] - mean * s                          # folded BN shift
    xn = (x * s + t).astype(jnp.bfloat16)                 # bf16 MXU operand
    y = jnp.dot(xn, w_ref[...], preferred_element_type=jnp.float32) + b_ref[...]
    if apply_relu:
        y = jnp.maximum(y, 0.0)
    o_ref[...] = y


def bn_linear(x, gamma, beta, w, b, *, apply_relu):
    R, K = x.shape
    N = w.shape[1]
    tn = TN if (N % TN == 0) else N                       # tiny tail layer (N=10)
    kernel = functools.partial(_bn_linear_kernel, apply_relu=apply_relu)
    cost = pl.CostEstimate(
        flops=2 * R * K * N,
        transcendentals=0,
        bytes_accessed=K * N * 2 + (R * K + 2 * K + N + R * N) * 4,
    )
    return pl.pallas_call(
        kernel,
        out_shape=jax.ShapeDtypeStruct((R, N), jnp.float32),
        grid=(N // tn,),
        in_specs=[
            pl.BlockSpec((R, K), lambda j: (0, 0)),       # x: resident across tiles
            pl.BlockSpec((1, K), lambda j: (0, 0)),       # gamma: resident
            pl.BlockSpec((1, K), lambda j: (0, 0)),       # beta: resident
            pl.BlockSpec((K, tn), lambda j: (0, j)),      # bf16 weight tile (streamed)
            pl.BlockSpec((1, tn), lambda j: (0, j)),      # bias tile
        ],
        out_specs=pl.BlockSpec((R, tn), lambda j: (0, j)),
        compiler_params=pltpu.CompilerParams(dimension_semantics=("parallel",)),
        cost_estimate=cost,
    )(x, gamma, beta, w, b)


# ----------------------------------------------------------------------------
# Fused chain of the 6 identical [BN1d(1024) + Linear(1024,1024) + ReLU] layers.
# Grid = (layer, n_tile). The (R, 1024) activation lives in the resident output
# VMEM buffer (constant out block index); each layer's normalized bf16 input is
# cached once per layer in a scratch and reused for every weight tile.
# Layer axis is sequential (data dependency) => both axes "arbitrary".
# ----------------------------------------------------------------------------
def _fused_mid_kernel(x_ref, gamma_ref, beta_ref, w_ref, b_ref, o_ref, xn_ref):
    l = pl.program_id(0)
    j = pl.program_id(1)

    # Seed the resident activation buffer with the incoming activation.
    @pl.when((l == 0) & (j == 0))
    def _():
        o_ref[...] = x_ref[...]

    # Start of each layer: fold BN into scale/shift, normalize once, cache bf16.
    @pl.when(j == 0)
    def _():
        a = o_ref[...]                                    # previous layer output
        mean = jnp.mean(a, axis=0, keepdims=True)
        var = jnp.mean((a - mean) ** 2, axis=0, keepdims=True)
        s = gamma_ref[0] * jax.lax.rsqrt(var + EPS)
        t = beta_ref[0] - mean * s
        xn_ref[...] = (a * s + t).astype(jnp.bfloat16)

    # One output-feature tile of this layer on the MXU (bf16 x bf16 -> f32 acc).
    y = jnp.dot(xn_ref[...], w_ref[0], preferred_element_type=jnp.float32)
    y = jnp.maximum(y + b_ref[0], 0.0)
    col = pl.multiple_of(j * TN_MID, TN_MID)
    o_ref[:, pl.ds(col, TN_MID)] = y                      # becomes next layer's input


def fused_mid(x, gammas, betas, ws, bs):
    R, D = x.shape
    L = ws.shape[0]
    cost = pl.CostEstimate(
        flops=2 * R * D * D * L,
        transcendentals=0,
        bytes_accessed=L * D * D * 2 + L * 3 * D * 4 + 2 * R * D * 4,
    )
    return pl.pallas_call(
        _fused_mid_kernel,
        out_shape=jax.ShapeDtypeStruct((R, D), jnp.float32),
        grid=(L, D // TN_MID),
        in_specs=[
            pl.BlockSpec((R, D), lambda l, j: (0, 0)),            # incoming activation
            pl.BlockSpec((1, 1, D), lambda l, j: (l, 0, 0)),      # gamma[l]
            pl.BlockSpec((1, 1, D), lambda l, j: (l, 0, 0)),      # beta[l]
            pl.BlockSpec((1, D, TN_MID), lambda l, j: (l, 0, j)),  # bf16 W[l] tile
            pl.BlockSpec((1, 1, TN_MID), lambda l, j: (l, 0, j)),  # bias[l] tile
        ],
        out_specs=pl.BlockSpec((R, D), lambda l, j: (0, 0)),      # resident activation
        scratch_shapes=[pltpu.VMEM((R, D), jnp.bfloat16)],        # cached BN'd input
        compiler_params=pltpu.CompilerParams(
            dimension_semantics=("arbitrary", "arbitrary")),
        cost_estimate=cost,
    )(x, gammas, betas, ws, bs)


# ----------------------------------------------------------------------------
# Parameters & forward
# ----------------------------------------------------------------------------
def init_fcc_params(key):
    """Deterministic init mirroring FCC layer shapes; weights stored as bf16."""
    def layer(k, k_in, n_out):
        kg, kb, kw, kbi = jax.random.split(k, 4)
        gamma = 1.0 + 0.1 * jax.random.normal(kg, (1, k_in), jnp.float32)
        beta = 0.1 * jax.random.normal(kb, (1, k_in), jnp.float32)
        bound = 1.0 / (k_in ** 0.5)   # torch Linear default U(-1/sqrt(in), 1/sqrt(in))
        w = jax.random.uniform(kw, (k_in, n_out), jnp.float32, -bound, bound)
        b = jax.random.uniform(kbi, (1, n_out), jnp.float32, -bound, bound)
        return gamma, beta, w.astype(jnp.bfloat16), b

    keys = jax.random.split(key, 8)
    first = layer(keys[0], 28 * 28, 1024)
    mids = [layer(keys[i], 1024, 1024) for i in range(1, 7)]
    last = layer(keys[7], 1024, 10)
    mid = tuple(jnp.stack([m[i] for m in mids]) for i in range(4))  # stacked (6, ...)
    return {"first": first, "mid": mid, "last": last}


def fcc_forward(x, params):
    R, C, H, W = x.shape
    x = jnp.reshape(x, (R, C * H * W)).astype(jnp.float32)  # torch .resize(R, C*H*W)
    g, bt, w, b = params["first"]
    x = bn_linear(x, g, bt, w, b, apply_relu=True)
    x = fused_mid(x, *params["mid"])
    g, bt, w, b = params["last"]
    x = bn_linear(x, g, bt, w, b, apply_relu=False)
    return x


def fcc_reference(x, params):
    """Pure-JAX reference with identical numerics (bf16 weights, f32 accum)."""
    def one(x, g, bt, w, b, relu):
        mean = jnp.mean(x, axis=0, keepdims=True)
        var = jnp.mean((x - mean) ** 2, axis=0, keepdims=True)
        s = g * jax.lax.rsqrt(var + EPS)
        t = bt - mean * s
        xn = (x * s + t).astype(jnp.bfloat16)
        y = jnp.dot(xn, w, preferred_element_type=jnp.float32) + b
        return jnp.maximum(y, 0.0) if relu else y

    R, C, H, W = x.shape
    x = jnp.reshape(x, (R, C * H * W)).astype(jnp.float32)
    g, bt, w, b = params["first"]
    x = one(x, g, bt, w, b, True)
    gs, bts, ws, bs = params["mid"]
    for i in range(L_MID):
        x = one(x, gs[i], bts[i], ws[i], bs[i], True)
    g, bt, w, b = params["last"]
    return one(x, g, bt, w, b, False)


if __name__ == "__main__":
    key = jax.random.PRNGKey(0)
    key_params, key_x = jax.random.split(key)

    params = init_fcc_params(key_params)

    # MNIST-like input: (R=2, C=1, H=28, W=28) so that C*H*W == 784.
    x = jax.random.normal(key_x, (2, 1, 28, 28), dtype=jnp.float32)

    fwd = jax.jit(fcc_forward)
    out = jax.block_until_ready(fwd(x, params))

    assert out.shape == (2, 10), out.shape
    assert out.dtype == jnp.float32, out.dtype
    assert bool(jnp.all(jnp.isfinite(out)))

    ref = jax.block_until_ready(jax.jit(fcc_reference)(x, params))
    assert bool(jnp.allclose(out, ref, atol=3e-2, rtol=3e-2)), (
        float(jnp.max(jnp.abs(out - ref))))

    print("KERNEL_OK")
</pallas_src>

<mosaic_0001>
module attributes {stable_mosaic.version = 11 : i64} {
  func.func @_bn_linear_kernel(%arg0: i32, %arg1: memref<2x784xf32, #tpu.memory_space<vmem>>, %arg2: memref<1x784xf32, #tpu.memory_space<vmem>>, %arg3: memref<1x784xf32, #tpu.memory_space<vmem>>, %arg4: memref<784x512xbf16, #tpu.memory_space<vmem>>, %arg5: memref<1x512xf32, #tpu.memory_space<vmem>>, %arg6: memref<2x512xf32, #tpu.memory_space<vmem>>) attributes {dimension_semantics = [#tpu.dimension_semantics<parallel>], iteration_bounds = array<i64: 2>, scalar_prefetch = 0 : i64, scratch_operands = 0 : i64, tpu.core_type = #tpu.core_type<tc>, window_params = [{pipeline_mode = #tpu.pipeline_mode<synchronous>, transform_indices = @transform_0, window_bounds = array<i64: 2, 784>}, {pipeline_mode = #tpu.pipeline_mode<synchronous>, transform_indices = @transform_1, window_bounds = array<i64: 1, 784>}, {pipeline_mode = #tpu.pipeline_mode<synchronous>, transform_indices = @transform_2, window_bounds = array<i64: 1, 784>}, {transform_indices = @transform_3, window_bounds = array<i64: 784, 512>}, {transform_indices = @transform_4, window_bounds = array<i64: 1, 512>}, {transform_indices = @transform_5, window_bounds = array<i64: 2, 512>}]} {
    %c0 = arith.constant 0 : index
    %c0_0 = arith.constant 0 : index
    %0 = vector.load %arg1[%c0, %c0_0] : memref<2x784xf32, #tpu.memory_space<vmem>>, vector<2x784xf32>
    %cst = arith.constant dense<0.000000e+00> : vector<784xf32>
    %1 = vector.multi_reduction <add>, %0, %cst [0] : vector<2x784xf32> to vector<784xf32>
    %2 = vector.shape_cast %1 : vector<784xf32> to vector<1x784xf32>
    %cst_1 = arith.constant 2.000000e+00 : f32
    %3 = vector.broadcast %cst_1 : f32 to vector<1x784xf32>
    %4 = arith.divf %2, %3 : vector<1x784xf32>
    %5 = vector.broadcast %4 : vector<1x784xf32> to vector<2x784xf32>
    %6 = arith.subf %0, %5 : vector<2x784xf32>
    %7 = arith.mulf %6, %6 : vector<2x784xf32>
    %cst_2 = arith.constant dense<0.000000e+00> : vector<784xf32>
    %8 = vector.multi_reduction <add>, %7, %cst_2 [0] : vector<2x784xf32> to vector<784xf32>
    %9 = vector.shape_cast %8 : vector<784xf32> to vector<1x784xf32>
    %cst_3 = arith.constant 2.000000e+00 : f32
    %10 = vector.broadcast %cst_3 : f32 to vector<1x784xf32>
    %11 = arith.divf %9, %10 : vector<1x784xf32>
    %c0_4 = arith.constant 0 : index
    %c0_5 = arith.constant 0 : index
    %12 = vector.load %arg2[%c0_4, %c0_5] : memref<1x784xf32, #tpu.memory_space<vmem>>, vector<1x784xf32>
    %cst_6 = arith.constant 9.99999974E-6 : f32
    %13 = vector.broadcast %cst_6 : f32 to vector<1x784xf32>
    %14 = arith.addf %11, %13 : vector<1x784xf32>
    %15 = math.rsqrt %14 : vector<1x784xf32>
    %16 = arith.mulf %12, %15 : vector<1x784xf32>
    %c0_7 = arith.constant 0 : index
    %c0_8 = arith.constant 0 : index
    %17 = vector.load %arg3[%c0_7, %c0_8] : memref<1x784xf32, #tpu.memory_space<vmem>>, vector<1x784xf32>
    %18 = arith.mulf %4, %16 : vector<1x784xf32>
    %19 = arith.subf %17, %18 : vector<1x784xf32>
    %20 = vector.broadcast %16 : vector<1x784xf32> to vector<2x784xf32>
    %21 = arith.mulf %0, %20 : vector<2x784xf32>
    %22 = vector.broadcast %19 : vector<1x784xf32> to vector<2x784xf32>
    %23 = arith.addf %21, %22 : vector<2x784xf32>
    %24 = arith.truncf %23 : vector<2x784xf32> to vector<2x784xbf16>
    %c0_9 = arith.constant 0 : index
    %c0_10 = arith.constant 0 : index
    %25 = vector.load %arg4[%c0_9, %c0_10] : memref<784x512xbf16, #tpu.memory_space<vmem>>, vector<784x512xbf16>
    %cst_11 = arith.constant dense<0.000000e+00> : vector<2x512xf32>
    %26 = tpu.matmul %24, %25, %cst_11 {dimension_numbers = #tpu.dot_dimension_numbers<[1], [0], [0], [1], [0, 0, 1, 1], [], []>} : vector<2x784xbf16>, vector<784x512xbf16>, vector<2x512xf32> -> vector<2x512xf32>
    %c0_12 = arith.constant 0 : index
    %c0_13 = arith.constant 0 : index
    %27 = vector.load %arg5[%c0_12, %c0_13] : memref<1x512xf32, #tpu.memory_space<vmem>>, vector<1x512xf32>
    %28 = vector.broadcast %27 : vector<1x512xf32> to vector<2x512xf32>
    %29 = arith.addf %26, %28 : vector<2x512xf32>
    %cst_14 = arith.constant 0.000000e+00 : f32
    %30 = vector.broadcast %cst_14 : f32 to vector<2x512xf32>
    %31 = arith.maximumf %29, %30 : vector<2x512xf32>
    %c0_15 = arith.constant 0 : index
    %c0_16 = arith.constant 0 : index
    %32 = vector.load %arg6[%c0_15, %c0_16] : memref<2x512xf32, #tpu.memory_space<vmem>>, vector<2x512xf32>
    tpu.vector_store %arg6[%c0_15, %c0_16], %31 {strides = array<i32>} : memref<2x512xf32, #tpu.memory_space<vmem>>, vector<2x512xf32>,
    return
  }
  func.func @transform_0(%arg0: i32) -> (i32, i32) {
    %c0_i32 = arith.constant 0 : i32
    %c0_i32_0 = arith.constant 0 : i32
    %c0_i32_1 = arith.constant 0 : i32
    return %c0_i32, %c0_i32_0 : i32, i32
  }
  func.func @transform_1(%arg0: i32) -> (i32, i32) {
    %c0_i32 = arith.constant 0 : i32
    %c0_i32_0 = arith.constant 0 : i32
    %c0_i32_1 = arith.constant 0 : i32
    return %c0_i32, %c0_i32_0 : i32, i32
  }
  func.func @transform_2(%arg0: i32) -> (i32, i32) {
    %c0_i32 = arith.constant 0 : i32
    %c0_i32_0 = arith.constant 0 : i32
    %c0_i32_1 = arith.constant 0 : i32
    return %c0_i32, %c0_i32_0 : i32, i32
  }
  func.func @transform_3(%arg0: i32) -> (i32, i32) {
    %c0_i32 = arith.constant 0 : i32
    %c0_i32_0 = arith.constant 0 : i32
    return %c0_i32, %arg0 : i32, i32
  }
  func.func @transform_4(%arg0: i32) -> (i32, i32) {
    %c0_i32 = arith.constant 0 : i32
    %c0_i32_0 = arith.constant 0 : i32
    return %c0_i32, %arg0 : i32, i32
  }
  func.func @transform_5(%arg0: i32) -> (i32, i32) {
    %c0_i32 = arith.constant 0 : i32
    %c0_i32_0 = arith.constant 0 : i32
    return %c0_i32, %arg0 : i32, i32
  }
}

module attributes {stable_mosaic.version = 11 : i64} {
  func.func @_fused_mid_kernel(%arg0: i32, %arg1: i32, %arg2: memref<2x1024xf32, #tpu.memory_space<vmem>>, %arg3: memref<1x1x1024xf32, #tpu.memory_space<vmem>>, %arg4: memref<1x1x1024xf32, #tpu.memory_space<vmem>>, %arg5: memref<1x1024x512xbf16, #tpu.memory_space<vmem>>, %arg6: memref<1x1x512xf32, #tpu.memory_space<vmem>>, %arg7: memref<2x1024xf32, #tpu.memory_space<vmem>>, %arg8: memref<2x1024xbf16, #tpu.memory_space<vmem>>) attributes {dimension_semantics = [#tpu.dimension_semantics<arbitrary>, #tpu.dimension_semantics<arbitrary>], iteration_bounds = array<i64: 6, 2>, scalar_prefetch = 0 : i64, scratch_operands = 1 : i64, tpu.core_type = #tpu.core_type<tc>, window_params = [{pipeline_mode = #tpu.pipeline_mode<synchronous>, transform_indices = @transform_0, window_bounds = array<i64: 2, 1024>}, {transform_indices = @transform_1, window_bounds = array<i64: 1, 1, 1024>}, {transform_indices = @transform_2, window_bounds = array<i64: 1, 1, 1024>}, {transform_indices = @transform_3, window_bounds = array<i64: 1, 1024, 512>}, {transform_indices = @transform_4, window_bounds = array<i64: 1, 1, 512>}, {pipeline_mode = #tpu.pipeline_mode<synchronous>, transform_indices = @transform_5, window_bounds = array<i64: 2, 1024>}]} {
    %c0_i32 = arith.constant 0 : i32
    %0 = arith.cmpi eq, %arg0, %c0_i32 : i32
    %c0_i32_0 = arith.constant 0 : i32
    %1 = arith.cmpi eq, %arg1, %c0_i32_0 : i32
    %2 = arith.andi %0, %1 : i1
    %3 = arith.extui %2 : i1 to i32
    %c0_i32_1 = arith.constant 0 : i32
    %4 = arith.cmpi ne, %3, %c0_i32_1 : i32
    scf.if %4 {
      %c0_13 = arith.constant 0 : index
      %c0_14 = arith.constant 0 : index
      %22 = vector.load %arg2[%c0_13, %c0_14] : memref<2x1024xf32, #tpu.memory_space<vmem>>, vector<2x1024xf32>
      %c0_15 = arith.constant 0 : index
      %c0_16 = arith.constant 0 : index
      %23 = vector.load %arg7[%c0_15, %c0_16] : memref<2x1024xf32, #tpu.memory_space<vmem>>, vector<2x1024xf32>
      tpu.vector_store %arg7[%c0_15, %c0_16], %22 {strides = array<i32>} : memref<2x1024xf32, #tpu.memory_space<vmem>>, vector<2x1024xf32>,
    } else {
    }
    %c0_i32_2 = arith.constant 0 : i32
    %5 = arith.cmpi eq, %arg1, %c0_i32_2 : i32
    %6 = arith.extui %5 : i1 to i32
    %c0_i32_3 = arith.constant 0 : i32
    %7 = arith.cmpi ne, %6, %c0_i32_3 : i32
    scf.if %7 {
      %c0_13 = arith.constant 0 : index
      %c0_14 = arith.constant 0 : index
      %22 = vector.load %arg7[%c0_13, %c0_14] : memref<2x1024xf32, #tpu.memory_space<vmem>>, vector<2x1024xf32>
      %cst_15 = arith.constant dense<0.000000e+00> : vector<1024xf32>
      %23 = vector.multi_reduction <add>, %22, %cst_15 [0] : vector<2x1024xf32> to vector<1024xf32>
      %24 = vector.shape_cast %23 : vector<1024xf32> to vector<1x1024xf32>
      %cst_16 = arith.constant 2.000000e+00 : f32
      %25 = vector.broadcast %cst_16 : f32 to vector<1x1024xf32>
      %26 = arith.divf %24, %25 : vector<1x1024xf32>
      %27 = vector.broadcast %26 : vector<1x1024xf32> to vector<2x1024xf32>
      %28 = arith.subf %22, %27 : vector<2x1024xf32>
      %29 = arith.mulf %28, %28 : vector<2x1024xf32>
      %cst_17 = arith.constant dense<0.000000e+00> : vector<1024xf32>
      %30 = vector.multi_reduction <add>, %29, %cst_17 [0] : vector<2x1024xf32> to vector<1024xf32>
      %31 = vector.shape_cast %30 : vector<1024xf32> to vector<1x1024xf32>
      %cst_18 = arith.constant 2.000000e+00 : f32
      %32 = vector.broadcast %cst_18 : f32 to vector<1x1024xf32>
      %33 = arith.divf %31, %32 : vector<1x1024xf32>
      %c0_19 = arith.constant 0 : index
      %c0_20 = arith.constant 0 : index
      %c0_21 = arith.constant 0 : index
      %34 = vector.load %arg3[%c0_19, %c0_20, %c0_21] : memref<1x1x1024xf32, #tpu.memory_space<vmem>>, vector<1x1x1024xf32>
      %35 = vector.shape_cast %34 : vector<1x1x1024xf32> to vector<1x1024xf32>
      %cst_22 = arith.constant 9.99999974E-6 : f32
      %36 = vector.broadcast %cst_22 : f32 to vector<1x1024xf32>
      %37 = arith.addf %33, %36 : vector<1x1024xf32>
      %38 = math.rsqrt %37 : vector<1x1024xf32>
      %39 = arith.mulf %35, %38 : vector<1x1024xf32>
      %c0_23 = arith.constant 0 : index
      %c0_24 = arith.constant 0 : index
      %c0_25 = arith.constant 0 : index
      %40 = vector.load %arg4[%c0_23, %c0_24, %c0_25] : memref<1x1x1024xf32, #tpu.memory_space<vmem>>, vector<1x1x1024xf32>
      %41 = vector.shape_cast %40 : vector<1x1x1024xf32> to vector<1x1024xf32>
      %42 = arith.mulf %26, %39 : vector<1x1024xf32>
      %43 = arith.subf %41, %42 : vector<1x1024xf32>
      %44 = vector.broadcast %39 : vector<1x1024xf32> to vector<2x1024xf32>
      %45 = arith.mulf %22, %44 : vector<2x1024xf32>
      %46 = vector.broadcast %43 : vector<1x1024xf32> to vector<2x1024xf32>
      %47 = arith.addf %45, %46 : vector<2x1024xf32>
      %48 = arith.truncf %47 : vector<2x1024xf32> to vector<2x1024xbf16>
      %c0_26 = arith.constant 0 : index
      %c0_27 = arith.constant 0 : index
      %49 = vector.load %arg8[%c0_26, %c0_27] : memref<2x1024xbf16, #tpu.memory_space<vmem>>, vector<2x1024xbf16>
      tpu.vector_store %arg8[%c0_26, %c0_27], %48 {strides = array<i32>} : memref<2x1024xbf16, #tpu.memory_space<vmem>>, vector<2x1024xbf16>,
    } else {
    }
    %c0 = arith.constant 0 : index
    %c0_4 = arith.constant 0 : index
    %8 = vector.load %arg8[%c0, %c0_4] : memref<2x1024xbf16, #tpu.memory_space<vmem>>, vector<2x1024xbf16>
    %c0_5 = arith.constant 0 : index
    %c0_6 = arith.constant 0 : index
    %c0_7 = arith.constant 0 : index
    %9 = vector.load %arg5[%c0_5, %c0_6, %c0_7] : memref<1x1024x512xbf16, #tpu.memory_space<vmem>>, vector<1x1024x512xbf16>
    %10 = vector.shape_cast %9 : vector<1x1024x512xbf16> to vector<1024x512xbf16>
    %cst = arith.constant dense<0.000000e+00> : vector<2x512xf32>
    %11 = tpu.matmul %8, %10, %cst {dimension_numbers = #tpu.dot_dimension_numbers<[1], [0], [0], [1], [0, 0, 1, 1], [], []>} : vector<2x1024xbf16>, vector<1024x512xbf16>, vector<2x512xf32> -> vector<2x512xf32>
    %c0_8 = arith.constant 0 : index
    %c0_9 = arith.constant 0 : index
    %c0_10 = arith.constant 0 : index
    %12 = vector.load %arg6[%c0_8, %c0_9, %c0_10] : memref<1x1x512xf32, #tpu.memory_space<vmem>>, vector<1x1x512xf32>
    %13 = vector.shape_cast %12 : vector<1x1x512xf32> to vector<1x512xf32>
    %14 = vector.broadcast %13 : vector<1x512xf32> to vector<2x512xf32>
    %15 = arith.addf %11, %14 : vector<2x512xf32>
    %cst_11 = arith.constant 0.000000e+00 : f32
    %16 = vector.broadcast %cst_11 : f32 to vector<2x512xf32>
    %17 = arith.maximumf %15, %16 : vector<2x512xf32>
    %c512_i32 = arith.constant 512 : i32
    %18 = arith.muli %arg1, %c512_i32 : i32
    %19 = tpu.assume_multiple %18, 512 : i32
    %c0_12 = arith.constant 0 : index
    %20 = arith.index_cast %19 : i32 to index
    %21 = vector.load %arg7[%c0_12, %20] : memref<2x1024xf32, #tpu.memory_space<vmem>>, vector<2x512xf32>
    tpu.vector_store %arg7[%c0_12, %20], %17 {strides = array<i32>} : memref<2x1024xf32, #tpu.memory_space<vmem>>, vector<2x512xf32>,
    return
  }
  func.func @transform_0(%arg0: i32, %arg1: i32) -> (i32, i32) {
    %c0_i32 = arith.constant 0 : i32
    %c0_i32_0 = arith.constant 0 : i32
    %c0_i32_1 = arith.constant 0 : i32
    return %c0_i32, %c0_i32_0 : i32, i32
  }
  func.func @transform_1(%arg0: i32, %arg1: i32) -> (i32, i32, i32) {
    %c0_i32 = arith.constant 0 : i32
    %c0_i32_0 = arith.constant 0 : i32
    %c0_i32_1 = arith.constant 0 : i32
    return %arg0, %c0_i32, %c0_i32_0 : i32, i32, i32
  }
  func.func @transform_2(%arg0: i32, %arg1: i32) -> (i32, i32, i32) {
    %c0_i32 = arith.constant 0 : i32
    %c0_i32_0 = arith.constant 0 : i32
    %c0_i32_1 = arith.constant 0 : i32
    return %arg0, %c0_i32, %c0_i32_0 : i32, i32, i32
  }
  func.func @transform_3(%arg0: i32, %arg1: i32) -> (i32, i32, i32) {
    %c0_i32 = arith.constant 0 : i32
    %c0_i32_0 = arith.constant 0 : i32
    return %arg0, %c0_i32, %arg1 : i32, i32, i32
  }
  func.func @transform_4(%arg0: i32, %arg1: i32) -> (i32, i32, i32) {
    %c0_i32 = arith.constant 0 : i32
    %c0_i32_0 = arith.constant 0 : i32
    return %arg0, %c0_i32, %arg1 : i32, i32, i32
  }
  func.func @transform_5(%arg0: i32, %arg1: i32) -> (i32, i32) {
    %c0_i32 = arith.constant 0 : i32
    %c0_i32_0 = arith.constant 0 : i32
    %c0_i32_1 = arith.constant 0 : i32
    return %c0_i32, %c0_i32_0 : i32, i32
  }
}

module attributes {stable_mosaic.version = 11 : i64} {
  func.func @_bn_linear_kernel(%arg0: i32, %arg1: memref<2x1024xf32, #tpu.memory_space<vmem>>, %arg2: memref<1x1024xf32, #tpu.memory_space<vmem>>, %arg3: memref<1x1024xf32, #tpu.memory_space<vmem>>, %arg4: memref<1024x10xbf16, #tpu.memory_space<vmem>>, %arg5: memref<1x10xf32, #tpu.memory_space<vmem>>, %arg6: memref<2x10xf32, #tpu.memory_space<vmem>>) attributes {dimension_semantics = [#tpu.dimension_semantics<parallel>], iteration_bounds = array<i64: 1>, scalar_prefetch = 0 : i64, scratch_operands = 0 : i64, tpu.core_type = #tpu.core_type<tc>, window_params = [{pipeline_mode = #tpu.pipeline_mode<synchronous>, transform_indices = @transform_0, window_bounds = array<i64: 2, 1024>}, {pipeline_mode = #tpu.pipeline_mode<synchronous>, transform_indices = @transform_1, window_bounds = array<i64: 1, 1024>}, {pipeline_mode = #tpu.pipeline_mode<synchronous>, transform_indices = @transform_2, window_bounds = array<i64: 1, 1024>}, {transform_indices = @transform_3, window_bounds = array<i64: 1024, 10>}, {transform_indices = @transform_4, window_bounds = array<i64: 1, 10>}, {transform_indices = @transform_5, window_bounds = array<i64: 2, 10>}]} {
    %c0 = arith.constant 0 : index
    %c0_0 = arith.constant 0 : index
    %0 = vector.load %arg1[%c0, %c0_0] : memref<2x1024xf32, #tpu.memory_space<vmem>>, vector<2x1024xf32>
    %cst = arith.constant dense<0.000000e+00> : vector<1024xf32>
    %1 = vector.multi_reduction <add>, %0, %cst [0] : vector<2x1024xf32> to vector<1024xf32>
    %2 = vector.shape_cast %1 : vector<1024xf32> to vector<1x1024xf32>
    %cst_1 = arith.constant 2.000000e+00 : f32
    %3 = vector.broadcast %cst_1 : f32 to vector<1x1024xf32>
    %4 = arith.divf %2, %3 : vector<1x1024xf32>
    %5 = vector.broadcast %4 : vector<1x1024xf32> to vector<2x1024xf32>
    %6 = arith.subf %0, %5 : vector<2x1024xf32>
    %7 = arith.mulf %6, %6 : vector<2x1024xf32>
    %cst_2 = arith.constant dense<0.000000e+00> : vector<1024xf32>
    %8 = vector.multi_reduction <add>, %7, %cst_2 [0] : vector<2x1024xf32> to vector<1024xf32>
    %9 = vector.shape_cast %8 : vector<1024xf32> to vector<1x1024xf32>
    %cst_3 = arith.constant 2.000000e+00 : f32
    %10 = vector.broadcast %cst_3 : f32 to vector<1x1024xf32>
    %11 = arith.divf %9, %10 : vector<1x1024xf32>
    %c0_4 = arith.constant 0 : index
    %c0_5 = arith.constant 0 : index
    %12 = vector.load %arg2[%c0_4, %c0_5] : memref<1x1024xf32, #tpu.memory_space<vmem>>, vector<1x1024xf32>
    %cst_6 = arith.constant 9.99999974E-6 : f32
    %13 = vector.broadcast %cst_6 : f32 to vector<1x1024xf32>
    %14 = arith.addf %11, %13 : vector<1x1024xf32>
    %15 = math.rsqrt %14 : vector<1x1024xf32>
    %16 = arith.mulf %12, %15 : vector<1x1024xf32>
    %c0_7 = arith.constant 0 : index
    %c0_8 = arith.constant 0 : index
    %17 = vector.load %arg3[%c0_7, %c0_8] : memref<1x1024xf32, #tpu.memory_space<vmem>>, vector<1x1024xf32>
    %18 = arith.mulf %4, %16 : vector<1x1024xf32>
    %19 = arith.subf %17, %18 : vector<1x1024xf32>
    %20 = vector.broadcast %16 : vector<1x1024xf32> to vector<2x1024xf32>
    %21 = arith.mulf %0, %20 : vector<2x1024xf32>
    %22 = vector.broadcast %19 : vector<1x1024xf32> to vector<2x1024xf32>
    %23 = arith.addf %21, %22 : vector<2x1024xf32>
    %24 = arith.truncf %23 : vector<2x1024xf32> to vector<2x1024xbf16>
    %c0_9 = arith.constant 0 : index
    %c0_10 = arith.constant 0 : index
    %25 = vector.load %arg4[%c0_9, %c0_10] : memref<1024x10xbf16, #tpu.memory_space<vmem>>, vector<1024x10xbf16>
    %cst_11 = arith.constant dense<0.000000e+00> : vector<2x10xf32>
    %26 = tpu.matmul %24, %25, %cst_11 {dimension_numbers = #tpu.dot_dimension_numbers<[1], [0], [0], [1], [0, 0, 1, 1], [], []>} : vector<2x1024xbf16>, vector<1024x10xbf16>, vector<2x10xf32> -> vector<2x10xf32>
    %c0_12 = arith.constant 0 : index
    %c0_13 = arith.constant 0 : index
    %27 = vector.load %arg5[%c0_12, %c0_13] : memref<1x10xf32, #tpu.memory_space<vmem>>, vector<1x10xf32>
    %28 = vector.broadcast %27 : vector<1x10xf32> to vector<2x10xf32>
    %29 = arith.addf %26, %28 : vector<2x10xf32>
    %c0_14 = arith.constant 0 : index
    %c0_15 = arith.constant 0 : index
    %30 = vector.load %arg6[%c0_14, %c0_15] : memref<2x10xf32, #tpu.memory_space<vmem>>, vector<2x10xf32>
    tpu.vector_store %arg6[%c0_14, %c0_15], %29 {strides = array<i32>} : memref<2x10xf32, #tpu.memory_space<vmem>>, vector<2x10xf32>,
    return
  }
  func.func @transform_0(%arg0: i32) -> (i32, i32) {
    %c0_i32 = arith.constant 0 : i32
    %c0_i32_0 = arith.constant 0 : i32
    %c0_i32_1 = arith.constant 0 : i32
    return %c0_i32, %c0_i32_0 : i32, i32
  }
  func.func @transform_1(%arg0: i32) -> (i32, i32) {
    %c0_i32 = arith.constant 0 : i32
    %c0_i32_0 = arith.constant 0 : i32
    %c0_i32_1 = arith.constant 0 : i32
    return %c0_i32, %c0_i32_0 : i32, i32
  }
  func.func @transform_2(%arg0: i32) -> (i32, i32) {
    %c0_i32 = arith.constant 0 : i32
    %c0_i32_0 = arith.constant 0 : i32
    %c0_i32_1 = arith.constant 0 : i32
    return %c0_i32, %c0_i32_0 : i32, i32
  }
  func.func @transform_3(%arg0: i32) -> (i32, i32) {
    %c0_i32 = arith.constant 0 : i32
    %c0_i32_0 = arith.constant 0 : i32
    return %c0_i32, %arg0 : i32, i32
  }
  func.func @transform_4(%arg0: i32) -> (i32, i32) {
    %c0_i32 = arith.constant 0 : i32
    %c0_i32_0 = arith.constant 0 : i32
    return %c0_i32, %arg0 : i32, i32
  }
  func.func @transform_5(%arg0: i32) -> (i32, i32) {
    %c0_i32 = arith.constant 0 : i32
    %c0_i32_0 = arith.constant 0 : i32
    return %c0_i32, %arg0 : i32, i32
  }
}

</mosaic_0001>

<llo_original>
// kernel: fcc_forward.5
$region0: #{fcc_forward.5}
  #allocation0 [shape = 'u32[]', space=smem, size = 0x4, offset = 0x4, fixed_abs, tag = 'smem constant byte address 0x4 - core index']
  #allocation1 [shape = 'u32[144,128]{1,0:T(1,128)}', space=vmem, size = 0x12000, scoped, tag = 'internal scratch']
  %s0 = inlined_call_operand.vmem [shape: f32[2,1024], index: 0, kind: input, shape index: {}]
  %s1 = inlined_call_operand.vmem [shape: f32[1,1024], index: 1, kind: input, shape index: {}]
  %s2 = inlined_call_operand.vmem [shape: f32[1,1024], index: 2, kind: input, shape index: {}]
  %s3 = inlined_call_operand.vmem [shape: bf16[1024,10], index: 3, kind: input, shape index: {}]
  %s4 = inlined_call_operand.vmem [shape: f32[1,10], index: 4, kind: input, shape index: {}]
  %s5 = inlined_call_operand.hbm [shape: f32[2,10], index: 5, kind: output, shape index: {}]
  %s6 = sld [smem:[#allocation0]]
  $region30: #{fcc_forward.5} parent=0
    _
  %s8 = ssub.s32 1, %s6
  %s9 = scalar_select 0, %s8, %s6
  $region1: #{fcc_forward.5} parent=0
    #allocation2 [shape = 'u8[1024]{0}', space=vmem, size = 0x400, scoped, tag = 'output window, operand 0, single buffered']
    #allocation3 [shape = 's32[1]{0}', space=sflag, size = 0x4, scoped, tag = 'scoped memory for fcc_forward.5']
    %10 = vsyncpa [#allocation3], 0
    // Predicated region
    $region2: #{fcc_forward.5} parent=1 // pred_check
      _
    $region3: #{fcc_forward.5} parent=1 // pred_check_branch
      %12 = sbr.rel (0) target = $region5
    $region4: #{fcc_forward.5} parent=1 // pred_region
      _
    $region5: #{fcc_forward.5} parent=1 // pred_fallthru
      _
    // Predicated region
    $region6: #{fcc_forward.5} parent=1 // pred_check
      _
    $region7: #{fcc_forward.5} parent=1 // pred_check_branch
      %14 = sbr.rel (0) target = $region9
    $region8: #{fcc_forward.5} parent=1 // pred_region
      _
    $region9: #{fcc_forward.5} parent=1 // pred_fallthru
      _
    // Predicated region
    $region10: #{fcc_forward.5} parent=1 // pred_check
      _
    $region11: #{fcc_forward.5} parent=1 // pred_check_branch
      %16 = sbr.rel (0) target = $region13
    $region12: #{fcc_forward.5} parent=1 // pred_region
      _
    $region13: #{fcc_forward.5} parent=1 // pred_fallthru
      _
    // Predicated region
    $region14: #{fcc_forward.5} parent=1 // pred_check
      _
    $region15: #{fcc_forward.5} parent=1 // pred_check_branch
      %18 = sbr.rel (0) target = $region17
    $region16: #{fcc_forward.5} parent=1 // pred_region
      _
    $region17: #{fcc_forward.5} parent=1 // pred_fallthru
      _
    // Predicated region
    $region18: #{fcc_forward.5} parent=1 // pred_check
      _
    $region19: #{fcc_forward.5} parent=1 // pred_check_branch
      %20 = sbr.rel (0) target = $region21
    $region20: #{fcc_forward.5} parent=1 // pred_region
      _
    $region21: #{fcc_forward.5} parent=1 // pred_fallthru
      _
    %v22 = vld [vmem:[%s0] sm:$0xff]
    %v23 = vld [vmem:[%s0 + $0x8] sm:$0xff]
    %v26 = vcombine.high %v22, %v22
    %v28 = vunpack.c.l.s4 1983009808
    %v29 = vunpack.c.0.s8 %v28
    %v30 = vlaneseq
    %v31 = vshrl.u32 %v30, 7
    %v32 = vsub.s32 %v29, %v31
    %v33 = vrot.slane %v22, %v32
    %v35 = vunpack.c.l.s4 1983009808
    %v36 = vunpack.c.0.s8 %v35
    %v37 = vlaneseq
    %v38 = vshrl.u32 %v37, 7
    %v39 = vsub.s32 %v36, %v38
    %v40 = vrot.slane %v26, %v39
    %v41 = vcombine.high %v33, %v33
    %v42 = vcombine.high %v40, %v40
    %v43 = vcombine.high %v23, %v23
    %v45 = vunpack.c.l.s4 1983009808
    %v46 = vunpack.c.0.s8 %v45
    %v47 = vlaneseq
    %v48 = vshrl.u32 %v47, 7
    %v49 = vsub.s32 %v46, %v48
    %v50 = vrot.slane %v23, %v49
    %v52 = vunpack.c.l.s4 1983009808
    %v53 = vunpack.c.0.s8 %v52
    %v54 = vlaneseq
    %v55 = vshrl.u32 %v54, 7
    %v56 = vsub.s32 %v53, %v55
    %v57 = vrot.slane %v43, %v56
    %v58 = vcombine.high %v50, %v50
    %v59 = vcombine.high %v57, %v57
    %vm68 = vcmask 1041408
    %v69 = vsel %vm68, %v33, 0.0
    %v70 = vrot.slane %v69, 4
    %v71 = vadd.f32 %v69, %v70
    %v72 = vrot.slane %v71, 2
    %v73 = vadd.f32 %v71, %v72
    %v74 = vrot.slane %v73, 1
    %v75 = vadd.f32 %v73, %v74
    %v76 = vsel %vm68, %v41, 0.0
    %v77 = vrot.slane %v76, 4
    %v78 = vadd.f32 %v76, %v77
    %v79 = vrot.slane %v78, 2
    %v80 = vadd.f32 %v78, %v79
    %v81 = vrot.slane %v80, 1
    %v82 = vadd.f32 %v80, %v81
    %v83 = vsel %vm68, %v40, 0.0
    %v84 = vrot.slane %v83, 4
    %v85 = vadd.f32 %v83, %v84
    %v86 = vrot.slane %v85, 2
    %v87 = vadd.f32 %v85, %v86
    %v88 = vrot.slane %v87, 1
    %v89 = vadd.f32 %v87, %v88
    %v90 = vsel %vm68, %v42, 0.0
    %v91 = vrot.slane %v90, 4
    %v92 = vadd.f32 %v90, %v91
    %v93 = vrot.slane %v92, 2
    %v94 = vadd.f32 %v92, %v93
    %v95 = vrot.slane %v94, 1
    %v96 = vadd.f32 %v94, %v95
    %v97 = vsel %vm68, %v50, 0.0
    %v98 = vrot.slane %v97, 4
    %v99 = vadd.f32 %v97, %v98
    %v100 = vrot.slane %v99, 2
    %v101 = vadd.f32 %v99, %v100
    %v102 = vrot.slane %v101, 1
    %v103 = vadd.f32 %v101, %v102
    %v104 = vsel %vm68, %v58, 0.0
    %v105 = vrot.slane %v104, 4
    %v106 = vadd.f32 %v104, %v105
    %v107 = vrot.slane %v106, 2
    %v108 = vadd.f32 %v106, %v107
    %v109 = vrot.slane %v108, 1
    %v110 = vadd.f32 %v108, %v109
    %v111 = vsel %vm68, %v57, 0.0
    %v112 = vrot.slane %v111, 4
    %v113 = vadd.f32 %v111, %v112
    %v114 = vrot.slane %v113, 2
    %v115 = vadd.f32 %v113, %v114
    %v116 = vrot.slane %v115, 1
    %v117 = vadd.f32 %v115, %v116
    %v118 = vsel %vm68, %v59, 0.0
    %v119 = vrot.slane %v118, 4
    %v120 = vadd.f32 %v118, %v119
    %v121 = vrot.slane %v120, 2
    %v122 = vadd.f32 %v120, %v121
    %v123 = vrot.slane %v122, 1
    %v124 = vadd.f32 %v122, %v123
    %v125 = vrcp.pop 2.0
    %v126 = vmul.f32 %v75, %v125
    %v127 = vmul.f32 %v82, %v125
    %v128 = vmul.f32 %v89, %v125
    %v129 = vmul.f32 %v96, %v125
    %v130 = vmul.f32 %v103, %v125
    %v131 = vmul.f32 %v110, %v125
    %v132 = vmul.f32 %v117, %v125
    %v133 = vmul.f32 %v124, %v125
    %v142 = vcombine.low %v126, %v127
    %v143 = vcombine.low %v128, %v129
    %v145 = vunpack.c.l.s4 1983009808
    %v146 = vunpack.c.0.s8 %v145
    %v147 = vlaneseq
    %v148 = vshrl.u32 %v147, 7
    %v149 = vsub.s32 %v146, %v148
    %v150 = vrot.slane %v142, %v149
    %v152 = vunpack.c.l.s4 1983009808
    %v153 = vunpack.c.0.s8 %v152
    %v154 = vlaneseq
    %v155 = vshrl.u32 %v154, 7
    %v156 = vsub.s32 %v153, %v155
    %v157 = vrot.slane %v143, %v156
    %v158 = vcombine.low %v150, %v157
    %v159 = vcombine.low %v130, %v131
    %v160 = vcombine.low %v132, %v133
    %v162 = vunpack.c.l.s4 1983009808
    %v163 = vunpack.c.0.s8 %v162
    %v164 = vlaneseq
    %v165 = vshrl.u32 %v164, 7
    %v166 = vsub.s32 %v163, %v165
    %v167 = vrot.slane %v159, %v166
    %v169 = vunpack.c.l.s4 1983009808
    %v170 = vunpack.c.0.s8 %v169
    %v171 = vlaneseq
    %v172 = vshrl.u32 %v171, 7
    %v173 = vsub.s32 %v170, %v172
    %v174 = vrot.slane %v160, %v173
    %v175 = vcombine.low %v167, %v174
    %v178 = vsub.f32 %v22, %v158
    %v179 = vsub.f32 %v23, %v175
    %v180 = vmul.f32 %v178, %v178
    %v181 = vmul.f32 %v179, %v179
    %v184 = vcombine.high %v180, %v180
    %v186 = vunpack.c.l.s4 1983009808
    %v187 = vunpack.c.0.s8 %v186
    %v188 = vlaneseq
    %v189 = vshrl.u32 %v188, 7
    %v190 = vsub.s32 %v187, %v189
    %v191 = vrot.slane %v180, %v190
    %v193 = vunpack.c.l.s4 1983009808
    %v194 = vunpack.c.0.s8 %v193
    %v195 = vlaneseq
    %v196 = vshrl.u32 %v195, 7
    %v197 = vsub.s32 %v194, %v196
    %v198 = vrot.slane %v184, %v197
    %v199 = vcombine.high %v191, %v191
    %v200 = vcombine.high %v198, %v198
    %v201 = vcombine.high %v181, %v181
    %v203 = vunpack.c.l.s4 1983009808
    %v204 = vunpack.c.0.s8 %v203
    %v205 = vlaneseq
    %v206 = vshrl.u32 %v205, 7
    %v207 = vsub.s32 %v204, %v206
    %v208 = vrot.slane %v181, %v207
    %v210 = vunpack.c.l.s4 1983009808
    %v211 = vunpack.c.0.s8 %v210
    %v212 = vlaneseq
    %v213 = vshrl.u32 %v212, 7
    %v214 = vsub.s32 %v211, %v213
    %v215 = vrot.slane %v201, %v214
    %v216 = vcombine.high %v208, %v208
    %v217 = vcombine.high %v215, %v215
    %v226 = vsel %vm68, %v191, 0.0
    %v227 = vrot.slane %v226, 4
    %v228 = vadd.f32 %v226, %v227
    %v229 = vrot.slane %v228, 2
    %v230 = vadd.f32 %v228, %v229
    %v231 = vrot.slane %v230, 1
    %v232 = vadd.f32 %v230, %v231
    %v233 = vsel %vm68, %v199, 0.0
    %v234 = vrot.slane %v233, 4
    %v235 = vadd.f32 %v233, %v234
    %v236 = vrot.slane %v235, 2
    %v237 = vadd.f32 %v235, %v236
    %v238 = vrot.slane %v237, 1
    %v239 = vadd.f32 %v237, %v238
    %v240 = vsel %vm68, %v198, 0.0
    %v241 = vrot.slane %v240, 4
    %v242 = vadd.f32 %v240, %v241
    %v243 = vrot.slane %v242, 2
    %v244 = vadd.f32 %v242, %v243
    %v245 = vrot.slane %v244, 1
    %v246 = vadd.f32 %v244, %v245
    %v247 = vsel %vm68, %v200, 0.0
    %v248 = vrot.slane %v247, 4
    %v249 = vadd.f32 %v247, %v248
    %v250 = vrot.slane %v249, 2
    %v251 = vadd.f32 %v249, %v250
    %v252 = vrot.slane %v251, 1
    %v253 = vadd.f32 %v251, %v252
    %v254 = vsel %vm68, %v208, 0.0
    %v255 = vrot.slane %v254, 4
    %v256 = vadd.f32 %v254, %v255
    %v257 = vrot.slane %v256, 2
    %v258 = vadd.f32 %v256, %v257
    %v259 = vrot.slane %v258, 1
    %v260 = vadd.f32 %v258, %v259
    %v261 = vsel %vm68, %v216, 0.0
    %v262 = vrot.slane %v261, 4
    %v263 = vadd.f32 %v261, %v262
    %v264 = vrot.slane %v263, 2
    %v265 = vadd.f32 %v263, %v264
    %v266 = vrot.slane %v265, 1
    %v267 = vadd.f32 %v265, %v266
    %v268 = vsel %vm68, %v215, 0.0
    %v269 = vrot.slane %v268, 4
    %v270 = vadd.f32 %v268, %v269
    %v271 = vrot.slane %v270, 2
    %v272 = vadd.f32 %v270, %v271
    %v273 = vrot.slane %v272, 1
    %v274 = vadd.f32 %v272, %v273
    %v275 = vsel %vm68, %v217, 0.0
    %v276 = vrot.slane %v275, 4
    %v277 = vadd.f32 %v275, %v276
    %v278 = vrot.slane %v277, 2
    %v279 = vadd.f32 %v277, %v278
    %v280 = vrot.slane %v279, 1
    %v281 = vadd.f32 %v279, %v280
    %v282 = vmul.f32 %v232, %v125
    %v283 = vmul.f32 %v239, %v125
    %v284 = vmul.f32 %v246, %v125
    %v285 = vmul.f32 %v253, %v125
    %v286 = vmul.f32 %v260, %v125
    %v287 = vmul.f32 %v267, %v125
    %v288 = vmul.f32 %v274, %v125
    %v289 = vmul.f32 %v281, %v125
    %v290 = vld [vmem:[%s1] sm:$0xff]
    %v291 = vadd.f32 %v282, 1e-05
    %v292 = vadd.f32 %v283, 1e-05
    %v293 = vadd.f32 %v284, 1e-05
    %v294 = vadd.f32 %v285, 1e-05
    %v295 = vadd.f32 %v286, 1e-05
    %v296 = vadd.f32 %v287, 1e-05
    %v297 = vadd.f32 %v288, 1e-05
    %v298 = vadd.f32 %v289, 1e-05
    %v299 = vrsqrt.pop %v291
    %v300 = vrsqrt.pop %v292
    %v301 = vrsqrt.pop %v293
    %v302 = vrsqrt.pop %v294
    %v303 = vrsqrt.pop %v295
    %v304 = vrsqrt.pop %v296
    %v305 = vrsqrt.pop %v297
    %v306 = vrsqrt.pop %v298
    %v315 = vcombine.low %v299, %v300
    %v316 = vcombine.low %v301, %v302
    %v317 = vcombine.low %v303, %v304
    %v318 = vcombine.low %v305, %v306
    %v320 = vunpack.c.l.s4 1966171168
    %v321 = vunpack.c.0.s8 %v320
    %v322 = vlaneseq
    %v323 = vshrl.u32 %v322, 7
    %v324 = vsub.s32 %v321, %v323
    %v325 = vrot.slane %v315, %v324
    %v327 = vunpack.c.l.s4 1966171168
    %v328 = vunpack.c.0.s8 %v327
    %v329 = vlaneseq
    %v330 = vshrl.u32 %v329, 7
    %v331 = vsub.s32 %v328, %v330
    %v332 = vrot.slane %v316, %v331
    %v334 = vunpack.c.l.s4 1966171168
    %v335 = vunpack.c.0.s8 %v334
    %v336 = vlaneseq
    %v337 = vshrl.u32 %v336, 7
    %v338 = vsub.s32 %v335, %v337
    %v339 = vrot.slane %v317, %v338
    %v341 = vunpack.c.l.s4 1966171168
    %v342 = vunpack.c.0.s8 %v341
    %v343 = vlaneseq
    %v344 = vshrl.u32 %v343, 7
    %v345 = vsub.s32 %v342, %v344
    %v346 = vrot.slane %v318, %v345
    %v347 = vcombine.low %v325, %v332
    %v348 = vcombine.low %v339, %v346
    %v350 = vunpack.c.l.s4 1966171168
    %v351 = vunpack.c.0.s8 %v350
    %v352 = vlaneseq
    %v353 = vshrl.u32 %v352, 7
    %v354 = vsub.s32 %v351, %v353
    %v355 = vrot.slane %v347, %v354
    %v357 = vunpack.c.l.s4 1966171168
    %v358 = vunpack.c.0.s8 %v357
    %v359 = vlaneseq
    %v360 = vshrl.u32 %v359, 7
    %v361 = vsub.s32 %v358, %v360
    %v362 = vrot.slane %v348, %v361
    %v363 = vcombine.low %v355, %v362
    %v365 = vmul.f32 %v290, %v363
    %v366 = vld [vmem:[%s2] sm:$0xff]
    %v368 = vlaneseq
    %v369 = vshrl.u32 %v368, 7
    %v370 = vsub.s32 0, %v369
    %v371 = vrot.slane %v365, %v370
    %v372 = vlaneseq
    %v373 = vshrl.u32 %v372, 7
    %v374 = vsub.s32 1, %v373
    %v375 = vrot.slane %v365, %v374
    %v376 = vlaneseq
    %v377 = vshrl.u32 %v376, 7
    %v378 = vsub.s32 2, %v377
    %v379 = vrot.slane %v365, %v378
    %v380 = vlaneseq
    %v381 = vshrl.u32 %v380, 7
    %v382 = vsub.s32 3, %v381
    %v383 = vrot.slane %v365, %v382
    %v384 = vlaneseq
    %v385 = vshrl.u32 %v384, 7
    %v386 = vsub.s32 4, %v385
    %v387 = vrot.slane %v365, %v386
    %v388 = vlaneseq
    %v389 = vshrl.u32 %v388, 7
    %v390 = vsub.s32 5, %v389
    %v391 = vrot.slane %v365, %v390
    %v392 = vlaneseq
    %v393 = vshrl.u32 %v392, 7
    %v394 = vsub.s32 6, %v393
    %v395 = vrot.slane %v365, %v394
    %v396 = vlaneseq
    %v397 = vshrl.u32 %v396, 7
    %v398 = vsub.s32 7, %v397
    %v399 = vrot.slane %v365, %v398
    %v408 = vmul.f32 %v126, %v371
    %v409 = vmul.f32 %v127, %v375
    %v410 = vmul.f32 %v128, %v379
    %v411 = vmul.f32 %v129, %v383
    %v412 = vmul.f32 %v130, %v387
    %v413 = vmul.f32 %v131, %v391
    %v414 = vmul.f32 %v132, %v395
    %v415 = vmul.f32 %v133, %v399
    %v424 = vcombine.low %v408, %v409
    %v425 = vcombine.low %v410, %v411
    %v426 = vcombine.low %v412, %v413
    %v427 = vcombine.low %v414, %v415
    %v429 = vunpack.c.l.s4 1966171168
    %v430 = vunpack.c.0.s8 %v429
    %v431 = vlaneseq
    %v432 = vshrl.u32 %v431, 7
    %v433 = vsub.s32 %v430, %v432
    %v434 = vrot.slane %v424, %v433
    %v436 = vunpack.c.l.s4 1966171168
    %v437 = vunpack.c.0.s8 %v436
    %v438 = vlaneseq
    %v439 = vshrl.u32 %v438, 7
    %v440 = vsub.s32 %v437, %v439
    %v441 = vrot.slane %v425, %v440
    %v443 = vunpack.c.l.s4 1966171168
    %v444 = vunpack.c.0.s8 %v443
    %v445 = vlaneseq
    %v446 = vshrl.u32 %v445, 7
    %v447 = vsub.s32 %v444, %v446
    %v448 = vrot.slane %v426, %v447
    %v450 = vunpack.c.l.s4 1966171168
    %v451 = vunpack.c.0.s8 %v450
    %v452 = vlaneseq
    %v453 = vshrl.u32 %v452, 7
    %v454 = vsub.s32 %v451, %v453
    %v455 = vrot.slane %v427, %v454
    %v456 = vcombine.low %v434, %v441
    %v457 = vcombine.low %v448, %v455
    %v459 = vunpack.c.l.s4 1966171168
    %v460 = vunpack.c.0.s8 %v459
    %v461 = vlaneseq
    %v462 = vshrl.u32 %v461, 7
    %v463 = vsub.s32 %v460, %v462
    %v464 = vrot.slane %v456, %v463
    %v466 = vunpack.c.l.s4 1966171168
    %v467 = vunpack.c.0.s8 %v466
    %v468 = vlaneseq
    %v469 = vshrl.u32 %v468, 7
    %v470 = vsub.s32 %v467, %v469
    %v471 = vrot.slane %v457, %v470
    %v472 = vcombine.low %v464, %v471
    %v474 = vsub.f32 %v366, %v472
    %v475 = vcombine.low %v371, %v375
    %v476 = vcombine.low %v379, %v383
    %v478 = vunpack.c.l.s4 1983009808
    %v479 = vunpack.c.0.s8 %v478
    %v480 = vlaneseq
    %v481 = vshrl.u32 %v480, 7
    %v482 = vsub.s32 %v479, %v481
    %v483 = vrot.slane %v475, %v482
    %v485 = vunpack.c.l.s4 1983009808
    %v486 = vunpack.c.0.s8 %v485
    %v487 = vlaneseq
    %v488 = vshrl.u32 %v487, 7
    %v489 = vsub.s32 %v486, %v488
    %v490 = vrot.slane %v476, %v489
    %v491 = vcombine.low %v483, %v490
    %v492 = vcombine.low %v387, %v391
    %v493 = vcombine.low %v395, %v399
    %v495 = vunpack.c.l.s4 1983009808
    %v496 = vunpack.c.0.s8 %v495
    %v497 = vlaneseq
    %v498 = vshrl.u32 %v497, 7
    %v499 = vsub.s32 %v496, %v498
    %v500 = vrot.slane %v492, %v499
    %v502 = vunpack.c.l.s4 1983009808
    %v503 = vunpack.c.0.s8 %v502
    %v504 = vlaneseq
    %v505 = vshrl.u32 %v504, 7
    %v506 = vsub.s32 %v503, %v505
    %v507 = vrot.slane %v493, %v506
    %v508 = vcombine.low %v500, %v507
    %v511 = vmul.f32 %v22, %v491
    %v512 = vmul.f32 %v23, %v508
    %v514 = vlaneseq
    %v515 = vshrl.u32 %v514, 7
    %v516 = vsub.s32 0, %v515
    %v517 = vrot.slane %v474, %v516
    %v518 = vlaneseq
    %v519 = vshrl.u32 %v518, 7
    %v520 = vsub.s32 1, %v519
    %v521 = vrot.slane %v474, %v520
    %v522 = vlaneseq
    %v523 = vshrl.u32 %v522, 7
    %v524 = vsub.s32 2, %v523
    %v525 = vrot.slane %v474, %v524
    %v526 = vlaneseq
    %v527 = vshrl.u32 %v526, 7
    %v528 = vsub.s32 3, %v527
    %v529 = vrot.slane %v474, %v528
    %v530 = vlaneseq
    %v531 = vshrl.u32 %v530, 7
    %v532 = vsub.s32 4, %v531
    %v533 = vrot.slane %v474, %v532
    %v534 = vlaneseq
    %v535 = vshrl.u32 %v534, 7
    %v536 = vsub.s32 5, %v535
    %v537 = vrot.slane %v474, %v536
    %v538 = vlaneseq
    %v539 = vshrl.u32 %v538, 7
    %v540 = vsub.s32 6, %v539
    %v541 = vrot.slane %v474, %v540
    %v542 = vlaneseq
    %v543 = vshrl.u32 %v542, 7
    %v544 = vsub.s32 7, %v543
    %v545 = vrot.slane %v474, %v544
    %v546 = vcombine.low %v517, %v521
    %v547 = vcombine.low %v525, %v529
    %v549 = vunpack.c.l.s4 1983009808
    %v550 = vunpack.c.0.s8 %v549
    %v551 = vlaneseq
    %v552 = vshrl.u32 %v551, 7
    %v553 = vsub.s32 %v550, %v552
    %v554 = vrot.slane %v546, %v553
    %v556 = vunpack.c.l.s4 1983009808
    %v557 = vunpack.c.0.s8 %v556
    %v558 = vlaneseq
    %v559 = vshrl.u32 %v558, 7
    %v560 = vsub.s32 %v557, %v559
    %v561 = vrot.slane %v547, %v560
    %v562 = vcombine.low %v554, %v561
    %v563 = vcombine.low %v533, %v537
    %v564 = vcombine.low %v541, %v545
    %v566 = vunpack.c.l.s4 1983009808
    %v567 = vunpack.c.0.s8 %v566
    %v568 = vlaneseq
    %v569 = vshrl.u32 %v568, 7
    %v570 = vsub.s32 %v567, %v569
    %v571 = vrot.slane %v563, %v570
    %v573 = vunpack.c.l.s4 1983009808
    %v574 = vunpack.c.0.s8 %v573
    %v575 = vlaneseq
    %v576 = vshrl.u32 %v575, 7
    %v577 = vsub.s32 %v574, %v576
    %v578 = vrot.slane %v564, %v577
    %v579 = vcombine.low %v571, %v578
    %v582 = vadd.f32 %v511, %v562
    %v583 = vadd.f32 %v512, %v579
    %v586 = vcombine.high %v582, %v582
    %v588 = vunpack.c.l.s4 1983009808
    %v589 = vunpack.c.0.s8 %v588
    %v590 = vlaneseq
    %v591 = vshrl.u32 %v590, 7
    %v592 = vsub.s32 %v589, %v591
    %v593 = vrot.slane %v582, %v592
    %v595 = vunpack.c.l.s4 1983009808
    %v596 = vunpack.c.0.s8 %v595
    %v597 = vlaneseq
    %v598 = vshrl.u32 %v597, 7
    %v599 = vsub.s32 %v596, %v598
    %v600 = vrot.slane %v586, %v599
    %v601 = vcombine.high %v593, %v593
    %v602 = vcombine.high %v600, %v600
    %v603 = vcombine.high %v583, %v583
    %v605 = vunpack.c.l.s4 1983009808
    %v606 = vunpack.c.0.s8 %v605
    %v607 = vlaneseq
    %v608 = vshrl.u32 %v607, 7
    %v609 = vsub.s32 %v606, %v608
    %v610 = vrot.slane %v583, %v609
    %v612 = vunpack.c.l.s4 1983009808
    %v613 = vunpack.c.0.s8 %v612
    %v614 = vlaneseq
    %v615 = vshrl.u32 %v614, 7
    %v616 = vsub.s32 %v613, %v615
    %v617 = vrot.slane %v603, %v616
    %v618 = vcombine.high %v610, %v610
    %v619 = vcombine.high %v617, %v617
    %v628 = vpack.c.bf16 %v593, %v593
    %v629 = vpack.c.bf16 %v601, %v601
    %v630 = vpack.c.bf16 %v600, %v600
    %v631 = vpack.c.bf16 %v602, %v602
    %v632 = vpack.c.bf16 %v610, %v610
    %v633 = vpack.c.bf16 %v618, %v618
    %v634 = vpack.c.bf16 %v617, %v617
    %v635 = vpack.c.bf16 %v619, %v619
    %v636 = vld [vmem:[%s3] sm:$0xf]
    %v637 = vld [vmem:[%s3 + $0x4] sm:$0xf]
    %v638 = vld [vmem:[%s3 + $0x8] sm:$0xf]
    %v639 = vld [vmem:[%s3 + $0xc] sm:$0xf]
    %v640 = vld [vmem:[%s3 + $0x10] sm:$0xf]
    %v641 = vld [vmem:[%s3 + $0x14] sm:$0xf]
    %v642 = vld [vmem:[%s3 + $0x18] sm:$0xf]
    %v643 = vld [vmem:[%s3 + $0x1c] sm:$0xf]
    %v644 = vld [vmem:[%s3 + $0x20] sm:$0xf]
    %v645 = vld [vmem:[%s3 + $0x24] sm:$0xf]
    %v646 = vld [vmem:[%s3 + $0x28] sm:$0xf]
    %v647 = vld [vmem:[%s3 + $0x2c] sm:$0xf]
    %v648 = vld [vmem:[%s3 + $0x30] sm:$0xf]
    %v649 = vld [vmem:[%s3 + $0x34] sm:$0xf]
    %v650 = vld [vmem:[%s3 + $0x38] sm:$0xf]
    %v651 = vld [vmem:[%s3 + $0x3c] sm:$0xf]
    %v652 = vld [vmem:[%s3 + $0x40] sm:$0xf]
    %v653 = vld [vmem:[%s3 + $0x44] sm:$0xf]
    %v654 = vld [vmem:[%s3 + $0x48] sm:$0xf]
    %v655 = vld [vmem:[%s3 + $0x4c] sm:$0xf]
    %v656 = vld [vmem:[%s3 + $0x50] sm:$0xf]
    %v657 = vld [vmem:[%s3 + $0x54] sm:$0xf]
    %v658 = vld [vmem:[%s3 + $0x58] sm:$0xf]
    %v659 = vld [vmem:[%s3 + $0x5c] sm:$0xf]
    %v660 = vld [vmem:[%s3 + $0x60] sm:$0xf]
    %v661 = vld [vmem:[%s3 + $0x64] sm:$0xf]
    %v662 = vld [vmem:[%s3 + $0x68] sm:$0xf]
    %v663 = vld [vmem:[%s3 + $0x6c] sm:$0xf]
    %v664 = vld [vmem:[%s3 + $0x70] sm:$0xf]
    %v665 = vld [vmem:[%s3 + $0x74] sm:$0xf]
    %v666 = vld [vmem:[%s3 + $0x78] sm:$0xf]
    %v667 = vld [vmem:[%s3 + $0x7c] sm:$0xf]
    %v668 = vld [vmem:[%s3 + $0x80] sm:$0xf]
    %v669 = vld [vmem:[%s3 + $0x84] sm:$0xf]
    %v670 = vld [vmem:[%s3 + $0x88] sm:$0xf]
    %v671 = vld [vmem:[%s3 + $0x8c] sm:$0xf]
    %v672 = vld [vmem:[%s3 + $0x90] sm:$0xf]
    %v673 = vld [vmem:[%s3 + $0x94] sm:$0xf]
    %v674 = vld [vmem:[%s3 + $0x98] sm:$0xf]
    %v675 = vld [vmem:[%s3 + $0x9c] sm:$0xf]
    %v676 = vld [vmem:[%s3 + $0xa0] sm:$0xf]
    %v677 = vld [vmem:[%s3 + $0xa4] sm:$0xf]
    %v678 = vld [vmem:[%s3 + $0xa8] sm:$0xf]
    %v679 = vld [vmem:[%s3 + $0xac] sm:$0xf]
    %v680 = vld [vmem:[%s3 + $0xb0] sm:$0xf]
    %v681 = vld [vmem:[%s3 + $0xb4] sm:$0xf]
    %v682 = vld [vmem:[%s3 + $0xb8] sm:$0xf]
    %v683 = vld [vmem:[%s3 + $0xbc] sm:$0xf]
    %v684 = vld [vmem:[%s3 + $0xc0] sm:$0xf]
    %v685 = vld [vmem:[%s3 + $0xc4] sm:$0xf]
    %v686 = vld [vmem:[%s3 + $0xc8] sm:$0xf]
    %v687 = vld [vmem:[%s3 + $0xcc] sm:$0xf]
    %v688 = vld [vmem:[%s3 + $0xd0] sm:$0xf]
    %v689 = vld [vmem:[%s3 + $0xd4] sm:$0xf]
    %v690 = vld [vmem:[%s3 + $0xd8] sm:$0xf]
    %v691 = vld [vmem:[%s3 + $0xdc] sm:$0xf]
    %v692 = vld [vmem:[%s3 + $0xe0] sm:$0xf]
    %v693 = vld [vmem:[%s3 + $0xe4] sm:$0xf]
    %v694 = vld [vmem:[%s3 + $0xe8] sm:$0xf]
    %v695 = vld [vmem:[%s3 + $0xec] sm:$0xf]
    %v696 = vld [vmem:[%s3 + $0xf0] sm:$0xf]
    %v697 = vld [vmem:[%s3 + $0xf4] sm:$0xf]
    %v698 = vld [vmem:[%s3 + $0xf8] sm:$0xf]
    %v699 = vld [vmem:[%s3 + $0xfc] sm:$0xf]
    %v700 = vld [vmem:[%s3 + $0x100] sm:$0xf]
    %v701 = vld [vmem:[%s3 + $0x104] sm:$0xf]
    %v702 = vld [vmem:[%s3 + $0x108] sm:$0xf]
    %v703 = vld [vmem:[%s3 + $0x10c] sm:$0xf]
    %v704 = vld [vmem:[%s3 + $0x110] sm:$0xf]
    %v705 = vld [vmem:[%s3 + $0x114] sm:$0xf]
    %v706 = vld [vmem:[%s3 + $0x118] sm:$0xf]
    %v707 = vld [vmem:[%s3 + $0x11c] sm:$0xf]
    %v708 = vld [vmem:[%s3 + $0x120] sm:$0xf]
    %v709 = vld [vmem:[%s3 + $0x124] sm:$0xf]
    %v710 = vld [vmem:[%s3 + $0x128] sm:$0xf]
    %v711 = vld [vmem:[%s3 + $0x12c] sm:$0xf]
    %v712 = vld [vmem:[%s3 + $0x130] sm:$0xf]
    %v713 = vld [vmem:[%s3 + $0x134] sm:$0xf]
    %v714 = vld [vmem:[%s3 + $0x138] sm:$0xf]
    %v715 = vld [vmem:[%s3 + $0x13c] sm:$0xf]
    %v716 = vld [vmem:[%s3 + $0x140] sm:$0xf]
    %v717 = vld [vmem:[%s3 + $0x144] sm:$0xf]
    %v718 = vld [vmem:[%s3 + $0x148] sm:$0xf]
    %v719 = vld [vmem:[%s3 + $0x14c] sm:$0xf]
    %v720 = vld [vmem:[%s3 + $0x150] sm:$0xf]
    %v721 = vld [vmem:[%s3 + $0x154] sm:$0xf]
    %v722 = vld [vmem:[%s3 + $0x158] sm:$0xf]
    %v723 = vld [vmem:[%s3 + $0x15c] sm:$0xf]
    %v724 = vld [vmem:[%s3 + $0x160] sm:$0xf]
    %v725 = vld [vmem:[%s3 + $0x164] sm:$0xf]
    %v726 = vld [vmem:[%s3 + $0x168] sm:$0xf]
    %v727 = vld [vmem:[%s3 + $0x16c] sm:$0xf]
    %v728 = vld [vmem:[%s3 + $0x170] sm:$0xf]
    %v729 = vld [vmem:[%s3 + $0x174] sm:$0xf]
    %v730 = vld [vmem:[%s3 + $0x178] sm:$0xf]
    %v731 = vld [vmem:[%s3 + $0x17c] sm:$0xf]
    %v732 = vld [vmem:[%s3 + $0x180] sm:$0xf]
    %v733 = vld [vmem:[%s3 + $0x184] sm:$0xf]
    %v734 = vld [vmem:[%s3 + $0x188] sm:$0xf]
    %v735 = vld [vmem:[%s3 + $0x18c] sm:$0xf]
    %v736 = vld [vmem:[%s3 + $0x190] sm:$0xf]
    %v737 = vld [vmem:[%s3 + $0x194] sm:$0xf]
    %v738 = vld [vmem:[%s3 + $0x198] sm:$0xf]
    %v739 = vld [vmem:[%s3 + $0x19c] sm:$0xf]
    %v740 = vld [vmem:[%s3 + $0x1a0] sm:$0xf]
    %v741 = vld [vmem:[%s3 + $0x1a4] sm:$0xf]
    %v742 = vld [vmem:[%s3 + $0x1a8] sm:$0xf]
    %v743 = vld [vmem:[%s3 + $0x1ac] sm:$0xf]
    %v744 = vld [vmem:[%s3 + $0x1b0] sm:$0xf]
    %v745 = vld [vmem:[%s3 + $0x1b4] sm:$0xf]
    %v746 = vld [vmem:[%s3 + $0x1b8] sm:$0xf]
    %v747 = vld [vmem:[%s3 + $0x1bc] sm:$0xf]
    %v748 = vld [vmem:[%s3 + $0x1c0] sm:$0xf]
    %v749 = vld [vmem:[%s3 + $0x1c4] sm:$0xf]
    %v750 = vld [vmem:[%s3 + $0x1c8] sm:$0xf]
    %v751 = vld [vmem:[%s3 + $0x1cc] sm:$0xf]
    %v752 = vld [vmem:[%s3 + $0x1d0] sm:$0xf]
    %v753 = vld [vmem:[%s3 + $0x1d4] sm:$0xf]
    %v754 = vld [vmem:[%s3 + $0x1d8] sm:$0xf]
    %v755 = vld [vmem:[%s3 + $0x1dc] sm:$0xf]
    %v756 = vld [vmem:[%s3 + $0x1e0] sm:$0xf]
    %v757 = vld [vmem:[%s3 + $0x1e4] sm:$0xf]
    %v758 = vld [vmem:[%s3 + $0x1e8] sm:$0xf]
    %v759 = vld [vmem:[%s3 + $0x1ec] sm:$0xf]
    %v760 = vld [vmem:[%s3 + $0x1f0] sm:$0xf]
    %v761 = vld [vmem:[%s3 + $0x1f4] sm:$0xf]
    %v762 = vld [vmem:[%s3 + $0x1f8] sm:$0xf]
    %v763 = vld [vmem:[%s3 + $0x1fc] sm:$0xf]
    %v764 = vld [vmem:[%s4] sm:$0x1]
    %v766 = vlaneseq
    %v767 = vshrl.u32 %v766, 7
    %v768 = vsub.s32 0, %v767
    %v769 = vrot.slane %v764, %v768
    %v899 = vunpack.c.l.b16 %v636
    %v900 = vunpack.c.l.b16 %v637
    %v901 = vunpack.c.l.b16 %v638
    %v902 = vunpack.c.l.b16 %v639
    %v903 = vunpack.c.l.b16 %v640
    %v904 = vunpack.c.l.b16 %v641
    %v905 = vunpack.c.l.b16 %v642
    %v906 = vunpack.c.l.b16 %v643
    %v907 = vunpack.c.l.b16 %v644
    %v908 = vunpack.c.l.b16 %v645
    %v909 = vunpack.c.l.b16 %v646
    %v910 = vunpack.c.l.b16 %v647
    %v911 = vunpack.c.l.b16 %v648
    %v912 = vunpack.c.l.b16 %v649
    %v913 = vunpack.c.l.b16 %v650
    %v914 = vunpack.c.l.b16 %v651
    %v915 = vunpack.c.l.b16 %v652
    %v916 = vunpack.c.l.b16 %v653
    %v917 = vunpack.c.l.b16 %v654
    %v918 = vunpack.c.l.b16 %v655
    %v919 = vunpack.c.l.b16 %v656
    %v920 = vunpack.c.l.b16 %v657
    %v921 = vunpack.c.l.b16 %v658
    %v922 = vunpack.c.l.b16 %v659
    %v923 = vunpack.c.l.b16 %v660
    %v924 = vunpack.c.l.b16 %v661
    %v925 = vunpack.c.l.b16 %v662
    %v926 = vunpack.c.l.b16 %v663
    %v927 = vunpack.c.l.b16 %v664
    %v928 = vunpack.c.l.b16 %v665
    %v929 = vunpack.c.l.b16 %v666
    %v930 = vunpack.c.l.b16 %v667
    %v931 = vunpack.c.l.b16 %v668
    %v932 = vunpack.c.l.b16 %v669
    %v933 = vunpack.c.l.b16 %v670
    %v934 = vunpack.c.l.b16 %v671
    %v935 = vunpack.c.l.b16 %v672
    %v936 = vunpack.c.l.b16 %v673
    %v937 = vunpack.c.l.b16 %v674
    %v938 = vunpack.c.l.b16 %v675
    %v939 = vunpack.c.l.b16 %v676
    %v940 = vunpack.c.l.b16 %v677
    %v941 = vunpack.c.l.b16 %v678
    %v942 = vunpack.c.l.b16 %v679
    %v943 = vunpack.c.l.b16 %v680
    %v944 = vunpack.c.l.b16 %v681
    %v945 = vunpack.c.l.b16 %v682
    %v946 = vunpack.c.l.b16 %v683
    %v947 = vunpack.c.l.b16 %v684
    %v948 = vunpack.c.l.b16 %v685
    %v949 = vunpack.c.l.b16 %v686
    %v950 = vunpack.c.l.b16 %v687
    %v951 = vunpack.c.l.b16 %v688
    %v952 = vunpack.c.l.b16 %v689
    %v953 = vunpack.c.l.b16 %v690
    %v954 = vunpack.c.l.b16 %v691
    %v955 = vunpack.c.l.b16 %v692
    %v956 = vunpack.c.l.b16 %v693
    %v957 = vunpack.c.l.b16 %v694
    %v958 = vunpack.c.l.b16 %v695
    %v959 = vunpack.c.l.b16 %v696
    %v960 = vunpack.c.l.b16 %v697
    %v961 = vunpack.c.l.b16 %v698
    %v962 = vunpack.c.l.b16 %v699
    %v963 = vunpack.c.l.b16 %v700
    %v964 = vunpack.c.l.b16 %v701
    %v965 = vunpack.c.l.b16 %v702
    %v966 = vunpack.c.l.b16 %v703
    %v967 = vunpack.c.l.b16 %v704
    %v968 = vunpack.c.l.b16 %v705
    %v969 = vunpack.c.l.b16 %v706
    %v970 = vunpack.c.l.b16 %v707
    %v971 = vunpack.c.l.b16 %v708
    %v972 = vunpack.c.l.b16 %v709
    %v973 = vunpack.c.l.b16 %v710
    %v974 = vunpack.c.l.b16 %v711
    %v975 = vunpack.c.l.b16 %v712
    %v976 = vunpack.c.l.b16 %v713
    %v977 = vunpack.c.l.b16 %v714
    %v978 = vunpack.c.l.b16 %v715
    %v979 = vunpack.c.l.b16 %v716
    %v980 = vunpack.c.l.b16 %v717
    %v981 = vunpack.c.l.b16 %v718
    %v982 = vunpack.c.l.b16 %v719
    %v983 = vunpack.c.l.b16 %v720
    %v984 = vunpack.c.l.b16 %v721
    %v985 = vunpack.c.l.b16 %v722
    %v986 = vunpack.c.l.b16 %v723
    %v987 = vunpack.c.l.b16 %v724
    %v988 = vunpack.c.l.b16 %v725
    %v989 = vunpack.c.l.b16 %v726
    %v990 = vunpack.c.l.b16 %v727
    %v991 = vunpack.c.l.b16 %v728
    %v992 = vunpack.c.l.b16 %v729
    %v993 = vunpack.c.l.b16 %v730
    %v994 = vunpack.c.l.b16 %v731
    %v995 = vunpack.c.l.b16 %v732
    %v996 = vunpack.c.l.b16 %v733
    %v997 = vunpack.c.l.b16 %v734
    %v998 = vunpack.c.l.b16 %v735
    %v999 = vunpack.c.l.b16 %v736
    %v1000 = vunpack.c.l.b16 %v737
    %v1001 = vunpack.c.l.b16 %v738
    %v1002 = vunpack.c.l.b16 %v739
    %v1003 = vunpack.c.l.b16 %v740
    %v1004 = vunpack.c.l.b16 %v741
    %v1005 = vunpack.c.l.b16 %v742
    %v1006 = vunpack.c.l.b16 %v743
    %v1007 = vunpack.c.l.b16 %v744
    %v1008 = vunpack.c.l.b16 %v745
    %v1009 = vunpack.c.l.b16 %v746
    %v1010 = vunpack.c.l.b16 %v747
    %v1011 = vunpack.c.l.b16 %v748
    %v1012 = vunpack.c.l.b16 %v749
    %v1013 = vunpack.c.l.b16 %v750
    %v1014 = vunpack.c.l.b16 %v751
    %v1015 = vunpack.c.l.b16 %v752
    %v1016 = vunpack.c.l.b16 %v753
    %v1017 = vunpack.c.l.b16 %v754
    %v1018 = vunpack.c.l.b16 %v755
    %v1019 = vunpack.c.l.b16 %v756
    %v1020 = vunpack.c.l.b16 %v757
    %v1021 = vunpack.c.l.b16 %v758
    %v1022 = vunpack.c.l.b16 %v759
    %v1023 = vunpack.c.l.b16 %v760
    %v1024 = vunpack.c.l.b16 %v761
    %v1025 = vunpack.c.l.b16 %v762
    %v1026 = vunpack.c.l.b16 %v763
    %v1027 = vpack.c.b16 %v900, %v899
    %v1028 = vpack.c.b16 %v902, %v901
    %v1029 = vpack.c.b16 %v904, %v903
    %v1030 = vpack.c.b16 %v906, %v905
    %v1031 = vpack.c.b16 %v908, %v907
    %v1032 = vpack.c.b16 %v910, %v909
    %v1033 = vpack.c.b16 %v912, %v911
    %v1034 = vpack.c.b16 %v914, %v913
    %v1035 = vpack.c.b16 %v916, %v915
    %v1036 = vpack.c.b16 %v918, %v917
    %v1037 = vpack.c.b16 %v920, %v919
    %v1038 = vpack.c.b16 %v922, %v921
    %v1039 = vpack.c.b16 %v924, %v923
    %v1040 = vpack.c.b16 %v926, %v925
    %v1041 = vpack.c.b16 %v928, %v927
    %v1042 = vpack.c.b16 %v930, %v929
    %v1043 = vpack.c.b16 %v932, %v931
    %v1044 = vpack.c.b16 %v934, %v933
    %v1045 = vpack.c.b16 %v936, %v935
    %v1046 = vpack.c.b16 %v938, %v937
    %v1047 = vpack.c.b16 %v940, %v939
    %v1048 = vpack.c.b16 %v942, %v941
    %v1049 = vpack.c.b16 %v944, %v943
    %v1050 = vpack.c.b16 %v946, %v945
    %v1051 = vpack.c.b16 %v948, %v947
    %v1052 = vpack.c.b16 %v950, %v949
    %v1053 = vpack.c.b16 %v952, %v951
    %v1054 = vpack.c.b16 %v954, %v953
    %v1055 = vpack.c.b16 %v956, %v955
    %v1056 = vpack.c.b16 %v958, %v957
    %v1057 = vpack.c.b16 %v960, %v959
    %v1058 = vpack.c.b16 %v962, %v961
    %v1059 = vpack.c.b16 %v964, %v963
    %v1060 = vpack.c.b16 %v966, %v965
    %v1061 = vpack.c.b16 %v968, %v967
    %v1062 = vpack.c.b16 %v970, %v969
    %v1063 = vpack.c.b16 %v972, %v971
    %v1064 = vpack.c.b16 %v974, %v973
    %v1065 = vpack.c.b16 %v976, %v975
    %v1066 = vpack.c.b16 %v978, %v977
    %v1067 = vpack.c.b16 %v980, %v979
    %v1068 = vpack.c.b16 %v982, %v981
    %v1069 = vpack.c.b16 %v984, %v983
    %v1070 = vpack.c.b16 %v986, %v985
    %v1071 = vpack.c.b16 %v988, %v987
    %v1072 = vpack.c.b16 %v990, %v989
    %v1073 = vpack.c.b16 %v992, %v991
    %v1074 = vpack.c.b16 %v994, %v993
    %v1075 = vpack.c.b16 %v996, %v995
    %v1076 = vpack.c.b16 %v998, %v997
    %v1077 = vpack.c.b16 %v1000, %v999
    %v1078 = vpack.c.b16 %v1002, %v1001
    %v1079 = vpack.c.b16 %v1004, %v1003
    %v1080 = vpack.c.b16 %v1006, %v1005
    %v1081 = vpack.c.b16 %v1008, %v1007
    %v1082 = vpack.c.b16 %v1010, %v1009
    %v1083 = vpack.c.b16 %v1012, %v1011
    %v1084 = vpack.c.b16 %v1014, %v1013
    %v1085 = vpack.c.b16 %v1016, %v1015
    %v1086 = vpack.c.b16 %v1018, %v1017
    %v1087 = vpack.c.b16 %v1020, %v1019
    %v1088 = vpack.c.b16 %v1022, %v1021
    %v1089 = vpack.c.b16 %v1024, %v1023
    %v1090 = vpack.c.b16 %v1026, %v1025
    %1155 = vmatprep.subr.bf16.mxu0 0
    %1156 = vmatpush1.bf16.msra.mxu0 %v1034
    %1157 = vmatprep.subr.bf16.mxu0 0
    %1158 = vmatpush1.bf16.msra.mxu0 %v1033
    %1159 = vmatprep.subr.bf16.mxu0 0
    %1160 = vmatpush1.bf16.msra.mxu0 %v1032
    %1161 = vmatprep.subr.bf16.mxu0 0
    %1162 = vmatpush1.bf16.msra.mxu0 %v1031
    %1163 = vmatprep.subr.bf16.mxu0 0
    %1164 = vmatpush1.bf16.msra.mxu0 %v1030
    %1165 = vmatprep.subr.bf16.mxu0 0
    %1166 = vmatpush1.bf16.msra.mxu0 %v1029
    %1167 = vmatprep.subr.bf16.mxu0 0
    %1168 = vmatpush1.bf16.msra.mxu0 %v1028
    %1169 = vmatprep.subr.bf16.mxu0 0
    %1170 = vmatpush1.bf16.msra.mxu0 %v1027
    %1171 = vmatprep.subr.bf16.mxu0 0
    %1172 = vmatpush2.bf16.msra.mxu0 %v1042
    %1173 = vmatprep.subr.bf16.mxu0 0
    %1174 = vmatpush2.bf16.msra.mxu0 %v1041
    %1175 = vmatprep.subr.bf16.mxu0 0
    %1176 = vmatpush2.bf16.msra.mxu0 %v1040
    %1177 = vmatprep.subr.bf16.mxu0 0
    %1178 = vmatpush2.bf16.msra.mxu0 %v1039
    %1179 = vmatprep.subr.bf16.mxu0 0
    %1180 = vmatpush2.bf16.msra.mxu0 %v1038
    %1181 = vmatprep.subr.bf16.mxu0 0
    %1182 = vmatpush2.bf16.msra.mxu0 %v1037
    %1183 = vmatprep.subr.bf16.mxu0 0
    %1184 = vmatpush2.bf16.msra.mxu0 %v1036
    %1185 = vmatprep.subr.bf16.mxu0 0
    %1186 = vmatpush2.bf16.msra.mxu0 %v1035
    %1187 = vmatprep.mubr.bf16.mxu0 %v629
    %1188 = vmatmul.mubr.bf16.gmra.mxu0 %v628
    %v1189 = vpop.f32.mrf.mxu0
    %v1190 = vadd.f32 %v769, %v1189
    %v1191 = vpop.f32.mrf.mxu0
    %v1192 = vpop.f32.mrf.mxu0
    %v1193 = vpop.f32.mrf.mxu0
    %1194 = vdwg.mxu0
    %1195 = vmatprep.subr.bf16.mxu0 0
    %1196 = vmatpush1.bf16.msra.mxu0 %v1050
    %1197 = vmatprep.subr.bf16.mxu0 0
    %1198 = vmatpush1.bf16.msra.mxu0 %v1049
    %1199 = vmatprep.subr.bf16.mxu0 0
    %1200 = vmatpush1.bf16.msra.mxu0 %v1048
    %1201 = vmatprep.subr.bf16.mxu0 0
    %1202 = vmatpush1.bf16.msra.mxu0 %v1047
    %1203 = vmatprep.subr.bf16.mxu0 0
    %1204 = vmatpush1.bf16.msra.mxu0 %v1046
    %1205 = vmatprep.subr.bf16.mxu0 0
    %1206 = vmatpush1.bf16.msra.mxu0 %v1045
    %1207 = vmatprep.subr.bf16.mxu0 0
    %1208 = vmatpush1.bf16.msra.mxu0 %v1044
    %1209 = vmatprep.subr.bf16.mxu0 0
    %1210 = vmatpush1.bf16.msra.mxu0 %v1043
    %1211 = vmatprep.subr.bf16.mxu0 0
    %1212 = vmatpush2.bf16.msra.mxu0 %v1058
    %1213 = vmatprep.subr.bf16.mxu0 0
    %1214 = vmatpush2.bf16.msra.mxu0 %v1057
    %1215 = vmatprep.subr.bf16.mxu0 0
    %1216 = vmatpush2.bf16.msra.mxu0 %v1056
    %1217 = vmatprep.subr.bf16.mxu0 0
    %1218 = vmatpush2.bf16.msra.mxu0 %v1055
    %1219 = vmatprep.subr.bf16.mxu0 0
    %1220 = vmatpush2.bf16.msra.mxu0 %v1054
    %1221 = vmatprep.subr.bf16.mxu0 0
    %1222 = vmatpush2.bf16.msra.mxu0 %v1053
    %1223 = vmatprep.subr.bf16.mxu0 0
    %1224 = vmatpush2.bf16.msra.mxu0 %v1052
    %1225 = vmatprep.subr.bf16.mxu0 0
    %1226 = vmatpush2.bf16.msra.mxu0 %v1051
    %1227 = vmatprep.mubr.bf16.mxu0 %v631
    %1228 = vmatmul.mubr.bf16.gmra.mxu0 %v630
    %v1229 = vpop.f32.mrf.mxu0
    %v1230 = vadd.f32 %v1190, %v1229
    %v1231 = vpop.f32.mrf.mxu0
    %v1232 = vpop.f32.mrf.mxu0
    %v1233 = vpop.f32.mrf.mxu0
    %1234 = vdwg.mxu0
    %1235 = vmatprep.subr.bf16.mxu0 0
    %1236 = vmatpush1.bf16.msra.mxu0 %v1066
    %1237 = vmatprep.subr.bf16.mxu0 0
    %1238 = vmatpush1.bf16.msra.mxu0 %v1065
    %1239 = vmatprep.subr.bf16.mxu0 0
    %1240 = vmatpush1.bf16.msra.mxu0 %v1064
    %1241 = vmatprep.subr.bf16.mxu0 0
    %1242 = vmatpush1.bf16.msra.mxu0 %v1063
    %1243 = vmatprep.subr.bf16.mxu0 0
    %1244 = vmatpush1.bf16.msra.mxu0 %v1062
    %1245 = vmatprep.subr.bf16.mxu0 0
    %1246 = vmatpush1.bf16.msra.mxu0 %v1061
    %1247 = vmatprep.subr.bf16.mxu0 0
    %1248 = vmatpush1.bf16.msra.mxu0 %v1060
    %1249 = vmatprep.subr.bf16.mxu0 0
    %1250 = vmatpush1.bf16.msra.mxu0 %v1059
    %1251 = vmatprep.subr.bf16.mxu0 0
    %1252 = vmatpush2.bf16.msra.mxu0 %v1074
    %1253 = vmatprep.subr.bf16.mxu0 0
    %1254 = vmatpush2.bf16.msra.mxu0 %v1073
    %1255 = vmatprep.subr.bf16.mxu0 0
    %1256 = vmatpush2.bf16.msra.mxu0 %v1072
    %1257 = vmatprep.subr.bf16.mxu0 0
    %1258 = vmatpush2.bf16.msra.mxu0 %v1071
    %1259 = vmatprep.subr.bf16.mxu0 0
    %1260 = vmatpush2.bf16.msra.mxu0 %v1070
    %1261 = vmatprep.subr.bf16.mxu0 0
    %1262 = vmatpush2.bf16.msra.mxu0 %v1069
    %1263 = vmatprep.subr.bf16.mxu0 0
    %1264 = vmatpush2.bf16.msra.mxu0 %v1068
    %1265 = vmatprep.subr.bf16.mxu0 0
    %1266 = vmatpush2.bf16.msra.mxu0 %v1067
    %1267 = vmatprep.mubr.bf16.mxu0 %v633
    %1268 = vmatmul.mubr.bf16.gmra.mxu0 %v632
    %v1269 = vpop.f32.mrf.mxu0
    %v1270 = vadd.f32 %v1230, %v1269
    %v1271 = vpop.f32.mrf.mxu0
    %v1272 = vpop.f32.mrf.mxu0
    %v1273 = vpop.f32.mrf.mxu0
    %1274 = vdwg.mxu0
    %1275 = vmatprep.subr.bf16.mxu0 0
    %1276 = vmatpush1.bf16.msra.mxu0 %v1082
    %1277 = vmatprep.subr.bf16.mxu0 0
    %1278 = vmatpush1.bf16.msra.mxu0 %v1081
    %1279 = vmatprep.subr.bf16.mxu0 0
    %1280 = vmatpush1.bf16.msra.mxu0 %v1080
    %1281 = vmatprep.subr.bf16.mxu0 0
    %1282 = vmatpush1.bf16.msra.mxu0 %v1079
    %1283 = vmatprep.subr.bf16.mxu0 0
    %1284 = vmatpush1.bf16.msra.mxu0 %v1078
    %1285 = vmatprep.subr.bf16.mxu0 0
    %1286 = vmatpush1.bf16.msra.mxu0 %v1077
    %1287 = vmatprep.subr.bf16.mxu0 0
    %1288 = vmatpush1.bf16.msra.mxu0 %v1076
    %1289 = vmatprep.subr.bf16.mxu0 0
    %1290 = vmatpush1.bf16.msra.mxu0 %v1075
    %1291 = vmatprep.subr.bf16.mxu0 0
    %1292 = vmatpush2.bf16.msra.mxu0 %v1090
    %1293 = vmatprep.subr.bf16.mxu0 0
    %1294 = vmatpush2.bf16.msra.mxu0 %v1089
    %1295 = vmatprep.subr.bf16.mxu0 0
    %1296 = vmatpush2.bf16.msra.mxu0 %v1088
    %1297 = vmatprep.subr.bf16.mxu0 0
    %1298 = vmatpush2.bf16.msra.mxu0 %v1087
    %1299 = vmatprep.subr.bf16.mxu0 0
    %1300 = vmatpush2.bf16.msra.mxu0 %v1086
    %1301 = vmatprep.subr.bf16.mxu0 0
    %1302 = vmatpush2.bf16.msra.mxu0 %v1085
    %1303 = vmatprep.subr.bf16.mxu0 0
    %1304 = vmatpush2.bf16.msra.mxu0 %v1084
    %1305 = vmatprep.subr.bf16.mxu0 0
    %1306 = vmatpush2.bf16.msra.mxu0 %v1083
    %1307 = vmatprep.mubr.bf16.mxu0 %v635
    %1308 = vmatmul.mubr.bf16.gmra.mxu0 %v634
    %v1309 = vpop.f32.mrf.mxu0
    %v1310 = vadd.f32 %v1270, %v1309
    %v1311 = vpop.f32.mrf.mxu0
    %v1312 = vpop.f32.mrf.mxu0
    %v1313 = vpop.f32.mrf.mxu0
    %1314 = vdwg.mxu0
    %vm1315 = vcmask 74752
    %1316 = vst.msk [vmem:[#allocation2] sm:$0x3] %vm1315, %v1310
    // Predicated region
    $region22: #{fcc_forward.5} parent=1 // pred_check
      _
    $region23: #{fcc_forward.5} parent=1 // pred_check_branch
      %1318 = sbr.rel (0) target = $region25
    $region24: #{fcc_forward.5} parent=1 // pred_region
      %s1320 = ssub.s32 32, 32
      %1321 = vsyncadd [#allocation3], %s1320
      %s1323 = sshll.u32 [#allocation2], 4
      %s1324 = int_to_ptr.vmem [resolvable:$true] %s1323
      %1326 = dma.vmem_to_hbm [thread:$0]  %s1324, 32, %s5, [#allocation3]
    $region25: #{fcc_forward.5} parent=1 // pred_fallthru
      _
    // Predicated region
    $region26: #{fcc_forward.5} parent=1 // pred_check
      _
    $region27: #{fcc_forward.5} parent=1 // pred_check_branch
      %1328 = sbr.rel (0) target = $region29
    $region28: #{fcc_forward.5} parent=1 // pred_region
      %1329 = dma.done [#allocation3], 32
    $region29: #{fcc_forward.5} parent=1 // pred_fallthru
      _
    %1330 = vsyncpa [#allocation3], 1

// kernel: fcc_forward.3
$region0: #{fcc_forward.3}
  #allocation0 [shape = 'u32[]', space=smem, size = 0x4, offset = 0x4, fixed_abs, tag = 'smem constant byte address 0x4 - core index']
  #allocation1 [shape = 'u32[144,128]{1,0:T(1,128)}', space=vmem, size = 0x12000, scoped, tag = 'internal scratch']
  %s0 = inlined_call_operand.vmem [shape: f32[2,784], index: 0, kind: input, shape index: {}]
  %s1 = inlined_call_operand.hbm [shape: f32[1,784], index: 1, kind: input, shape index: {}]
  %s2 = inlined_call_operand.hbm [shape: f32[1,784], index: 2, kind: input, shape index: {}]
  %s3 = inlined_call_operand.hbm [shape: bf16[784,1024], index: 3, kind: input, shape index: {}]
  %s4 = inlined_call_operand.hbm [shape: f32[1,1024], index: 4, kind: input, shape index: {}]
  %s5 = inlined_call_operand.vmem [shape: f32[2,1024], index: 5, kind: output, shape index: {}]
  %s6 = sld [smem:[#allocation0]]
  $region69: #{fcc_forward.3} parent=0
    _
  %s8 = ssub.s32 1, %s6
  %s9 = scalar_select 0, %s8, %s6
  $region1: #{fcc_forward.3} parent=0
    #allocation2 [shape = 'u8[3584]{0}', space=vmem, size = 0x1000, scoped, tag = 'input window, operand 1, single buffered']
    #allocation3 [shape = 's32[2]{0}', space=sflag, size = 0x8, scoped, tag = 'scoped memory for fcc_forward.3']
    #allocation4 [shape = 'u8[3584]{0}', space=vmem, size = 0x1000, scoped, tag = 'input window, operand 2, single buffered']
    #allocation5 [shape = 's32[1]{0}', space=sflag, size = 0x4, scoped, tag = 'scoped memory for fcc_forward.3']
    #allocation6 [shape = 'u8[1605632]{0}', space=vmem, size = 0x188000, scoped, tag = 'input window, operand 3']
    #allocation7 [shape = 'u8[4096]{0}', space=vmem, size = 0x1000, scoped, tag = 'input window, operand 4']
    %10 = vsyncpa [#allocation3], 0
    %11 = vsyncpa [#allocation5], 0
    loop: start=0, step=1, limit=4
    $region2: #{fcc_forward.3} parent=1 // loop_pre_header
      _
    $region3: #{fcc_forward.3} parent=1 // loop_header
      %s13 = sphi 0, %s17
      %p14 = scmp.ge.s32.totalorder %s13, 4
      %s21 = sphi 0, %s21
      %s23 = sphi 0, %s21
      %s24 = sphi 0, %s23
      %s38 = sphi 0, %s24
      %s42 = sphi 0, %s42
      %s44 = sphi 0, %s42
      %s45 = sphi 0, %s44
      %s59 = sphi 0, %s45
      %s63 = sphi 0, %s63
      %s65 = sphi 0, %s63
      %s66 = sphi 0, %s65
      %s80 = sphi 0, %s66
      %s86 = sphi 0, %s88
      %s89 = sphi 0, %s86
      %s90 = sphi 0, %s89
      %s106 = sphi 0, %s90
      %s112 = sphi 0, %s114
      %s115 = sphi 0, %s112
      %s116 = sphi 0, %s115
      %s132 = sphi 0, %s116
      %s138 = sphi 0, %s140
      %s141 = sphi 0, %s138
      %s142 = sphi 0, %s141
      %s158 = sphi 0, %s142
    $region4: #{fcc_forward.3} parent=1 // loop_header_branch
      %16 = sbr.rel (%p14) target = $region8
    $region5: #{fcc_forward.3} parent=1 // loop_body
      %s18 = ssub.s32 %s13, 1
      %s19 = ssub.s32 %s13, 2
      %s20 = sadd.s32 %s13, 1
      %s22 = sadd.s32 %s21, 1
      %p25 = scmp.eq.s32.totalorder %s13, 1
      %p26 = scmp.ne.s32.totalorder %s21, %s23
      %p27 = scmp.eq.s32.totalorder %s13, 0
      %p28 = por %p26, %p27
      %p29 = scmp.ne.s32.totalorder %s21, %s23
      %p30 = scmp.eq.s32.totalorder %s18, 1
      %p31 = por %p29, %p30
      %p32 = scmp.ne.s32.totalorder %s23, %s24
      %p33 = scmp.eq.s32.totalorder %s18, 0
      %p34 = por %p32, %p33
      %p35 = scmp.ne.s32.totalorder %s23, %s24
      %p36 = scmp.eq.s32.totalorder %s19, 1
      %p37 = por %p35, %p36
      %p39 = scmp.ne.s32.totalorder %s24, %s38
      %p40 = scmp.eq.s32.totalorder %s19, 0
      %p41 = por %p39, %p40
      %s43 = sadd.s32 %s42, 1
      %p46 = scmp.eq.s32.totalorder %s13, 1
      %p47 = scmp.ne.s32.totalorder %s42, %s44
      %p48 = scmp.eq.s32.totalorder %s13, 0
      %p49 = por %p47, %p48
      %p50 = scmp.ne.s32.totalorder %s42, %s44
      %p51 = scmp.eq.s32.totalorder %s18, 1
      %p52 = por %p50, %p51
      %p53 = scmp.ne.s32.totalorder %s44, %s45
      %p54 = scmp.eq.s32.totalorder %s18, 0
      %p55 = por %p53, %p54
      %p56 = scmp.ne.s32.totalorder %s44, %s45
      %p57 = scmp.eq.s32.totalorder %s19, 1
      %p58 = por %p56, %p57
      %p60 = scmp.ne.s32.totalorder %s45, %s59
      %p61 = scmp.eq.s32.totalorder %s19, 0
      %p62 = por %p60, %p61
      %s64 = sadd.s32 %s63, 1
      %p67 = scmp.eq.s32.totalorder %s13, 1
      %p68 = scmp.ne.s32.totalorder %s63, %s65
      %p69 = scmp.eq.s32.totalorder %s13, 0
      %p70 = por %p68, %p69
      %p71 = scmp.ne.s32.totalorder %s63, %s65
      %p72 = scmp.eq.s32.totalorder %s18, 1
      %p73 = por %p71, %p72
      %p74 = scmp.ne.s32.totalorder %s65, %s66
      %p75 = scmp.eq.s32.totalorder %s18, 0
      %p76 = por %p74, %p75
      %p77 = scmp.ne.s32.totalorder %s65, %s66
      %p78 = scmp.eq.s32.totalorder %s19, 1
      %p79 = por %p77, %p78
      %p81 = scmp.ne.s32.totalorder %s66, %s80
      %p82 = scmp.eq.s32.totalorder %s19, 0
      %p83 = por %p81, %p82
      %s84 = ssub.s32 %s13, %s20
      %p85 = scmp.eq.s32.totalorder %s84, 0
      %s87 = sadd.s32 %s86, 1
      %s88 = scalar_select %p85, %s86, %s87
      %p91 = pneg %p85
      %p92 = scmp.eq.s32.totalorder %s13, 1
      %p93 = por %p91, %p92
      %p94 = scmp.ne.s32.totalorder %s86, %s89
      %p95 = scmp.eq.s32.totalorder %s13, 0
      %p96 = por %p94, %p95
      %p97 = scmp.ne.s32.totalorder %s86, %s89
      %p98 = scmp.eq.s32.totalorder %s18, 1
      %p99 = por %p97, %p98
      %p100 = scmp.ne.s32.totalorder %s89, %s90
      %p101 = scmp.eq.s32.totalorder %s18, 0
      %p102 = por %p100, %p101
      %p103 = scmp.ne.s32.totalorder %s89, %s90
      %p104 = scmp.eq.s32.totalorder %s19, 1
      %p105 = por %p103, %p104
      %p107 = scmp.ne.s32.totalorder %s90, %s106
      %p108 = scmp.eq.s32.totalorder %s19, 0
      %p109 = por %p107, %p108
      %s110 = ssub.s32 %s13, %s20
      %p111 = scmp.eq.s32.totalorder %s110, 0
      %s113 = sadd.s32 %s112, 1
      %s114 = scalar_select %p111, %s112, %s113
      %p117 = pneg %p111
      %p118 = scmp.eq.s32.totalorder %s13, 1
      %p119 = por %p117, %p118
      %p120 = scmp.ne.s32.totalorder %s112, %s115
      %p121 = scmp.eq.s32.totalorder %s13, 0
      %p122 = por %p120, %p121
      %p123 = scmp.ne.s32.totalorder %s112, %s115
      %p124 = scmp.eq.s32.totalorder %s18, 1
      %p125 = por %p123, %p124
      %p126 = scmp.ne.s32.totalorder %s115, %s116
      %p127 = scmp.eq.s32.totalorder %s18, 0
      %p128 = por %p126, %p127
      %p129 = scmp.ne.s32.totalorder %s115, %s116
      %p130 = scmp.eq.s32.totalorder %s19, 1
      %p131 = por %p129, %p130
      %p133 = scmp.ne.s32.totalorder %s116, %s132
      %p134 = scmp.eq.s32.totalorder %s19, 0
      %p135 = por %p133, %p134
      %s136 = ssub.s32 %s13, %s20
      %p137 = scmp.eq.s32.totalorder %s136, 0
      %s139 = sadd.s32 %s138, 1
      %s140 = scalar_select %p137, %s138, %s139
      %p143 = pneg %p137
      %p144 = scmp.eq.s32.totalorder %s13, 1
      %p145 = por %p143, %p144
      %p146 = scmp.ne.s32.totalorder %s138, %s141
      %p147 = scmp.eq.s32.totalorder %s13, 0
      %p148 = por %p146, %p147
      %p149 = scmp.ne.s32.totalorder %s138, %s141
      %p150 = scmp.eq.s32.totalorder %s18, 1
      %p151 = por %p149, %p150
      %p152 = scmp.ne.s32.totalorder %s141, %s142
      %p153 = scmp.eq.s32.totalorder %s18, 0
      %p154 = por %p152, %p153
      %p155 = scmp.ne.s32.totalorder %s141, %s142
      %p156 = scmp.eq.s32.totalorder %s19, 1
      %p157 = por %p155, %p156
      %p159 = scmp.ne.s32.totalorder %s142, %s158
      %p160 = scmp.eq.s32.totalorder %s19, 0
      %p161 = por %p159, %p160
      %p162 = scmp.le.s32.totalorder 1, %s13
      %p163 = scmp.lt.s32.totalorder %s13, 3
      %p164 = pnand %p162, %p163
      %p165 = pneg %p164
      // Predicated region
      $region9: #{fcc_forward.3} parent=5 // pred_check
        _
      $region10: #{fcc_forward.3} parent=5 // pred_check_branch
        %167 = sbr.rel (%p164) target = $region12
      $region11: #{fcc_forward.3} parent=5 // pred_region
        %s168 = ssub.s32 %s13, 1
        // Predicated region
        $region13: #{fcc_forward.3} parent=11 // pred_check
          %p169 = pneg %p34
        $region14: #{fcc_forward.3} parent=11 // pred_check_branch
          %171 = sbr.rel (%p169) target = $region16
        $region15: #{fcc_forward.3} parent=11 // pred_region
          _
        $region16: #{fcc_forward.3} parent=11 // pred_fallthru
          _
        // Predicated region
        $region17: #{fcc_forward.3} parent=11 // pred_check
          %p172 = pneg %p55
        $region18: #{fcc_forward.3} parent=11 // pred_check_branch
          %174 = sbr.rel (%p172) target = $region20
        $region19: #{fcc_forward.3} parent=11 // pred_region
          %s176 = ssub.s32 112, 112
          %177 = vsyncadd [#allocation3], %s176
          %s179 = sshll.u32 [#allocation2], 4
          %s180 = int_to_ptr.vmem [resolvable:$true] %s179
          %182 = dma.hbm_to_vmem [thread:$0]  %s1, 112, %s180, [#allocation3]
        $region20: #{fcc_forward.3} parent=11 // pred_fallthru
          _
        // Predicated region
        $region21: #{fcc_forward.3} parent=11 // pred_check
          %p183 = pneg %p76
        $region22: #{fcc_forward.3} parent=11 // pred_check_branch
          %185 = sbr.rel (%p183) target = $region24
        $region23: #{fcc_forward.3} parent=11 // pred_region
          %s187 = ssub.s32 112, 112
          %188 = vsyncadd [#allocation5], %s187
          %s190 = sshll.u32 [#allocation4], 4
          %s191 = int_to_ptr.vmem [resolvable:$true] %s190
          %193 = dma.hbm_to_vmem [thread:$0]  %s2, 112, %s191, [#allocation5]
        $region24: #{fcc_forward.3} parent=11 // pred_fallthru
          _
      $region12: #{fcc_forward.3} parent=5 // pred_fallthru
        _
      %p194 = scmp.lt.s32.totalorder %s13, 2
      // Predicated region
      $region25: #{fcc_forward.3} parent=5 // pred_check
        %p195 = pneg %p194
      $region26: #{fcc_forward.3} parent=5 // pred_check_branch
        %197 = sbr.rel (%p195) target = $region28
      $region27: #{fcc_forward.3} parent=5 // pred_region
        // Predicated region
        $region29: #{fcc_forward.3} parent=27 // pred_check
          %p198 = pneg %p96
        $region30: #{fcc_forward.3} parent=27 // pred_check_branch
          %200 = sbr.rel (%p198) target = $region32
        $region31: #{fcc_forward.3} parent=27 // pred_region
          %s201 = sand.u32 %s13, 1
          %s202 = scalar_lea.sflag [#allocation3], %s201
          %s203 = sand.u32 %s86, 1
          %s204 = smul.addr %s203, 1568
          %s205 = scalar_lea.vmem [#allocation6], %s204
          %s206 = smul.u32 4, %s13
          %s208 = ssub.s32 25088, 25088
          %209 = vsyncadd %s202, %s208
          %s210 = smul.addr %s206, 64
          %s211 = scalar_lea.hbm %s3, %s210
          %s212 = sshll.u32 %s205, 4
          %s213 = int_to_ptr.vmem [resolvable:$true] %s212
          %218 = dma.hbm_to_vmem [thread:$0]  %s211, 25088, %s213, %s202, 512, 256, 16
        $region32: #{fcc_forward.3} parent=27 // pred_fallthru
          _
        // Predicated region
        $region33: #{fcc_forward.3} parent=27 // pred_check
          %p219 = pneg %p122
        $region34: #{fcc_forward.3} parent=27 // pred_check_branch
          %221 = sbr.rel (%p219) target = $region36
        $region35: #{fcc_forward.3} parent=27 // pred_region
          %s222 = sand.u32 %s13, 1
          %s223 = scalar_lea.sflag [#allocation3], %s222
          %s224 = sand.u32 %s112, 1
          %s225 = smul.addr %s224, 4
          %s226 = scalar_lea.vmem [#allocation7], %s225
          %s227 = smul.u32 4, %s13
          %s229 = ssub.s32 64, 64
          %230 = vsyncadd %s223, %s229
          %s231 = smul.addr %s227, 16
          %s232 = scalar_lea.hbm %s4, %s231
          %s234 = sshll.u32 %s226, 4
          %s235 = int_to_ptr.vmem [resolvable:$true] %s234
          %237 = dma.hbm_to_vmem [thread:$0]  %s232, 64, %s235, %s223
        $region36: #{fcc_forward.3} parent=27 // pred_fallthru
          _
      $region28: #{fcc_forward.3} parent=5 // pred_fallthru
        _
      %p238 = scmp.le.s32.totalorder 1, %s13
      %p239 = scmp.lt.s32.totalorder %s13, 3
      %p240 = pnand %p238, %p239
      %p241 = pneg %p240
      // Predicated region
      $region37: #{fcc_forward.3} parent=5 // pred_check
        _
      $region38: #{fcc_forward.3} parent=5 // pred_check_branch
        %243 = sbr.rel (%p240) target = $region40
      $region39: #{fcc_forward.3} parent=5 // pred_region
        %s244 = ssub.s32 %s13, 1
        // Predicated region
        $region41: #{fcc_forward.3} parent=39 // pred_check
          %p245 = pneg %p55
        $region42: #{fcc_forward.3} parent=39 // pred_check_branch
          %247 = sbr.rel (%p245) target = $region44
        $region43: #{fcc_forward.3} parent=39 // pred_region
          %248 = dma.done [#allocation3], 112
        $region44: #{fcc_forward.3} parent=39 // pred_fallthru
          _
        // Predicated region
        $region45: #{fcc_forward.3} parent=39 // pred_check
          %p249 = pneg %p76
        $region46: #{fcc_forward.3} parent=39 // pred_check_branch
          %251 = sbr.rel (%p249) target = $region48
        $region47: #{fcc_forward.3} parent=39 // pred_region
          %252 = dma.done [#allocation5], 112
        $region48: #{fcc_forward.3} parent=39 // pred_fallthru
          _
        %s253 = sand.u32 %s18, 1
        %s254 = scalar_lea.sflag [#allocation3], %s253
        %s255 = sand.u32 %s89, 1
        %s256 = smul.addr %s255, 1568
        %s257 = scalar_lea.vmem [#allocation6], %s256
        // Predicated region
        $region49: #{fcc_forward.3} parent=39 // pred_check
          %p258 = pneg %p102
        $region50: #{fcc_forward.3} parent=39 // pred_check_branch
          %260 = sbr.rel (%p258) target = $region52
        $region51: #{fcc_forward.3} parent=39 // pred_region
          %261 = dma.done %s254, 25088
        $region52: #{fcc_forward.3} parent=39 // pred_fallthru
          _
        %s262 = sand.u32 %s18, 1
        %s263 = scalar_lea.sflag [#allocation3], %s262
        %s264 = sand.u32 %s115, 1
        %s265 = smul.addr %s264, 4
        %s266 = scalar_lea.vmem [#allocation7], %s265
        // Predicated region
        $region53: #{fcc_forward.3} parent=39 // pred_check
          %p267 = pneg %p128
        $region54: #{fcc_forward.3} parent=39 // pred_check_branch
          %269 = sbr.rel (%p267) target = $region56
        $region55: #{fcc_forward.3} parent=39 // pred_region
          %270 = dma.done %s263, 64
        $region56: #{fcc_forward.3} parent=39 // pred_fallthru
          _
        %p271 = pneg %p34
        %p272 = pneg %p31
        %p273 = pneg %p55
        %p274 = pneg %p52
        %p275 = pneg %p76
        %p276 = pneg %p73
        %s277 = sand.u32 %s18, 1
        %s278 = scalar_lea.sflag [#allocation3], %s277
        %s279 = sand.u32 %s89, 1
        %s280 = smul.addr %s279, 1568
        %s281 = scalar_lea.vmem [#allocation6], %s280
        %p282 = pneg %p102
        %p283 = pneg %p99
        %s284 = sand.u32 %s18, 1
        %s285 = scalar_lea.sflag [#allocation3], %s284
        %s286 = sand.u32 %s115, 1
        %s287 = smul.addr %s286, 4
        %s288 = scalar_lea.vmem [#allocation7], %s287
        %p289 = pneg %p128
        %p290 = pneg %p125
        %p291 = pneg %p154
        %p292 = pneg %p151
        %s293 = smul.u32 4, %s18
        %p294 = scmp.lt.s32.totalorder %s293, 7
        %s295 = scalar_select %p294, %s293, 7
        %s296 = smul.addr %s295, 2
        %s297 = scalar_lea.vmem %s5, %s296
        %s298 = smul.u32 4, %s18
        %s299 = smul.u32 4, %s18
        %s300 = smul.u32 4, %s18
        %p301 = scmp.lt.s32.totalorder %s300, 7
        %s302 = scalar_select %p301, %s300, 7
        %s303 = smul.addr %s302, 2
        %s304 = scalar_lea.vmem %s5, %s303
        %s305 = smul.u32 4, %s18
        %v307 = vld [vmem:[%s0] sm:$0xff]
        %v308 = vld [vmem:[%s0 + $0x8] sm:$0x3f]
        %v311 = vcombine.high %v307, %v307
        %v313 = vunpack.c.l.s4 1983009808
        %v314 = vunpack.c.0.s8 %v313
        %v315 = vlaneseq
        %v316 = vshrl.u32 %v315, 7
        %v317 = vsub.s32 %v314, %v316
        %v318 = vrot.slane %v307, %v317
        %v320 = vunpack.c.l.s4 1983009808
        %v321 = vunpack.c.0.s8 %v320
        %v322 = vlaneseq
        %v323 = vshrl.u32 %v322, 7
        %v324 = vsub.s32 %v321, %v323
        %v325 = vrot.slane %v311, %v324
        %v326 = vcombine.high %v318, %v318
        %v327 = vcombine.high %v325, %v325
        %v328 = vcombine.high %v308, %v308
        %v330 = vunpack.c.l.s4 1983009808
        %v331 = vunpack.c.0.s8 %v330
        %v332 = vlaneseq
        %v333 = vshrl.u32 %v332, 7
        %v334 = vsub.s32 %v331, %v333
        %v335 = vrot.slane %v308, %v334
        %v337 = vunpack.c.l.s4 1983009808
        %v338 = vunpack.c.0.s8 %v337
        %v339 = vlaneseq
        %v340 = vshrl.u32 %v339, 7
        %v341 = vsub.s32 %v338, %v340
        %v342 = vrot.slane %v328, %v341
        %v343 = vcombine.high %v335, %v335
        %vm351 = vcmask 1041408
        %v352 = vsel %vm351, %v318, 0.0
        %v353 = vrot.slane %v352, 4
        %v354 = vadd.f32 %v352, %v353
        %v355 = vrot.slane %v354, 2
        %v356 = vadd.f32 %v354, %v355
        %v357 = vrot.slane %v356, 1
        %v358 = vadd.f32 %v356, %v357
        %v359 = vsel %vm351, %v326, 0.0
        %v360 = vrot.slane %v359, 4
        %v361 = vadd.f32 %v359, %v360
        %v362 = vrot.slane %v361, 2
        %v363 = vadd.f32 %v361, %v362
        %v364 = vrot.slane %v363, 1
        %v365 = vadd.f32 %v363, %v364
        %v366 = vsel %vm351, %v325, 0.0
        %v367 = vrot.slane %v366, 4
        %v368 = vadd.f32 %v366, %v367
        %v369 = vrot.slane %v368, 2
        %v370 = vadd.f32 %v368, %v369
        %v371 = vrot.slane %v370, 1
        %v372 = vadd.f32 %v370, %v371
        %v373 = vsel %vm351, %v327, 0.0
        %v374 = vrot.slane %v373, 4
        %v375 = vadd.f32 %v373, %v374
        %v376 = vrot.slane %v375, 2
        %v377 = vadd.f32 %v375, %v376
        %v378 = vrot.slane %v377, 1
        %v379 = vadd.f32 %v377, %v378
        %v380 = vsel %vm351, %v335, 0.0
        %v381 = vrot.slane %v380, 4
        %v382 = vadd.f32 %v380, %v381
        %v383 = vrot.slane %v382, 2
        %v384 = vadd.f32 %v382, %v383
        %v385 = vrot.slane %v384, 1
        %v386 = vadd.f32 %v384, %v385
        %v387 = vsel %vm351, %v343, 0.0
        %v388 = vrot.slane %v387, 4
        %v389 = vadd.f32 %v387, %v388
        %v390 = vrot.slane %v389, 2
        %v391 = vadd.f32 %v389, %v390
        %v392 = vrot.slane %v391, 1
        %v393 = vadd.f32 %v391, %v392
        %vm394 = vcmask 123904
        %v395 = vsel %vm394, %v342, 0.0
        %v396 = vrot.slane %v395, 4
        %v397 = vadd.f32 %v395, %v396
        %v398 = vrot.slane %v397, 2
        %v399 = vadd.f32 %v397, %v398
        %v400 = vrot.slane %v399, 1
        %v401 = vadd.f32 %v399, %v400
        %v402 = vrcp.pop 2.0
        %v403 = vmul.f32 %v358, %v402
        %v404 = vmul.f32 %v365, %v402
        %v405 = vmul.f32 %v372, %v402
        %v406 = vmul.f32 %v379, %v402
        %v407 = vmul.f32 %v386, %v402
        %v408 = vmul.f32 %v393, %v402
        %v409 = vmul.f32 %v401, %v402
        %v417 = vcombine.low %v403, %v404
        %v418 = vcombine.low %v405, %v406
        %v420 = vunpack.c.l.s4 1983009808
        %v421 = vunpack.c.0.s8 %v420
        %v422 = vlaneseq
        %v423 = vshrl.u32 %v422, 7
        %v424 = vsub.s32 %v421, %v423
        %v425 = vrot.slane %v417, %v424
        %v427 = vunpack.c.l.s4 1983009808
        %v428 = vunpack.c.0.s8 %v427
        %v429 = vlaneseq
        %v430 = vshrl.u32 %v429, 7
        %v431 = vsub.s32 %v428, %v430
        %v432 = vrot.slane %v418, %v431
        %v433 = vcombine.low %v425, %v432
        %v434 = vcombine.low %v407, %v408
        %v436 = vunpack.c.l.s4 1983009808
        %v437 = vunpack.c.0.s8 %v436
        %v438 = vlaneseq
        %v439 = vshrl.u32 %v438, 7
        %v440 = vsub.s32 %v437, %v439
        %v441 = vrot.slane %v434, %v440
        %v443 = vunpack.c.l.s4 1983009808
        %v444 = vunpack.c.0.s8 %v443
        %v445 = vlaneseq
        %v446 = vshrl.u32 %v445, 7
        %v447 = vsub.s32 %v444, %v446
        %v448 = vrot.slane %v409, %v447
        %v449 = vcombine.low %v441, %v448
        %v452 = vsub.f32 %v307, %v433
        %v453 = vsub.f32 %v308, %v449
        %v454 = vmul.f32 %v452, %v452
        %v455 = vmul.f32 %v453, %v453
        %v458 = vcombine.high %v454, %v454
        %v460 = vunpack.c.l.s4 1983009808
        %v461 = vunpack.c.0.s8 %v460
        %v462 = vlaneseq
        %v463 = vshrl.u32 %v462, 7
        %v464 = vsub.s32 %v461, %v463
        %v465 = vrot.slane %v454, %v464
        %v467 = vunpack.c.l.s4 1983009808
        %v468 = vunpack.c.0.s8 %v467
        %v469 = vlaneseq
        %v470 = vshrl.u32 %v469, 7
        %v471 = vsub.s32 %v468, %v470
        %v472 = vrot.slane %v458, %v471
        %v473 = vcombine.high %v465, %v465
        %v474 = vcombine.high %v472, %v472
        %v475 = vcombine.high %v455, %v455
        %v477 = vunpack.c.l.s4 1983009808
        %v478 = vunpack.c.0.s8 %v477
        %v479 = vlaneseq
        %v480 = vshrl.u32 %v479, 7
        %v481 = vsub.s32 %v478, %v480
        %v482 = vrot.slane %v455, %v481
        %v484 = vunpack.c.l.s4 1983009808
        %v485 = vunpack.c.0.s8 %v484
        %v486 = vlaneseq
        %v487 = vshrl.u32 %v486, 7
        %v488 = vsub.s32 %v485, %v487
        %v489 = vrot.slane %v475, %v488
        %v490 = vcombine.high %v482, %v482
        %v498 = vsel %vm351, %v465, 0.0
        %v499 = vrot.slane %v498, 4
        %v500 = vadd.f32 %v498, %v499
        %v501 = vrot.slane %v500, 2
        %v502 = vadd.f32 %v500, %v501
        %v503 = vrot.slane %v502, 1
        %v504 = vadd.f32 %v502, %v503
        %v505 = vsel %vm351, %v473, 0.0
        %v506 = vrot.slane %v505, 4
        %v507 = vadd.f32 %v505, %v506
        %v508 = vrot.slane %v507, 2
        %v509 = vadd.f32 %v507, %v508
        %v510 = vrot.slane %v509, 1
        %v511 = vadd.f32 %v509, %v510
        %v512 = vsel %vm351, %v472, 0.0
        %v513 = vrot.slane %v512, 4
        %v514 = vadd.f32 %v512, %v513
        %v515 = vrot.slane %v514, 2
        %v516 = vadd.f32 %v514, %v515
        %v517 = vrot.slane %v516, 1
        %v518 = vadd.f32 %v516, %v517
        %v519 = vsel %vm351, %v474, 0.0
        %v520 = vrot.slane %v519, 4
        %v521 = vadd.f32 %v519, %v520
        %v522 = vrot.slane %v521, 2
        %v523 = vadd.f32 %v521, %v522
        %v524 = vrot.slane %v523, 1
        %v525 = vadd.f32 %v523, %v524
        %v526 = vsel %vm351, %v482, 0.0
        %v527 = vrot.slane %v526, 4
        %v528 = vadd.f32 %v526, %v527
        %v529 = vrot.slane %v528, 2
        %v530 = vadd.f32 %v528, %v529
        %v531 = vrot.slane %v530, 1
        %v532 = vadd.f32 %v530, %v531
        %v533 = vsel %vm351, %v490, 0.0
        %v534 = vrot.slane %v533, 4
        %v535 = vadd.f32 %v533, %v534
        %v536 = vrot.slane %v535, 2
        %v537 = vadd.f32 %v535, %v536
        %v538 = vrot.slane %v537, 1
        %v539 = vadd.f32 %v537, %v538
        %v540 = vsel %vm394, %v489, 0.0
        %v541 = vrot.slane %v540, 4
        %v542 = vadd.f32 %v540, %v541
        %v543 = vrot.slane %v542, 2
        %v544 = vadd.f32 %v542, %v543
        %v545 = vrot.slane %v544, 1
        %v546 = vadd.f32 %v544, %v545
        %v547 = vmul.f32 %v504, %v402
        %v548 = vmul.f32 %v511, %v402
        %v549 = vmul.f32 %v518, %v402
        %v550 = vmul.f32 %v525, %v402
        %v551 = vmul.f32 %v532, %v402
        %v552 = vmul.f32 %v539, %v402
        %v553 = vmul.f32 %v546, %v402
        %v554 = vld [vmem:[#allocation2] sm:$0x7f]
        %v555 = vadd.f32 %v547, 1e-05
        %v556 = vadd.f32 %v548, 1e-05
        %v557 = vadd.f32 %v549, 1e-05
        %v558 = vadd.f32 %v550, 1e-05
        %v559 = vadd.f32 %v551, 1e-05
        %v560 = vadd.f32 %v552, 1e-05
        %v561 = vadd.f32 %v553, 1e-05
        %v562 = vrsqrt.pop %v555
        %v563 = vrsqrt.pop %v556
        %v564 = vrsqrt.pop %v557
        %v565 = vrsqrt.pop %v558
        %v566 = vrsqrt.pop %v559
        %v567 = vrsqrt.pop %v560
        %v568 = vrsqrt.pop %v561
        %v576 = vcombine.low %v562, %v563
        %v577 = vcombine.low %v564, %v565
        %v578 = vcombine.low %v566, %v567
        %v580 = vunpack.c.l.s4 1966171168
        %v581 = vunpack.c.0.s8 %v580
        %v582 = vlaneseq
        %v583 = vshrl.u32 %v582, 7
        %v584 = vsub.s32 %v581, %v583
        %v585 = vrot.slane %v576, %v584
        %v587 = vunpack.c.l.s4 1966171168
        %v588 = vunpack.c.0.s8 %v587
        %v589 = vlaneseq
        %v590 = vshrl.u32 %v589, 7
        %v591 = vsub.s32 %v588, %v590
        %v592 = vrot.slane %v577, %v591
        %v594 = vunpack.c.l.s4 1966171168
        %v595 = vunpack.c.0.s8 %v594
        %v596 = vlaneseq
        %v597 = vshrl.u32 %v596, 7
        %v598 = vsub.s32 %v595, %v597
        %v599 = vrot.slane %v578, %v598
        %v601 = vunpack.c.l.s4 1966171168
        %v602 = vunpack.c.0.s8 %v601
        %v603 = vlaneseq
        %v604 = vshrl.u32 %v603, 7
        %v605 = vsub.s32 %v602, %v604
        %v606 = vrot.slane %v568, %v605
        %v607 = vcombine.low %v585, %v592
        %v608 = vcombine.low %v599, %v606
        %v610 = vunpack.c.l.s4 1966171168
        %v611 = vunpack.c.0.s8 %v610
        %v612 = vlaneseq
        %v613 = vshrl.u32 %v612, 7
        %v614 = vsub.s32 %v611, %v613
        %v615 = vrot.slane %v607, %v614
        %v617 = vunpack.c.l.s4 1966171168
        %v618 = vunpack.c.0.s8 %v617
        %v619 = vlaneseq
        %v620 = vshrl.u32 %v619, 7
        %v621 = vsub.s32 %v618, %v620
        %v622 = vrot.slane %v608, %v621
        %v623 = vcombine.low %v615, %v622
        %v625 = vmul.f32 %v554, %v623
        %v626 = vld [vmem:[#allocation4] sm:$0x7f]
        %v628 = vlaneseq
        %v629 = vshrl.u32 %v628, 7
        %v630 = vsub.s32 0, %v629
        %v631 = vrot.slane %v625, %v630
        %v632 = vlaneseq
        %v633 = vshrl.u32 %v632, 7
        %v634 = vsub.s32 1, %v633
        %v635 = vrot.slane %v625, %v634
        %v636 = vlaneseq
        %v637 = vshrl.u32 %v636, 7
        %v638 = vsub.s32 2, %v637
        %v639 = vrot.slane %v625, %v638
        %v640 = vlaneseq
        %v641 = vshrl.u32 %v640, 7
        %v642 = vsub.s32 3, %v641
        %v643 = vrot.slane %v625, %v642
        %v644 = vlaneseq
        %v645 = vshrl.u32 %v644, 7
        %v646 = vsub.s32 4, %v645
        %v647 = vrot.slane %v625, %v646
        %v648 = vlaneseq
        %v649 = vshrl.u32 %v648, 7
        %v650 = vsub.s32 5, %v649
        %v651 = vrot.slane %v625, %v650
        %v652 = vlaneseq
        %v653 = vshrl.u32 %v652, 7
        %v654 = vsub.s32 6, %v653
        %v655 = vrot.slane %v625, %v654
        %v663 = vmul.f32 %v403, %v631
        %v664 = vmul.f32 %v404, %v635
        %v665 = vmul.f32 %v405, %v639
        %v666 = vmul.f32 %v406, %v643
        %v667 = vmul.f32 %v407, %v647
        %v668 = vmul.f32 %v408, %v651
        %v669 = vmul.f32 %v409, %v655
        %v677 = vcombine.low %v663, %v664
        %v678 = vcombine.low %v665, %v666
        %v679 = vcombine.low %v667, %v668
        %v681 = vunpack.c.l.s4 1966171168
        %v682 = vunpack.c.0.s8 %v681
        %v683 = vlaneseq
        %v684 = vshrl.u32 %v683, 7
        %v685 = vsub.s32 %v682, %v684
        %v686 = vrot.slane %v677, %v685
        %v688 = vunpack.c.l.s4 1966171168
        %v689 = vunpack.c.0.s8 %v688
        %v690 = vlaneseq
        %v691 = vshrl.u32 %v690, 7
        %v692 = vsub.s32 %v689, %v691
        %v693 = vrot.slane %v678, %v692
        %v695 = vunpack.c.l.s4 1966171168
        %v696 = vunpack.c.0.s8 %v695
        %v697 = vlaneseq
        %v698 = vshrl.u32 %v697, 7
        %v699 = vsub.s32 %v696, %v698
        %v700 = vrot.slane %v679, %v699
        %v702 = vunpack.c.l.s4 1966171168
        %v703 = vunpack.c.0.s8 %v702
        %v704 = vlaneseq
        %v705 = vshrl.u32 %v704, 7
        %v706 = vsub.s32 %v703, %v705
        %v707 = vrot.slane %v669, %v706
        %v708 = vcombine.low %v686, %v693
        %v709 = vcombine.low %v700, %v707
        %v711 = vunpack.c.l.s4 1966171168
        %v712 = vunpack.c.0.s8 %v711
        %v713 = vlaneseq
        %v714 = vshrl.u32 %v713, 7
        %v715 = vsub.s32 %v712, %v714
        %v716 = vrot.slane %v708, %v715
        %v718 = vunpack.c.l.s4 1966171168
        %v719 = vunpack.c.0.s8 %v718
        %v720 = vlaneseq
        %v721 = vshrl.u32 %v720, 7
        %v722 = vsub.s32 %v719, %v721
        %v723 = vrot.slane %v709, %v722
        %v724 = vcombine.low %v716, %v723
        %v726 = vsub.f32 %v626, %v724
        %v727 = vcombine.low %v631, %v635
        %v728 = vcombine.low %v639, %v643
        %v730 = vunpack.c.l.s4 1983009808
        %v731 = vunpack.c.0.s8 %v730
        %v732 = vlaneseq
        %v733 = vshrl.u32 %v732, 7
        %v734 = vsub.s32 %v731, %v733
        %v735 = vrot.slane %v727, %v734
        %v737 = vunpack.c.l.s4 1983009808
        %v738 = vunpack.c.0.s8 %v737
        %v739 = vlaneseq
        %v740 = vshrl.u32 %v739, 7
        %v741 = vsub.s32 %v738, %v740
        %v742 = vrot.slane %v728, %v741
        %v743 = vcombine.low %v735, %v742
        %v744 = vcombine.low %v647, %v651
        %v746 = vunpack.c.l.s4 1983009808
        %v747 = vunpack.c.0.s8 %v746
        %v748 = vlaneseq
        %v749 = vshrl.u32 %v748, 7
        %v750 = vsub.s32 %v747, %v749
        %v751 = vrot.slane %v744, %v750
        %v753 = vunpack.c.l.s4 1983009808
        %v754 = vunpack.c.0.s8 %v753
        %v755 = vlaneseq
        %v756 = vshrl.u32 %v755, 7
        %v757 = vsub.s32 %v754, %v756
        %v758 = vrot.slane %v655, %v757
        %v759 = vcombine.low %v751, %v758
        %v762 = vmul.f32 %v307, %v743
        %v763 = vmul.f32 %v308, %v759
        %v765 = vlaneseq
        %v766 = vshrl.u32 %v765, 7
        %v767 = vsub.s32 0, %v766
        %v768 = vrot.slane %v726, %v767
        %v769 = vlaneseq
        %v770 = vshrl.u32 %v769, 7
        %v771 = vsub.s32 1, %v770
        %v772 = vrot.slane %v726, %v771
        %v773 = vlaneseq
        %v774 = vshrl.u32 %v773, 7
        %v775 = vsub.s32 2, %v774
        %v776 = vrot.slane %v726, %v775
        %v777 = vlaneseq
        %v778 = vshrl.u32 %v777, 7
        %v779 = vsub.s32 3, %v778
        %v780 = vrot.slane %v726, %v779
        %v781 = vlaneseq
        %v782 = vshrl.u32 %v781, 7
        %v783 = vsub.s32 4, %v782
        %v784 = vrot.slane %v726, %v783
        %v785 = vlaneseq
        %v786 = vshrl.u32 %v785, 7
        %v787 = vsub.s32 5, %v786
        %v788 = vrot.slane %v726, %v787
        %v789 = vlaneseq
        %v790 = vshrl.u32 %v789, 7
        %v791 = vsub.s32 6, %v790
        %v792 = vrot.slane %v726, %v791
        %v793 = vcombine.low %v768, %v772
        %v794 = vcombine.low %v776, %v780
        %v796 = vunpack.c.l.s4 1983009808
        %v797 = vunpack.c.0.s8 %v796
        %v798 = vlaneseq
        %v799 = vshrl.u32 %v798, 7
        %v800 = vsub.s32 %v797, %v799
        %v801 = vrot.slane %v793, %v800
        %v803 = vunpack.c.l.s4 1983009808
        %v804 = vunpack.c.0.s8 %v803
        %v805 = vlaneseq
        %v806 = vshrl.u32 %v805, 7
        %v807 = vsub.s32 %v804, %v806
        %v808 = vrot.slane %v794, %v807
        %v809 = vcombine.low %v801, %v808
        %v810 = vcombine.low %v784, %v788
        %v812 = vunpack.c.l.s4 1983009808
        %v813 = vunpack.c.0.s8 %v812
        %v814 = vlaneseq
        %v815 = vshrl.u32 %v814, 7
        %v816 = vsub.s32 %v813, %v815
        %v817 = vrot.slane %v810, %v816
        %v819 = vunpack.c.l.s4 1983009808
        %v820 = vunpack.c.0.s8 %v819
        %v821 = vlaneseq
        %v822 = vshrl.u32 %v821, 7
        %v823 = vsub.s32 %v820, %v822
        %v824 = vrot.slane %v792, %v823
        %v825 = vcombine.low %v817, %v824
        %v828 = vadd.f32 %v762, %v809
        %v829 = vadd.f32 %v763, %v825
        %v832 = vcombine.high %v828, %v828
        %v834 = vunpack.c.l.s4 1983009808
        %v835 = vunpack.c.0.s8 %v834
        %v836 = vlaneseq
        %v837 = vshrl.u32 %v836, 7
        %v838 = vsub.s32 %v835, %v837
        %v839 = vrot.slane %v828, %v838
        %v841 = vunpack.c.l.s4 1983009808
        %v842 = vunpack.c.0.s8 %v841
        %v843 = vlaneseq
        %v844 = vshrl.u32 %v843, 7
        %v845 = vsub.s32 %v842, %v844
        %v846 = vrot.slane %v832, %v845
        %v847 = vcombine.high %v839, %v839
        %v848 = vcombine.high %v846, %v846
        %v849 = vcombine.high %v829, %v829
        %v851 = vunpack.c.l.s4 1983009808
        %v852 = vunpack.c.0.s8 %v851
        %v853 = vlaneseq
        %v854 = vshrl.u32 %v853, 7
        %v855 = vsub.s32 %v852, %v854
        %v856 = vrot.slane %v829, %v855
        %v858 = vunpack.c.l.s4 1983009808
        %v859 = vunpack.c.0.s8 %v858
        %v860 = vlaneseq
        %v861 = vshrl.u32 %v860, 7
        %v862 = vsub.s32 %v859, %v861
        %v863 = vrot.slane %v849, %v862
        %v864 = vcombine.high %v856, %v856
        %v872 = vpack.c.bf16 %v839, %v839
        %v873 = vpack.c.bf16 %v847, %v847
        %v874 = vpack.c.bf16 %v846, %v846
        %v875 = vpack.c.bf16 %v848, %v848
        %v876 = vpack.c.bf16 %v856, %v856
        %v877 = vpack.c.bf16 %v864, %v864
        %v878 = vpack.c.bf16 %v863, %v863
        %v879 = vld [vmem:[%s257] sm:$0xff]
        %v880 = vld [vmem:[%s257 + $0x8] sm:$0xff]
        %v881 = vld [vmem:[%s257 + $0x10] sm:$0xff]
        %v882 = vld [vmem:[%s257 + $0x18] sm:$0xff]
        %v883 = vld [vmem:[%s257 + $0x20] sm:$0xff]
        %v884 = vld [vmem:[%s257 + $0x28] sm:$0xff]
        %v885 = vld [vmem:[%s257 + $0x30] sm:$0xff]
        %v886 = vld [vmem:[%s257 + $0x38] sm:$0xff]
        %v887 = vld [vmem:[%s257 + $0x40] sm:$0xff]
        %v888 = vld [vmem:[%s257 + $0x48] sm:$0xff]
        %v889 = vld [vmem:[%s257 + $0x50] sm:$0xff]
        %v890 = vld [vmem:[%s257 + $0x58] sm:$0xff]
        %v891 = vld [vmem:[%s257 + $0x60] sm:$0xff]
        %v892 = vld [vmem:[%s257 + $0x68] sm:$0xff]
        %v893 = vld [vmem:[%s257 + $0x70] sm:$0xff]
        %v894 = vld [vmem:[%s257 + $0x78] sm:$0xff]
        %v895 = vld [vmem:[%s257 + $0x80] sm:$0xff]
        %v896 = vld [vmem:[%s257 + $0x88] sm:$0xff]
        %v897 = vld [vmem:[%s257 + $0x90] sm:$0xff]
        %v898 = vld [vmem:[%s257 + $0x98] sm:$0xff]
        %v899 = vld [vmem:[%s257 + $0xa0] sm:$0xff]
        %v900 = vld [vmem:[%s257 + $0xa8] sm:$0xff]
        %v901 = vld [vmem:[%s257 + $0xb0] sm:$0xff]
        %v902 = vld [vmem:[%s257 + $0xb8] sm:$0xff]
        %v903 = vld [vmem:[%s257 + $0xc0] sm:$0xff]
        %v904 = vld [vmem:[%s257 + $0xc8] sm:$0xff]
        %v905 = vld [vmem:[%s257 + $0xd0] sm:$0xff]
        %v906 = vld [vmem:[%s257 + $0xd8] sm:$0xff]
        %v907 = vld [vmem:[%s257 + $0xe0] sm:$0xff]
        %v908 = vld [vmem:[%s257 + $0xe8] sm:$0xff]
        %v909 = vld [vmem:[%s257 + $0xf0] sm:$0xff]
        %v910 = vld [vmem:[%s257 + $0xf8] sm:$0xff]
        %v911 = vld [vmem:[%s257 + $0x100] sm:$0xff]
        %v912 = vld [vmem:[%s257 + $0x108] sm:$0xff]
        %v913 = vld [vmem:[%s257 + $0x110] sm:$0xff]
        %v914 = vld [vmem:[%s257 + $0x118] sm:$0xff]
        %v915 = vld [vmem:[%s257 + $0x120] sm:$0xff]
        %v916 = vld [vmem:[%s257 + $0x128] sm:$0xff]
        %v917 = vld [vmem:[%s257 + $0x130] sm:$0xff]
        %v918 = vld [vmem:[%s257 + $0x138] sm:$0xff]
        %v919 = vld [vmem:[%s257 + $0x140] sm:$0xff]
        %v920 = vld [vmem:[%s257 + $0x148] sm:$0xff]
        %v921 = vld [vmem:[%s257 + $0x150] sm:$0xff]
        %v922 = vld [vmem:[%s257 + $0x158] sm:$0xff]
        %v923 = vld [vmem:[%s257 + $0x160] sm:$0xff]
        %v924 = vld [vmem:[%s257 + $0x168] sm:$0xff]
        %v925 = vld [vmem:[%s257 + $0x170] sm:$0xff]
        %v926 = vld [vmem:[%s257 + $0x178] sm:$0xff]
        %v927 = vld [vmem:[%s257 + $0x180] sm:$0xff]
        %v928 = vld [vmem:[%s257 + $0x188] sm:$0xff]
        %v929 = vld [vmem:[%s257 + $0x190] sm:$0xff]
        %v930 = vld [vmem:[%s257 + $0x198] sm:$0xff]
        %v931 = vld [vmem:[%s257 + $0x1a0] sm:$0xff]
        %v932 = vld [vmem:[%s257 + $0x1a8] sm:$0xff]
        %v933 = vld [vmem:[%s257 + $0x1b0] sm:$0xff]
        %v934 = vld [vmem:[%s257 + $0x1b8] sm:$0xff]
        %v935 = vld [vmem:[%s257 + $0x1c0] sm:$0xff]
        %v936 = vld [vmem:[%s257 + $0x1c8] sm:$0xff]
        %v937 = vld [vmem:[%s257 + $0x1d0] sm:$0xff]
        %v938 = vld [vmem:[%s257 + $0x1d8] sm:$0xff]
        %v939 = vld [vmem:[%s257 + $0x1e0] sm:$0xff]
        %v940 = vld [vmem:[%s257 + $0x1e8] sm:$0xff]
        %v941 = vld [vmem:[%s257 + $0x1f0] sm:$0xff]
        %v942 = vld [vmem:[%s257 + $0x1f8] sm:$0xff]
        %v943 = vld [vmem:[%s257 + $0x200] sm:$0xff]
        %v944 = vld [vmem:[%s257 + $0x208] sm:$0xff]
        %v945 = vld [vmem:[%s257 + $0x210] sm:$0xff]
        %v946 = vld [vmem:[%s257 + $0x218] sm:$0xff]
        %v947 = vld [vmem:[%s257 + $0x220] sm:$0xff]
        %v948 = vld [vmem:[%s257 + $0x228] sm:$0xff]
        %v949 = vld [vmem:[%s257 + $0x230] sm:$0xff]
        %v950 = vld [vmem:[%s257 + $0x238] sm:$0xff]
        %v951 = vld [vmem:[%s257 + $0x240] sm:$0xff]
        %v952 = vld [vmem:[%s257 + $0x248] sm:$0xff]
        %v953 = vld [vmem:[%s257 + $0x250] sm:$0xff]
        %v954 = vld [vmem:[%s257 + $0x258] sm:$0xff]
        %v955 = vld [vmem:[%s257 + $0x260] sm:$0xff]
        %v956 = vld [vmem:[%s257 + $0x268] sm:$0xff]
        %v957 = vld [vmem:[%s257 + $0x270] sm:$0xff]
        %v958 = vld [vmem:[%s257 + $0x278] sm:$0xff]
        %v959 = vld [vmem:[%s257 + $0x280] sm:$0xff]
        %v960 = vld [vmem:[%s257 + $0x288] sm:$0xff]
        %v961 = vld [vmem:[%s257 + $0x290] sm:$0xff]
        %v962 = vld [vmem:[%s257 + $0x298] sm:$0xff]
        %v963 = vld [vmem:[%s257 + $0x2a0] sm:$0xff]
        %v964 = vld [vmem:[%s257 + $0x2a8] sm:$0xff]
        %v965 = vld [vmem:[%s257 + $0x2b0] sm:$0xff]
        %v966 = vld [vmem:[%s257 + $0x2b8] sm:$0xff]
        %v967 = vld [vmem:[%s257 + $0x2c0] sm:$0xff]
        %v968 = vld [vmem:[%s257 + $0x2c8] sm:$0xff]
        %v969 = vld [vmem:[%s257 + $0x2d0] sm:$0xff]
        %v970 = vld [vmem:[%s257 + $0x2d8] sm:$0xff]
        %v971 = vld [vmem:[%s257 + $0x2e0] sm:$0xff]
        %v972 = vld [vmem:[%s257 + $0x2e8] sm:$0xff]
        %v973 = vld [vmem:[%s257 + $0x2f0] sm:$0xff]
        %v974 = vld [vmem:[%s257 + $0x2f8] sm:$0xff]
        %v975 = vld [vmem:[%s257 + $0x300] sm:$0xff]
        %v976 = vld [vmem:[%s257 + $0x308] sm:$0xff]
        %v977 = vld [vmem:[%s257 + $0x310] sm:$0xff]
        %v978 = vld [vmem:[%s257 + $0x318] sm:$0xff]
        %v979 = vld [vmem:[%s257 + $0x320] sm:$0xff]
        %v980 = vld [vmem:[%s257 + $0x328] sm:$0xff]
        %v981 = vld [vmem:[%s257 + $0x330] sm:$0xff]
        %v982 = vld [vmem:[%s257 + $0x338] sm:$0xff]
        %v983 = vld [vmem:[%s257 + $0x340] sm:$0xff]
        %v984 = vld [vmem:[%s257 + $0x348] sm:$0xff]
        %v985 = vld [vmem:[%s257 + $0x350] sm:$0xff]
        %v986 = vld [vmem:[%s257 + $0x358] sm:$0xff]
        %v987 = vld [vmem:[%s257 + $0x360] sm:$0xff]
        %v988 = vld [vmem:[%s257 + $0x368] sm:$0xff]
        %v989 = vld [vmem:[%s257 + $0x370] sm:$0xff]
        %v990 = vld [vmem:[%s257 + $0x378] sm:$0xff]
        %v991 = vld [vmem:[%s257 + $0x380] sm:$0xff]
        %v992 = vld [vmem:[%s257 + $0x388] sm:$0xff]
        %v993 = vld [vmem:[%s257 + $0x390] sm:$0xff]
        %v994 = vld [vmem:[%s257 + $0x398] sm:$0xff]
        %v995 = vld [vmem:[%s257 + $0x3a0] sm:$0xff]
        %v996 = vld [vmem:[%s257 + $0x3a8] sm:$0xff]
        %v997 = vld [vmem:[%s257 + $0x3b0] sm:$0xff]
        %v998 = vld [vmem:[%s257 + $0x3b8] sm:$0xff]
        %v999 = vld [vmem:[%s257 + $0x3c0] sm:$0xff]
        %v1000 = vld [vmem:[%s257 + $0x3c8] sm:$0xff]
        %v1001 = vld [vmem:[%s257 + $0x3d0] sm:$0xff]
        %v1002 = vld [vmem:[%s257 + $0x3d8] sm:$0xff]
        %v1003 = vld [vmem:[%s257 + $0x3e0] sm:$0xff]
        %v1004 = vld [vmem:[%s257 + $0x3e8] sm:$0xff]
        %v1005 = vld [vmem:[%s257 + $0x3f0] sm:$0xff]
        %v1006 = vld [vmem:[%s257 + $0x3f8] sm:$0xff]
        %v1007 = vld [vmem:[%s257 + $0x400] sm:$0xff]
        %v1008 = vld [vmem:[%s257 + $0x408] sm:$0xff]
        %v1009 = vld [vmem:[%s257 + $0x410] sm:$0xff]
        %v1010 = vld [vmem:[%s257 + $0x418] sm:$0xff]
        %v1011 = vld [vmem:[%s257 + $0x420] sm:$0xff]
        %v1012 = vld [vmem:[%s257 + $0x428] sm:$0xff]
        %v1013 = vld [vmem:[%s257 + $0x430] sm:$0xff]
        %v1014 = vld [vmem:[%s257 + $0x438] sm:$0xff]
        %v1015 = vld [vmem:[%s257 + $0x440] sm:$0xff]
        %v1016 = vld [vmem:[%s257 + $0x448] sm:$0xff]
        %v1017 = vld [vmem:[%s257 + $0x450] sm:$0xff]
        %v1018 = vld [vmem:[%s257 + $0x458] sm:$0xff]
        %v1019 = vld [vmem:[%s257 + $0x460] sm:$0xff]
        %v1020 = vld [vmem:[%s257 + $0x468] sm:$0xff]
        %v1021 = vld [vmem:[%s257 + $0x470] sm:$0xff]
        %v1022 = vld [vmem:[%s257 + $0x478] sm:$0xff]
        %v1023 = vld [vmem:[%s257 + $0x480] sm:$0xff]
        %v1024 = vld [vmem:[%s257 + $0x488] sm:$0xff]
        %v1025 = vld [vmem:[%s257 + $0x490] sm:$0xff]
        %v1026 = vld [vmem:[%s257 + $0x498] sm:$0xff]
        %v1027 = vld [vmem:[%s257 + $0x4a0] sm:$0xff]
        %v1028 = vld [vmem:[%s257 + $0x4a8] sm:$0xff]
        %v1029 = vld [vmem:[%s257 + $0x4b0] sm:$0xff]
        %v1030 = vld [vmem:[%s257 + $0x4b8] sm:$0xff]
        %v1031 = vld [vmem:[%s257 + $0x4c0] sm:$0xff]
        %v1032 = vld [vmem:[%s257 + $0x4c8] sm:$0xff]
        %v1033 = vld [vmem:[%s257 + $0x4d0] sm:$0xff]
        %v1034 = vld [vmem:[%s257 + $0x4d8] sm:$0xff]
        %v1035 = vld [vmem:[%s257 + $0x4e0] sm:$0xff]
        %v1036 = vld [vmem:[%s257 + $0x4e8] sm:$0xff]
        %v1037 = vld [vmem:[%s257 + $0x4f0] sm:$0xff]
        %v1038 = vld [vmem:[%s257 + $0x4f8] sm:$0xff]
        %v1039 = vld [vmem:[%s257 + $0x500] sm:$0xff]
        %v1040 = vld [vmem:[%s257 + $0x508] sm:$0xff]
        %v1041 = vld [vmem:[%s257 + $0x510] sm:$0xff]
        %v1042 = vld [vmem:[%s257 + $0x518] sm:$0xff]
        %v1043 = vld [vmem:[%s257 + $0x520] sm:$0xff]
        %v1044 = vld [vmem:[%s257 + $0x528] sm:$0xff]
        %v1045 = vld [vmem:[%s257 + $0x530] sm:$0xff]
        %v1046 = vld [vmem:[%s257 + $0x538] sm:$0xff]
        %v1047 = vld [vmem:[%s257 + $0x540] sm:$0xff]
        %v1048 = vld [vmem:[%s257 + $0x548] sm:$0xff]
        %v1049 = vld [vmem:[%s257 + $0x550] sm:$0xff]
        %v1050 = vld [vmem:[%s257 + $0x558] sm:$0xff]
        %v1051 = vld [vmem:[%s257 + $0x560] sm:$0xff]
        %v1052 = vld [vmem:[%s257 + $0x568] sm:$0xff]
        %v1053 = vld [vmem:[%s257 + $0x570] sm:$0xff]
        %v1054 = vld [vmem:[%s257 + $0x578] sm:$0xff]
        %v1055 = vld [vmem:[%s257 + $0x580] sm:$0xff]
        %v1056 = vld [vmem:[%s257 + $0x588] sm:$0xff]
        %v1057 = vld [vmem:[%s257 + $0x590] sm:$0xff]
        %v1058 = vld [vmem:[%s257 + $0x598] sm:$0xff]
        %v1059 = vld [vmem:[%s257 + $0x5a0] sm:$0xff]
        %v1060 = vld [vmem:[%s257 + $0x5a8] sm:$0xff]
        %v1061 = vld [vmem:[%s257 + $0x5b0] sm:$0xff]
        %v1062 = vld [vmem:[%s257 + $0x5b8] sm:$0xff]
        %v1063 = vld [vmem:[%s257 + $0x5c0] sm:$0xff]
        %v1064 = vld [vmem:[%s257 + $0x5c8] sm:$0xff]
        %v1065 = vld [vmem:[%s257 + $0x5d0] sm:$0xff]
        %v1066 = vld [vmem:[%s257 + $0x5d8] sm:$0xff]
        %v1067 = vld [vmem:[%s257 + $0x5e0] sm:$0xff]
        %v1068 = vld [vmem:[%s257 + $0x5e8] sm:$0xff]
        %v1069 = vld [vmem:[%s257 + $0x5f0] sm:$0xff]
        %v1070 = vld [vmem:[%s257 + $0x5f8] sm:$0xff]
        %v1071 = vld [vmem:[%s257 + $0x600] sm:$0xff]
        %v1072 = vld [vmem:[%s257 + $0x608] sm:$0xff]
        %v1073 = vld [vmem:[%s257 + $0x610] sm:$0xff]
        %v1074 = vld [vmem:[%s257 + $0x618] sm:$0xff]
        %v1075 = vld [vmem:[%s266] sm:$0xf]
        %v1077 = vlaneseq
        %v1078 = vshrl.u32 %v1077, 7
        %v1079 = vsub.s32 0, %v1078
        %v1080 = vrot.slane %v1075, %v1079
        %v1081 = vlaneseq
        %v1082 = vshrl.u32 %v1081, 7
        %v1083 = vsub.s32 1, %v1082
        %v1084 = vrot.slane %v1075, %v1083
        %v1085 = vlaneseq
        %v1086 = vshrl.u32 %v1085, 7
        %v1087 = vsub.s32 2, %v1086
        %v1088 = vrot.slane %v1075, %v1087
        %v1089 = vlaneseq
        %v1090 = vshrl.u32 %v1089, 7
        %v1091 = vsub.s32 3, %v1090
        %v1092 = vrot.slane %v1075, %v1091
        %v1293 = vunpack.c.l.b16 %v879
        %v1294 = vunpack.c.h.b16 %v879
        %v1295 = vunpack.c.l.b16 %v880
        %v1296 = vunpack.c.h.b16 %v880
        %v1297 = vunpack.c.l.b16 %v881
        %v1298 = vunpack.c.h.b16 %v881
        %v1299 = vunpack.c.l.b16 %v882
        %v1300 = vunpack.c.h.b16 %v882
        %v1301 = vunpack.c.l.b16 %v883
        %v1302 = vunpack.c.h.b16 %v883
        %v1303 = vunpack.c.l.b16 %v884
        %v1304 = vunpack.c.h.b16 %v884
        %v1305 = vunpack.c.l.b16 %v885
        %v1306 = vunpack.c.h.b16 %v885
        %v1307 = vunpack.c.l.b16 %v886
        %v1308 = vunpack.c.h.b16 %v886
        %v1309 = vunpack.c.l.b16 %v887
        %v1310 = vunpack.c.h.b16 %v887
        %v1311 = vunpack.c.l.b16 %v888
        %v1312 = vunpack.c.h.b16 %v888
        %v1313 = vunpack.c.l.b16 %v889
        %v1314 = vunpack.c.h.b16 %v889
        %v1315 = vunpack.c.l.b16 %v890
        %v1316 = vunpack.c.h.b16 %v890
        %v1317 = vunpack.c.l.b16 %v891
        %v1318 = vunpack.c.h.b16 %v891
        %v1319 = vunpack.c.l.b16 %v892
        %v1320 = vunpack.c.h.b16 %v892
        %v1321 = vunpack.c.l.b16 %v893
        %v1322 = vunpack.c.h.b16 %v893
        %v1323 = vunpack.c.l.b16 %v894
        %v1324 = vunpack.c.h.b16 %v894
        %v1325 = vunpack.c.l.b16 %v895
        %v1326 = vunpack.c.h.b16 %v895
        %v1327 = vunpack.c.l.b16 %v896
        %v1328 = vunpack.c.h.b16 %v896
        %v1329 = vunpack.c.l.b16 %v897
        %v1330 = vunpack.c.h.b16 %v897
        %v1331 = vunpack.c.l.b16 %v898
        %v1332 = vunpack.c.h.b16 %v898
        %v1333 = vunpack.c.l.b16 %v899
        %v1334 = vunpack.c.h.b16 %v899
        %v1335 = vunpack.c.l.b16 %v900
        %v1336 = vunpack.c.h.b16 %v900
        %v1337 = vunpack.c.l.b16 %v901
        %v1338 = vunpack.c.h.b16 %v901
        %v1339 = vunpack.c.l.b16 %v902
        %v1340 = vunpack.c.h.b16 %v902
        %v1341 = vunpack.c.l.b16 %v903
        %v1342 = vunpack.c.h.b16 %v903
        %v1343 = vunpack.c.l.b16 %v904
        %v1344 = vunpack.c.h.b16 %v904
        %v1345 = vunpack.c.l.b16 %v905
        %v1346 = vunpack.c.h.b16 %v905
        %v1347 = vunpack.c.l.b16 %v906
        %v1348 = vunpack.c.h.b16 %v906
        %v1349 = vunpack.c.l.b16 %v907
        %v1350 = vunpack.c.h.b16 %v907
        %v1351 = vunpack.c.l.b16 %v908
        %v1352 = vunpack.c.h.b16 %v908
        %v1353 = vunpack.c.l.b16 %v909
        %v1354 = vunpack.c.h.b16 %v909
        %v1355 = vunpack.c.l.b16 %v910
        %v1356 = vunpack.c.h.b16 %v910
        %v1357 = vunpack.c.l.b16 %v911
        %v1358 = vunpack.c.h.b16 %v911
        %v1359 = vunpack.c.l.b16 %v912
        %v1360 = vunpack.c.h.b16 %v912
        %v1361 = vunpack.c.l.b16 %v913
        %v1362 = vunpack.c.h.b16 %v913
        %v1363 = vunpack.c.l.b16 %v914
        %v1364 = vunpack.c.h.b16 %v914
        %v1365 = vunpack.c.l.b16 %v915
        %v1366 = vunpack.c.h.b16 %v915
        %v1367 = vunpack.c.l.b16 %v916
        %v1368 = vunpack.c.h.b16 %v916
        %v1369 = vunpack.c.l.b16 %v917
        %v1370 = vunpack.c.h.b16 %v917
        %v1371 = vunpack.c.l.b16 %v918
        %v1372 = vunpack.c.h.b16 %v918
        %v1373 = vunpack.c.l.b16 %v919
        %v1374 = vunpack.c.h.b16 %v919
        %v1375 = vunpack.c.l.b16 %v920
        %v1376 = vunpack.c.h.b16 %v920
        %v1377 = vunpack.c.l.b16 %v921
        %v1378 = vunpack.c.h.b16 %v921
        %v1379 = vunpack.c.l.b16 %v922
        %v1380 = vunpack.c.h.b16 %v922
        %v1381 = vunpack.c.l.b16 %v923
        %v1382 = vunpack.c.h.b16 %v923
        %v1383 = vunpack.c.l.b16 %v924
        %v1384 = vunpack.c.h.b16 %v924
        %v1385 = vunpack.c.l.b16 %v925
        %v1386 = vunpack.c.h.b16 %v925
        %v1387 = vunpack.c.l.b16 %v926
        %v1388 = vunpack.c.h.b16 %v926
        %v1389 = vunpack.c.l.b16 %v927
        %v1390 = vunpack.c.h.b16 %v927
        %v1391 = vunpack.c.l.b16 %v928
        %v1392 = vunpack.c.h.b16 %v928
        %v1393 = vunpack.c.l.b16 %v929
        %v1394 = vunpack.c.h.b16 %v929
        %v1395 = vunpack.c.l.b16 %v930
        %v1396 = vunpack.c.h.b16 %v930
        %v1397 = vunpack.c.l.b16 %v931
        %v1398 = vunpack.c.h.b16 %v931
        %v1399 = vunpack.c.l.b16 %v932
        %v1400 = vunpack.c.h.b16 %v932
        %v1401 = vunpack.c.l.b16 %v933
        %v1402 = vunpack.c.h.b16 %v933
        %v1403 = vunpack.c.l.b16 %v934
        %v1404 = vunpack.c.h.b16 %v934
        %v1405 = vunpack.c.l.b16 %v935
        %v1406 = vunpack.c.h.b16 %v935
        %v1407 = vunpack.c.l.b16 %v936
        %v1408 = vunpack.c.h.b16 %v936
        %v1409 = vunpack.c.l.b16 %v937
        %v1410 = vunpack.c.h.b16 %v937
        %v1411 = vunpack.c.l.b16 %v938
        %v1412 = vunpack.c.h.b16 %v938
        %v1413 = vunpack.c.l.b16 %v939
        %v1414 = vunpack.c.h.b16 %v939
        %v1415 = vunpack.c.l.b16 %v940
        %v1416 = vunpack.c.h.b16 %v940
        %v1417 = vunpack.c.l.b16 %v941
        %v1418 = vunpack.c.h.b16 %v941
        %v1419 = vunpack.c.l.b16 %v942
        %v1420 = vunpack.c.h.b16 %v942
        %v1421 = vunpack.c.l.b16 %v943
        %v1422 = vunpack.c.h.b16 %v943
        %v1423 = vunpack.c.l.b16 %v944
        %v1424 = vunpack.c.h.b16 %v944
        %v1425 = vunpack.c.l.b16 %v945
        %v1426 = vunpack.c.h.b16 %v945
        %v1427 = vunpack.c.l.b16 %v946
        %v1428 = vunpack.c.h.b16 %v946
        %v1429 = vunpack.c.l.b16 %v947
        %v1430 = vunpack.c.h.b16 %v947
        %v1431 = vunpack.c.l.b16 %v948
        %v1432 = vunpack.c.h.b16 %v948
        %v1433 = vunpack.c.l.b16 %v949
        %v1434 = vunpack.c.h.b16 %v949
        %v1435 = vunpack.c.l.b16 %v950
        %v1436 = vunpack.c.h.b16 %v950
        %v1437 = vunpack.c.l.b16 %v951
        %v1438 = vunpack.c.h.b16 %v951
        %v1439 = vunpack.c.l.b16 %v952
        %v1440 = vunpack.c.h.b16 %v952
        %v1441 = vunpack.c.l.b16 %v953
        %v1442 = vunpack.c.h.b16 %v953
        %v1443 = vunpack.c.l.b16 %v954
        %v1444 = vunpack.c.h.b16 %v954
        %v1445 = vunpack.c.l.b16 %v955
        %v1446 = vunpack.c.h.b16 %v955
        %v1447 = vunpack.c.l.b16 %v956
        %v1448 = vunpack.c.h.b16 %v956
        %v1449 = vunpack.c.l.b16 %v957
        %v1450 = vunpack.c.h.b16 %v957
        %v1451 = vunpack.c.l.b16 %v958
        %v1452 = vunpack.c.h.b16 %v958
        %v1453 = vunpack.c.l.b16 %v959
        %v1454 = vunpack.c.h.b16 %v959
        %v1455 = vunpack.c.l.b16 %v960
        %v1456 = vunpack.c.h.b16 %v960
        %v1457 = vunpack.c.l.b16 %v961
        %v1458 = vunpack.c.h.b16 %v961
        %v1459 = vunpack.c.l.b16 %v962
        %v1460 = vunpack.c.h.b16 %v962
        %v1461 = vunpack.c.l.b16 %v963
        %v1462 = vunpack.c.h.b16 %v963
        %v1463 = vunpack.c.l.b16 %v964
        %v1464 = vunpack.c.h.b16 %v964
        %v1465 = vunpack.c.l.b16 %v965
        %v1466 = vunpack.c.h.b16 %v965
        %v1467 = vunpack.c.l.b16 %v966
        %v1468 = vunpack.c.h.b16 %v966
        %v1469 = vunpack.c.l.b16 %v967
        %v1470 = vunpack.c.h.b16 %v967
        %v1471 = vunpack.c.l.b16 %v968
        %v1472 = vunpack.c.h.b16 %v968
        %v1473 = vunpack.c.l.b16 %v969
        %v1474 = vunpack.c.h.b16 %v969
        %v1475 = vunpack.c.l.b16 %v970
        %v1476 = vunpack.c.h.b16 %v970
        %v1477 = vunpack.c.l.b16 %v971
        %v1478 = vunpack.c.h.b16 %v971
        %v1479 = vunpack.c.l.b16 %v972
        %v1480 = vunpack.c.h.b16 %v972
        %v1481 = vunpack.c.l.b16 %v973
        %v1482 = vunpack.c.h.b16 %v973
        %v1483 = vunpack.c.l.b16 %v974
        %v1484 = vunpack.c.h.b16 %v974
        %v1485 = vunpack.c.l.b16 %v975
        %v1486 = vunpack.c.h.b16 %v975
        %v1487 = vunpack.c.l.b16 %v976
        %v1488 = vunpack.c.h.b16 %v976
        %v1489 = vunpack.c.l.b16 %v977
        %v1490 = vunpack.c.h.b16 %v977
        %v1491 = vunpack.c.l.b16 %v978
        %v1492 = vunpack.c.h.b16 %v978
        %v1493 = vunpack.c.l.b16 %v979
        %v1494 = vunpack.c.h.b16 %v979
        %v1495 = vunpack.c.l.b16 %v980
        %v1496 = vunpack.c.h.b16 %v980
        %v1497 = vunpack.c.l.b16 %v981
        %v1498 = vunpack.c.h.b16 %v981
        %v1499 = vunpack.c.l.b16 %v982
        %v1500 = vunpack.c.h.b16 %v982
        %v1501 = vunpack.c.l.b16 %v983
        %v1502 = vunpack.c.h.b16 %v983
        %v1503 = vunpack.c.l.b16 %v984
        %v1504 = vunpack.c.h.b16 %v984
        %v1505 = vunpack.c.l.b16 %v985
        %v1506 = vunpack.c.h.b16 %v985
        %v1507 = vunpack.c.l.b16 %v986
        %v1508 = vunpack.c.h.b16 %v986
        %v1509 = vunpack.c.l.b16 %v987
        %v1510 = vunpack.c.h.b16 %v987
        %v1511 = vunpack.c.l.b16 %v988
        %v1512 = vunpack.c.h.b16 %v988
        %v1513 = vunpack.c.l.b16 %v989
        %v1514 = vunpack.c.h.b16 %v989
        %v1515 = vunpack.c.l.b16 %v990
        %v1516 = vunpack.c.h.b16 %v990
        %v1517 = vunpack.c.l.b16 %v991
        %v1518 = vunpack.c.h.b16 %v991
        %v1519 = vunpack.c.l.b16 %v992
        %v1520 = vunpack.c.h.b16 %v992
        %v1521 = vunpack.c.l.b16 %v993
        %v1522 = vunpack.c.h.b16 %v993
        %v1523 = vunpack.c.l.b16 %v994
        %v1524 = vunpack.c.h.b16 %v994
        %v1525 = vunpack.c.l.b16 %v995
        %v1526 = vunpack.c.h.b16 %v995
        %v1527 = vunpack.c.l.b16 %v996
        %v1528 = vunpack.c.h.b16 %v996
        %v1529 = vunpack.c.l.b16 %v997
        %v1530 = vunpack.c.h.b16 %v997
        %v1531 = vunpack.c.l.b16 %v998
        %v1532 = vunpack.c.h.b16 %v998
        %v1533 = vunpack.c.l.b16 %v999
        %v1534 = vunpack.c.h.b16 %v999
        %v1535 = vunpack.c.l.b16 %v1000
        %v1536 = vunpack.c.h.b16 %v1000
        %v1537 = vunpack.c.l.b16 %v1001
        %v1538 = vunpack.c.h.b16 %v1001
        %v1539 = vunpack.c.l.b16 %v1002
        %v1540 = vunpack.c.h.b16 %v1002
        %v1541 = vunpack.c.l.b16 %v1003
        %v1542 = vunpack.c.h.b16 %v1003
        %v1543 = vunpack.c.l.b16 %v1004
        %v1544 = vunpack.c.h.b16 %v1004
        %v1545 = vunpack.c.l.b16 %v1005
        %v1546 = vunpack.c.h.b16 %v1005
        %v1547 = vunpack.c.l.b16 %v1006
        %v1548 = vunpack.c.h.b16 %v1006
        %v1549 = vunpack.c.l.b16 %v1007
        %v1550 = vunpack.c.h.b16 %v1007
        %v1551 = vunpack.c.l.b16 %v1008
        %v1552 = vunpack.c.h.b16 %v1008
        %v1553 = vunpack.c.l.b16 %v1009
        %v1554 = vunpack.c.h.b16 %v1009
        %v1555 = vunpack.c.l.b16 %v1010
        %v1556 = vunpack.c.h.b16 %v1010
        %v1557 = vunpack.c.l.b16 %v1011
        %v1558 = vunpack.c.h.b16 %v1011
        %v1559 = vunpack.c.l.b16 %v1012
        %v1560 = vunpack.c.h.b16 %v1012
        %v1561 = vunpack.c.l.b16 %v1013
        %v1562 = vunpack.c.h.b16 %v1013
        %v1563 = vunpack.c.l.b16 %v1014
        %v1564 = vunpack.c.h.b16 %v1014
        %v1565 = vunpack.c.l.b16 %v1015
        %v1566 = vunpack.c.h.b16 %v1015
        %v1567 = vunpack.c.l.b16 %v1016
        %v1568 = vunpack.c.h.b16 %v1016
        %v1569 = vunpack.c.l.b16 %v1017
        %v1570 = vunpack.c.h.b16 %v1017
        %v1571 = vunpack.c.l.b16 %v1018
        %v1572 = vunpack.c.h.b16 %v1018
        %v1573 = vunpack.c.l.b16 %v1019
        %v1574 = vunpack.c.h.b16 %v1019
        %v1575 = vunpack.c.l.b16 %v1020
        %v1576 = vunpack.c.h.b16 %v1020
        %v1577 = vunpack.c.l.b16 %v1021
        %v1578 = vunpack.c.h.b16 %v1021
        %v1579 = vunpack.c.l.b16 %v1022
        %v1580 = vunpack.c.h.b16 %v1022
        %v1581 = vunpack.c.l.b16 %v1023
        %v1582 = vunpack.c.h.b16 %v1023
        %v1583 = vunpack.c.l.b16 %v1024
        %v1584 = vunpack.c.h.b16 %v1024
        %v1585 = vunpack.c.l.b16 %v1025
        %v1586 = vunpack.c.h.b16 %v1025
        %v1587 = vunpack.c.l.b16 %v1026
        %v1588 = vunpack.c.h.b16 %v1026
        %v1589 = vunpack.c.l.b16 %v1027
        %v1590 = vunpack.c.h.b16 %v1027
        %v1591 = vunpack.c.l.b16 %v1028
        %v1592 = vunpack.c.h.b16 %v1028
        %v1593 = vunpack.c.l.b16 %v1029
        %v1594 = vunpack.c.h.b16 %v1029
        %v1595 = vunpack.c.l.b16 %v1030
        %v1596 = vunpack.c.h.b16 %v1030
        %v1597 = vunpack.c.l.b16 %v1031
        %v1598 = vunpack.c.h.b16 %v1031
        %v1599 = vunpack.c.l.b16 %v1032
        %v1600 = vunpack.c.h.b16 %v1032
        %v1601 = vunpack.c.l.b16 %v1033
        %v1602 = vunpack.c.h.b16 %v1033
        %v1603 = vunpack.c.l.b16 %v1034
        %v1604 = vunpack.c.h.b16 %v1034
        %v1605 = vunpack.c.l.b16 %v1035
        %v1606 = vunpack.c.h.b16 %v1035
        %v1607 = vunpack.c.l.b16 %v1036
        %v1608 = vunpack.c.h.b16 %v1036
        %v1609 = vunpack.c.l.b16 %v1037
        %v1610 = vunpack.c.h.b16 %v1037
        %v1611 = vunpack.c.l.b16 %v1038
        %v1612 = vunpack.c.h.b16 %v1038
        %v1613 = vunpack.c.l.b16 %v1039
        %v1614 = vunpack.c.h.b16 %v1039
        %v1615 = vunpack.c.l.b16 %v1040
        %v1616 = vunpack.c.h.b16 %v1040
        %v1617 = vunpack.c.l.b16 %v1041
        %v1618 = vunpack.c.h.b16 %v1041
        %v1619 = vunpack.c.l.b16 %v1042
        %v1620 = vunpack.c.h.b16 %v1042
        %v1621 = vunpack.c.l.b16 %v1043
        %v1622 = vunpack.c.h.b16 %v1043
        %v1623 = vunpack.c.l.b16 %v1044
        %v1624 = vunpack.c.h.b16 %v1044
        %v1625 = vunpack.c.l.b16 %v1045
        %v1626 = vunpack.c.h.b16 %v1045
        %v1627 = vunpack.c.l.b16 %v1046
        %v1628 = vunpack.c.h.b16 %v1046
        %v1629 = vunpack.c.l.b16 %v1047
        %v1630 = vunpack.c.h.b16 %v1047
        %v1631 = vunpack.c.l.b16 %v1048
        %v1632 = vunpack.c.h.b16 %v1048
        %v1633 = vunpack.c.l.b16 %v1049
        %v1634 = vunpack.c.h.b16 %v1049
        %v1635 = vunpack.c.l.b16 %v1050
        %v1636 = vunpack.c.h.b16 %v1050
        %v1637 = vunpack.c.l.b16 %v1051
        %v1638 = vunpack.c.h.b16 %v1051
        %v1639 = vunpack.c.l.b16 %v1052
        %v1640 = vunpack.c.h.b16 %v1052
        %v1641 = vunpack.c.l.b16 %v1053
        %v1642 = vunpack.c.h.b16 %v1053
        %v1643 = vunpack.c.l.b16 %v1054
        %v1644 = vunpack.c.h.b16 %v1054
        %v1645 = vunpack.c.l.b16 %v1055
        %v1646 = vunpack.c.h.b16 %v1055
        %v1647 = vunpack.c.l.b16 %v1056
        %v1648 = vunpack.c.h.b16 %v1056
        %v1649 = vunpack.c.l.b16 %v1057
        %v1650 = vunpack.c.h.b16 %v1057
        %v1651 = vunpack.c.l.b16 %v1058
        %v1652 = vunpack.c.h.b16 %v1058
        %v1653 = vunpack.c.l.b16 %v1059
        %v1654 = vunpack.c.h.b16 %v1059
        %v1655 = vunpack.c.l.b16 %v1060
        %v1656 = vunpack.c.h.b16 %v1060
        %v1657 = vunpack.c.l.b16 %v1061
        %v1658 = vunpack.c.h.b16 %v1061
        %v1659 = vunpack.c.l.b16 %v1062
        %v1660 = vunpack.c.h.b16 %v1062
        %v1661 = vunpack.c.l.b16 %v1063
        %v1662 = vunpack.c.h.b16 %v1063
        %v1663 = vunpack.c.l.b16 %v1064
        %v1664 = vunpack.c.h.b16 %v1064
        %v1665 = vunpack.c.l.b16 %v1065
        %v1666 = vunpack.c.h.b16 %v1065
        %v1667 = vunpack.c.l.b16 %v1066
        %v1668 = vunpack.c.h.b16 %v1066
        %v1669 = vunpack.c.l.b16 %v1067
        %v1670 = vunpack.c.h.b16 %v1067
        %v1671 = vunpack.c.l.b16 %v1068
        %v1672 = vunpack.c.h.b16 %v1068
        %v1673 = vunpack.c.l.b16 %v1069
        %v1674 = vunpack.c.h.b16 %v1069
        %v1675 = vunpack.c.l.b16 %v1070
        %v1676 = vunpack.c.h.b16 %v1070
        %v1677 = vunpack.c.l.b16 %v1071
        %v1678 = vunpack.c.h.b16 %v1071
        %v1679 = vunpack.c.l.b16 %v1072
        %v1680 = vunpack.c.h.b16 %v1072
        %v1681 = vunpack.c.l.b16 %v1073
        %v1682 = vunpack.c.h.b16 %v1073
        %v1683 = vunpack.c.l.b16 %v1074
        %v1684 = vunpack.c.h.b16 %v1074
        %v1685 = vpack.c.b16 %v1297, %v1293
        %v1686 = vpack.c.b16 %v1298, %v1294
        %v1687 = vpack.c.b16 %v1299, %v1295
        %v1688 = vpack.c.b16 %v1300, %v1296
        %v1689 = vpack.c.b16 %v1305, %v1301
        %v1690 = vpack.c.b16 %v1306, %v1302
        %v1691 = vpack.c.b16 %v1307, %v1303
        %v1692 = vpack.c.b16 %v1308, %v1304
        %v1693 = vpack.c.b16 %v1313, %v1309
        %v1694 = vpack.c.b16 %v1314, %v1310
        %v1695 = vpack.c.b16 %v1315, %v1311
        %v1696 = vpack.c.b16 %v1316, %v1312
        %v1697 = vpack.c.b16 %v1321, %v1317
        %v1698 = vpack.c.b16 %v1322, %v1318
        %v1699 = vpack.c.b16 %v1323, %v1319
        %v1700 = vpack.c.b16 %v1324, %v1320
        %v1701 = vpack.c.b16 %v1329, %v1325
        %v1702 = vpack.c.b16 %v1330, %v1326
        %v1703 = vpack.c.b16 %v1331, %v1327
        %v1704 = vpack.c.b16 %v1332, %v1328
        %v1705 = vpack.c.b16 %v1337, %v1333
        %v1706 = vpack.c.b16 %v1338, %v1334
        %v1707 = vpack.c.b16 %v1339, %v1335
        %v1708 = vpack.c.b16 %v1340, %v1336
        %v1709 = vpack.c.b16 %v1345, %v1341
        %v1710 = vpack.c.b16 %v1346, %v1342
        %v1711 = vpack.c.b16 %v1347, %v1343
        %v1712 = vpack.c.b16 %v1348, %v1344
        %v1713 = vpack.c.b16 %v1353, %v1349
        %v1714 = vpack.c.b16 %v1354, %v1350
        %v1715 = vpack.c.b16 %v1355, %v1351
        %v1716 = vpack.c.b16 %v1356, %v1352
        %v1717 = vpack.c.b16 %v1361, %v1357
        %v1718 = vpack.c.b16 %v1362, %v1358
        %v1719 = vpack.c.b16 %v1363, %v1359
        %v1720 = vpack.c.b16 %v1364, %v1360
        %v1721 = vpack.c.b16 %v1369, %v1365
        %v1722 = vpack.c.b16 %v1370, %v1366
        %v1723 = vpack.c.b16 %v1371, %v1367
        %v1724 = vpack.c.b16 %v1372, %v1368
        %v1725 = vpack.c.b16 %v1377, %v1373
        %v1726 = vpack.c.b16 %v1378, %v1374
        %v1727 = vpack.c.b16 %v1379, %v1375
        %v1728 = vpack.c.b16 %v1380, %v1376
        %v1729 = vpack.c.b16 %v1385, %v1381
        %v1730 = vpack.c.b16 %v1386, %v1382
        %v1731 = vpack.c.b16 %v1387, %v1383
        %v1732 = vpack.c.b16 %v1388, %v1384
        %v1733 = vpack.c.b16 %v1393, %v1389
        %v1734 = vpack.c.b16 %v1394, %v1390
        %v1735 = vpack.c.b16 %v1395, %v1391
        %v1736 = vpack.c.b16 %v1396, %v1392
        %v1737 = vpack.c.b16 %v1401, %v1397
        %v1738 = vpack.c.b16 %v1402, %v1398
        %v1739 = vpack.c.b16 %v1403, %v1399
        %v1740 = vpack.c.b16 %v1404, %v1400
        %v1741 = vpack.c.b16 %v1409, %v1405
        %v1742 = vpack.c.b16 %v1410, %v1406
        %v1743 = vpack.c.b16 %v1411, %v1407
        %v1744 = vpack.c.b16 %v1412, %v1408
        %v1745 = vpack.c.b16 %v1417, %v1413
        %v1746 = vpack.c.b16 %v1418, %v1414
        %v1747 = vpack.c.b16 %v1419, %v1415
        %v1748 = vpack.c.b16 %v1420, %v1416
        %v1749 = vpack.c.b16 %v1425, %v1421
        %v1750 = vpack.c.b16 %v1426, %v1422
        %v1751 = vpack.c.b16 %v1427, %v1423
        %v1752 = vpack.c.b16 %v1428, %v1424
        %v1753 = vpack.c.b16 %v1433, %v1429
        %v1754 = vpack.c.b16 %v1434, %v1430
        %v1755 = vpack.c.b16 %v1435, %v1431
        %v1756 = vpack.c.b16 %v1436, %v1432
        %v1757 = vpack.c.b16 %v1441, %v1437
        %v1758 = vpack.c.b16 %v1442, %v1438
        %v1759 = vpack.c.b16 %v1443, %v1439
        %v1760 = vpack.c.b16 %v1444, %v1440
        %v1761 = vpack.c.b16 %v1449, %v1445
        %v1762 = vpack.c.b16 %v1450, %v1446
        %v1763 = vpack.c.b16 %v1451, %v1447
        %v1764 = vpack.c.b16 %v1452, %v1448
        %v1765 = vpack.c.b16 %v1457, %v1453
        %v1766 = vpack.c.b16 %v1458, %v1454
        %v1767 = vpack.c.b16 %v1459, %v1455
        %v1768 = vpack.c.b16 %v1460, %v1456
        %v1769 = vpack.c.b16 %v1465, %v1461
        %v1770 = vpack.c.b16 %v1466, %v1462
        %v1771 = vpack.c.b16 %v1467, %v1463
        %v1772 = vpack.c.b16 %v1468, %v1464
        %v1773 = vpack.c.b16 %v1473, %v1469
        %v1774 = vpack.c.b16 %v1474, %v1470
        %v1775 = vpack.c.b16 %v1475, %v1471
        %v1776 = vpack.c.b16 %v1476, %v1472
        %v1777 = vpack.c.b16 %v1481, %v1477
        %v1778 = vpack.c.b16 %v1482, %v1478
        %v1779 = vpack.c.b16 %v1483, %v1479
        %v1780 = vpack.c.b16 %v1484, %v1480
        %v1781 = vpack.c.b16 %v1489, %v1485
        %v1782 = vpack.c.b16 %v1490, %v1486
        %v1783 = vpack.c.b16 %v1491, %v1487
        %v1784 = vpack.c.b16 %v1492, %v1488
        %v1785 = vpack.c.b16 %v1497, %v1493
        %v1786 = vpack.c.b16 %v1498, %v1494
        %v1787 = vpack.c.b16 %v1499, %v1495
        %v1788 = vpack.c.b16 %v1500, %v1496
        %v1789 = vpack.c.b16 %v1505, %v1501
        %v1790 = vpack.c.b16 %v1506, %v1502
        %v1791 = vpack.c.b16 %v1507, %v1503
        %v1792 = vpack.c.b16 %v1508, %v1504
        %v1793 = vpack.c.b16 %v1513, %v1509
        %v1794 = vpack.c.b16 %v1514, %v1510
        %v1795 = vpack.c.b16 %v1515, %v1511
        %v1796 = vpack.c.b16 %v1516, %v1512
        %v1797 = vpack.c.b16 %v1521, %v1517
        %v1798 = vpack.c.b16 %v1522, %v1518
        %v1799 = vpack.c.b16 %v1523, %v1519
        %v1800 = vpack.c.b16 %v1524, %v1520
        %v1801 = vpack.c.b16 %v1529, %v1525
        %v1802 = vpack.c.b16 %v1530, %v1526
        %v1803 = vpack.c.b16 %v1531, %v1527
        %v1804 = vpack.c.b16 %v1532, %v1528
        %v1805 = vpack.c.b16 %v1537, %v1533
        %v1806 = vpack.c.b16 %v1538, %v1534
        %v1807 = vpack.c.b16 %v1539, %v1535
        %v1808 = vpack.c.b16 %v1540, %v1536
        %v1809 = vpack.c.b16 %v1545, %v1541
        %v1810 = vpack.c.b16 %v1546, %v1542
        %v1811 = vpack.c.b16 %v1547, %v1543
        %v1812 = vpack.c.b16 %v1548, %v1544
        %v1813 = vpack.c.b16 %v1553, %v1549
        %v1814 = vpack.c.b16 %v1554, %v1550
        %v1815 = vpack.c.b16 %v1555, %v1551
        %v1816 = vpack.c.b16 %v1556, %v1552
        %v1817 = vpack.c.b16 %v1561, %v1557
        %v1818 = vpack.c.b16 %v1562, %v1558
        %v1819 = vpack.c.b16 %v1563, %v1559
        %v1820 = vpack.c.b16 %v1564, %v1560
        %v1821 = vpack.c.b16 %v1569, %v1565
        %v1822 = vpack.c.b16 %v1570, %v1566
        %v1823 = vpack.c.b16 %v1571, %v1567
        %v1824 = vpack.c.b16 %v1572, %v1568
        %v1825 = vpack.c.b16 %v1577, %v1573
        %v1826 = vpack.c.b16 %v1578, %v1574
        %v1827 = vpack.c.b16 %v1579, %v1575
        %v1828 = vpack.c.b16 %v1580, %v1576
        %v1829 = vpack.c.b16 %v1585, %v1581
        %v1830 = vpack.c.b16 %v1586, %v1582
        %v1831 = vpack.c.b16 %v1587, %v1583
        %v1832 = vpack.c.b16 %v1588, %v1584
        %v1833 = vpack.c.b16 %v1593, %v1589
        %v1834 = vpack.c.b16 %v1594, %v1590
        %v1835 = vpack.c.b16 %v1595, %v1591
        %v1836 = vpack.c.b16 %v1596, %v1592
        %v1837 = vpack.c.b16 %v1601, %v1597
        %v1838 = vpack.c.b16 %v1602, %v1598
        %v1839 = vpack.c.b16 %v1603, %v1599
        %v1840 = vpack.c.b16 %v1604, %v1600
        %v1841 = vpack.c.b16 %v1609, %v1605
        %v1842 = vpack.c.b16 %v1610, %v1606
        %v1843 = vpack.c.b16 %v1611, %v1607
        %v1844 = vpack.c.b16 %v1612, %v1608
        %v1845 = vpack.c.b16 %v1617, %v1613
        %v1846 = vpack.c.b16 %v1618, %v1614
        %v1847 = vpack.c.b16 %v1619, %v1615
        %v1848 = vpack.c.b16 %v1620, %v1616
        %v1849 = vpack.c.b16 %v1625, %v1621
        %v1850 = vpack.c.b16 %v1626, %v1622
        %v1851 = vpack.c.b16 %v1627, %v1623
        %v1852 = vpack.c.b16 %v1628, %v1624
        %v1853 = vpack.c.b16 %v1633, %v1629
        %v1854 = vpack.c.b16 %v1634, %v1630
        %v1855 = vpack.c.b16 %v1635, %v1631
        %v1856 = vpack.c.b16 %v1636, %v1632
        %v1857 = vpack.c.b16 %v1641, %v1637
        %v1858 = vpack.c.b16 %v1642, %v1638
        %v1859 = vpack.c.b16 %v1643, %v1639
        %v1860 = vpack.c.b16 %v1644, %v1640
        %v1861 = vpack.c.b16 %v1649, %v1645
        %v1862 = vpack.c.b16 %v1650, %v1646
        %v1863 = vpack.c.b16 %v1651, %v1647
        %v1864 = vpack.c.b16 %v1652, %v1648
        %v1865 = vpack.c.b16 %v1657, %v1653
        %v1866 = vpack.c.b16 %v1658, %v1654
        %v1867 = vpack.c.b16 %v1659, %v1655
        %v1868 = vpack.c.b16 %v1660, %v1656
        %v1869 = vpack.c.b16 %v1665, %v1661
        %v1870 = vpack.c.b16 %v1666, %v1662
        %v1871 = vpack.c.b16 %v1667, %v1663
        %v1872 = vpack.c.b16 %v1668, %v1664
        %v1873 = vpack.c.b16 %v1673, %v1669
        %v1874 = vpack.c.b16 %v1674, %v1670
        %v1875 = vpack.c.b16 %v1675, %v1671
        %v1876 = vpack.c.b16 %v1676, %v1672
        %v1877 = vpack.c.b16 %v1681, %v1677
        %v1878 = vpack.c.b16 %v1682, %v1678
        %v1879 = vpack.c.b16 %v1683, %v1679
        %v1880 = vpack.c.b16 %v1684, %v1680
        %vm2077 = vcmask 130048
        %v2079 = vsel %vm2077, %v878, 0
        %2081 = vmatprep.subr.bf16.mxu0 %v1714
        %2082 = vmatpush1.bf16.msra.mxu0 %v1713
        %2083 = vmatprep.subr.bf16.mxu0 %v1710
        %2084 = vmatpush1.bf16.msra.mxu0 %v1709
        %2085 = vmatprep.subr.bf16.mxu0 %v1706
        %2086 = vmatpush1.bf16.msra.mxu0 %v1705
        %2087 = vmatprep.subr.bf16.mxu0 %v1702
        %2088 = vmatpush1.bf16.msra.mxu0 %v1701
        %2089 = vmatprep.subr.bf16.mxu0 %v1698
        %2090 = vmatpush1.bf16.msra.mxu0 %v1697
        %2091 = vmatprep.subr.bf16.mxu0 %v1694
        %2092 = vmatpush1.bf16.msra.mxu0 %v1693
        %2093 = vmatprep.subr.bf16.mxu0 %v1690
        %2094 = vmatpush1.bf16.msra.mxu0 %v1689
        %2095 = vmatprep.subr.bf16.mxu0 %v1686
        %2096 = vmatpush1.bf16.msra.mxu0 %v1685
        %2097 = vmatprep.subr.bf16.mxu0 %v1746
        %2098 = vmatpush2.bf16.msra.mxu0 %v1745
        %2099 = vmatprep.subr.bf16.mxu0 %v1742
        %2100 = vmatpush2.bf16.msra.mxu0 %v1741
        %2101 = vmatprep.subr.bf16.mxu0 %v1738
        %2102 = vmatpush2.bf16.msra.mxu0 %v1737
        %2103 = vmatprep.subr.bf16.mxu0 %v1734
        %2104 = vmatpush2.bf16.msra.mxu0 %v1733
        %2105 = vmatprep.subr.bf16.mxu0 %v1730
        %2106 = vmatpush2.bf16.msra.mxu0 %v1729
        %2107 = vmatprep.subr.bf16.mxu0 %v1726
        %2108 = vmatpush2.bf16.msra.mxu0 %v1725
        %2109 = vmatprep.subr.bf16.mxu0 %v1722
        %2110 = vmatpush2.bf16.msra.mxu0 %v1721
        %2111 = vmatprep.subr.bf16.mxu0 %v1718
        %2112 = vmatpush2.bf16.msra.mxu0 %v1717
        %2113 = vmatprep.mubr.bf16.mxu0 %v873
        %2114 = vmatmul.mubr.bf16.gmra.mxu0 %v872
        %v2115 = vpop.f32.mrf.mxu0
        %v2116 = vadd.f32 %v1080, %v2115
        %v2117 = vpop.f32.mrf.mxu0
        %v2118 = vadd.f32 %v1084, %v2117
        %v2119 = vpop.f32.mrf.mxu0
        %v2120 = vpop.f32.mrf.mxu0
        %2121 = vdwg.mxu0
        %2122 = vmatprep.subr.bf16.mxu0 %v1778
        %2123 = vmatpush1.bf16.msra.mxu0 %v1777
        %2124 = vmatprep.subr.bf16.mxu0 %v1774
        %2125 = vmatpush1.bf16.msra.mxu0 %v1773
        %2126 = vmatprep.subr.bf16.mxu0 %v1770
        %2127 = vmatpush1.bf16.msra.mxu0 %v1769
        %2128 = vmatprep.subr.bf16.mxu0 %v1766
        %2129 = vmatpush1.bf16.msra.mxu0 %v1765
        %2130 = vmatprep.subr.bf16.mxu0 %v1762
        %2131 = vmatpush1.bf16.msra.mxu0 %v1761
        %2132 = vmatprep.subr.bf16.mxu0 %v1758
        %2133 = vmatpush1.bf16.msra.mxu0 %v1757
        %2134 = vmatprep.subr.bf16.mxu0 %v1754
        %2135 = vmatpush1.bf16.msra.mxu0 %v1753
        %2136 = vmatprep.subr.bf16.mxu0 %v1750
        %2137 = vmatpush1.bf16.msra.mxu0 %v1749
        %2138 = vmatprep.subr.bf16.mxu0 %v1810
        %2139 = vmatpush2.bf16.msra.mxu0 %v1809
        %2140 = vmatprep.subr.bf16.mxu0 %v1806
        %2141 = vmatpush2.bf16.msra.mxu0 %v1805
        %2142 = vmatprep.subr.bf16.mxu0 %v1802
        %2143 = vmatpush2.bf16.msra.mxu0 %v1801
        %2144 = vmatprep.subr.bf16.mxu0 %v1798
        %2145 = vmatpush2.bf16.msra.mxu0 %v1797
        %2146 = vmatprep.subr.bf16.mxu0 %v1794
        %2147 = vmatpush2.bf16.msra.mxu0 %v1793
        %2148 = vmatprep.subr.bf16.mxu0 %v1790
        %2149 = vmatpush2.bf16.msra.mxu0 %v1789
        %2150 = vmatprep.subr.bf16.mxu0 %v1786
        %2151 = vmatpush2.bf16.msra.mxu0 %v1785
        %2152 = vmatprep.subr.bf16.mxu0 %v1782
        %2153 = vmatpush2.bf16.msra.mxu0 %v1781
        %2154 = vmatprep.mubr.bf16.mxu0 %v875
        %2155 = vmatmul.mubr.bf16.gmra.mxu0 %v874
        %v2156 = vpop.f32.mrf.mxu0
        %v2157 = vadd.f32 %v2116, %v2156
        %v2158 = vpop.f32.mrf.mxu0
        %v2159 = vadd.f32 %v2118, %v2158
        %v2160 = vpop.f32.mrf.mxu0
        %v2161 = vpop.f32.mrf.mxu0
        %2162 = vdwg.mxu0
        %2163 = vmatprep.subr.bf16.mxu0 %v1842
        %2164 = vmatpush1.bf16.msra.mxu0 %v1841
        %2165 = vmatprep.subr.bf16.mxu0 %v1838
        %2166 = vmatpush1.bf16.msra.mxu0 %v1837
        %2167 = vmatprep.subr.bf16.mxu0 %v1834
        %2168 = vmatpush1.bf16.msra.mxu0 %v1833
        %2169 = vmatprep.subr.bf16.mxu0 %v1830
        %2170 = vmatpush1.bf16.msra.mxu0 %v1829
        %2171 = vmatprep.subr.bf16.mxu0 %v1826
        %2172 = vmatpush1.bf16.msra.mxu0 %v1825
        %2173 = vmatprep.subr.bf16.mxu0 %v1822
        %2174 = vmatpush1.bf16.msra.mxu0 %v1821
        %2175 = vmatprep.subr.bf16.mxu0 %v1818
        %2176 = vmatpush1.bf16.msra.mxu0 %v1817
        %2177 = vmatprep.subr.bf16.mxu0 %v1814
        %2178 = vmatpush1.bf16.msra.mxu0 %v1813
        %2179 = vmatprep.subr.bf16.mxu0 %v1874
        %2180 = vmatpush2.bf16.msra.mxu0 %v1873
        %2181 = vmatprep.subr.bf16.mxu0 %v1870
        %2182 = vmatpush2.bf16.msra.mxu0 %v1869
        %2183 = vmatprep.subr.bf16.mxu0 %v1866
        %2184 = vmatpush2.bf16.msra.mxu0 %v1865
        %2185 = vmatprep.subr.bf16.mxu0 %v1862
        %2186 = vmatpush2.bf16.msra.mxu0 %v1861
        %2187 = vmatprep.subr.bf16.mxu0 %v1858
        %2188 = vmatpush2.bf16.msra.mxu0 %v1857
        %2189 = vmatprep.subr.bf16.mxu0 %v1854
        %2190 = vmatpush2.bf16.msra.mxu0 %v1853
        %2191 = vmatprep.subr.bf16.mxu0 %v1850
        %2192 = vmatpush2.bf16.msra.mxu0 %v1849
        %2193 = vmatprep.subr.bf16.mxu0 %v1846
        %2194 = vmatpush2.bf16.msra.mxu0 %v1845
        %2195 = vmatprep.mubr.bf16.mxu0 %v877
        %2196 = vmatmul.mubr.bf16.gmra.mxu0 %v876
        %v2197 = vpop.f32.mrf.mxu0
        %v2198 = vadd.f32 %v2157, %v2197
        %v2199 = vpop.f32.mrf.mxu0
        %v2200 = vadd.f32 %v2159, %v2199
        %v2201 = vpop.f32.mrf.mxu0
        %v2202 = vpop.f32.mrf.mxu0
        %2203 = vdwg.mxu0
        %2204 = vmatprep.subr.bf16.mxu0 0
        %2205 = vmatpush1.bf16.msra.mxu0 0
        %2206 = vmatprep.subr.bf16.mxu0 0
        %2207 = vmatpush1.bf16.msra.mxu0 0
        %2208 = vmatprep.subr.bf16.mxu0 0
        %2209 = vmatpush1.bf16.msra.mxu0 0
        %2210 = vmatprep.subr.bf16.mxu0 0
        %2211 = vmatpush1.bf16.msra.mxu0 0
        %2212 = vmatprep.subr.bf16.mxu0 0
        %2213 = vmatpush1.bf16.msra.mxu0 0
        %2214 = vmatprep.subr.bf16.mxu0 0
        %2215 = vmatpush1.bf16.msra.mxu0 0
        %2216 = vmatprep.subr.bf16.mxu0 0
        %2217 = vmatpush1.bf16.msra.mxu0 0
        %2218 = vmatprep.subr.bf16.mxu0 %v1878
        %2219 = vmatpush1.bf16.msra.mxu0 %v1877
        %2220 = vmatprep.subr.bf16.mxu0 0
        %2221 = vmatpush2.bf16.msra.mxu0 0
        %2222 = vmatprep.subr.bf16.mxu0 0
        %2223 = vmatpush2.bf16.msra.mxu0 0
        %2224 = vmatprep.subr.bf16.mxu0 0
        %2225 = vmatpush2.bf16.msra.mxu0 0
        %2226 = vmatprep.subr.bf16.mxu0 0
        %2227 = vmatpush2.bf16.msra.mxu0 0
        %2228 = vmatprep.subr.bf16.mxu0 0
        %2229 = vmatpush2.bf16.msra.mxu0 0
        %2230 = vmatprep.subr.bf16.mxu0 0
        %2231 = vmatpush2.bf16.msra.mxu0 0
        %2232 = vmatprep.subr.bf16.mxu0 0
        %2233 = vmatpush2.bf16.msra.mxu0 0
        %2234 = vmatprep.subr.bf16.mxu0 0
        %2235 = vmatpush2.bf16.msra.mxu0 0
        %2236 = vmatprep.mubr.bf16.mxu0 0
        %2237 = vmatmul.mubr.bf16.gmra.mxu0 %v2079
        %v2238 = vpop.f32.mrf.mxu0
        %v2239 = vadd.f32 %v2198, %v2238
        %v2240 = vpop.f32.mrf.mxu0
        %v2241 = vadd.f32 %v2200, %v2240
        %v2242 = vpop.f32.mrf.mxu0
        %v2243 = vpop.f32.mrf.mxu0
        %2244 = vdwg.mxu0
        %2245 = vmatprep.subr.bf16.mxu0 %v1716
        %2246 = vmatpush1.bf16.msra.mxu0 %v1715
        %2247 = vmatprep.subr.bf16.mxu0 %v1712
        %2248 = vmatpush1.bf16.msra.mxu0 %v1711
        %2249 = vmatprep.subr.bf16.mxu0 %v1708
        %2250 = vmatpush1.bf16.msra.mxu0 %v1707
        %2251 = vmatprep.subr.bf16.mxu0 %v1704
        %2252 = vmatpush1.bf16.msra.mxu0 %v1703
        %2253 = vmatprep.subr.bf16.mxu0 %v1700
        %2254 = vmatpush1.bf16.msra.mxu0 %v1699
        %2255 = vmatprep.subr.bf16.mxu0 %v1696
        %2256 = vmatpush1.bf16.msra.mxu0 %v1695
        %2257 = vmatprep.subr.bf16.mxu0 %v1692
        %2258 = vmatpush1.bf16.msra.mxu0 %v1691
        %2259 = vmatprep.subr.bf16.mxu0 %v1688
        %2260 = vmatpush1.bf16.msra.mxu0 %v1687
        %2261 = vmatprep.subr.bf16.mxu0 %v1748
        %2262 = vmatpush2.bf16.msra.mxu0 %v1747
        %2263 = vmatprep.subr.bf16.mxu0 %v1744
        %2264 = vmatpush2.bf16.msra.mxu0 %v1743
        %2265 = vmatprep.subr.bf16.mxu0 %v1740
        %2266 = vmatpush2.bf16.msra.mxu0 %v1739
        %2267 = vmatprep.subr.bf16.mxu0 %v1736
        %2268 = vmatpush2.bf16.msra.mxu0 %v1735
        %2269 = vmatprep.subr.bf16.mxu0 %v1732
        %2270 = vmatpush2.bf16.msra.mxu0 %v1731
        %2271 = vmatprep.subr.bf16.mxu0 %v1728
        %2272 = vmatpush2.bf16.msra.mxu0 %v1727
        %2273 = vmatprep.subr.bf16.mxu0 %v1724
        %2274 = vmatpush2.bf16.msra.mxu0 %v1723
        %2275 = vmatprep.subr.bf16.mxu0 %v1720
        %2276 = vmatpush2.bf16.msra.mxu0 %v1719
        %2277 = vmatprep.mubr.bf16.mxu0 %v873
        %2278 = vmatmul.mubr.bf16.gmra.mxu0 %v872
        %v2279 = vpop.f32.mrf.mxu0
        %v2280 = vadd.f32 %v1088, %v2279
        %v2281 = vpop.f32.mrf.mxu0
        %v2282 = vadd.f32 %v1092, %v2281
        %v2283 = vpop.f32.mrf.mxu0
        %v2284 = vpop.f32.mrf.mxu0
        %2285 = vdwg.mxu0
        %2286 = vmatprep.subr.bf16.mxu0 %v1780
        %2287 = vmatpush1.bf16.msra.mxu0 %v1779
        %2288 = vmatprep.subr.bf16.mxu0 %v1776
        %2289 = vmatpush1.bf16.msra.mxu0 %v1775
        %2290 = vmatprep.subr.bf16.mxu0 %v1772
        %2291 = vmatpush1.bf16.msra.mxu0 %v1771
        %2292 = vmatprep.subr.bf16.mxu0 %v1768
        %2293 = vmatpush1.bf16.msra.mxu0 %v1767
        %2294 = vmatprep.subr.bf16.mxu0 %v1764
        %2295 = vmatpush1.bf16.msra.mxu0 %v1763
        %2296 = vmatprep.subr.bf16.mxu0 %v1760
        %2297 = vmatpush1.bf16.msra.mxu0 %v1759
        %2298 = vmatprep.subr.bf16.mxu0 %v1756
        %2299 = vmatpush1.bf16.msra.mxu0 %v1755
        %2300 = vmatprep.subr.bf16.mxu0 %v1752
        %2301 = vmatpush1.bf16.msra.mxu0 %v1751
        %2302 = vmatprep.subr.bf16.mxu0 %v1812
        %2303 = vmatpush2.bf16.msra.mxu0 %v1811
        %2304 = vmatprep.subr.bf16.mxu0 %v1808
        %2305 = vmatpush2.bf16.msra.mxu0 %v1807
        %2306 = vmatprep.subr.bf16.mxu0 %v1804
        %2307 = vmatpush2.bf16.msra.mxu0 %v1803
        %2308 = vmatprep.subr.bf16.mxu0 %v1800
        %2309 = vmatpush2.bf16.msra.mxu0 %v1799
        %2310 = vmatprep.subr.bf16.mxu0 %v1796
        %2311 = vmatpush2.bf16.msra.mxu0 %v1795
        %2312 = vmatprep.subr.bf16.mxu0 %v1792
        %2313 = vmatpush2.bf16.msra.mxu0 %v1791
        %2314 = vmatprep.subr.bf16.mxu0 %v1788
        %2315 = vmatpush2.bf16.msra.mxu0 %v1787
        %2316 = vmatprep.subr.bf16.mxu0 %v1784
        %2317 = vmatpush2.bf16.msra.mxu0 %v1783
        %2318 = vmatprep.mubr.bf16.mxu0 %v875
        %2319 = vmatmul.mubr.bf16.gmra.mxu0 %v874
        %v2320 = vpop.f32.mrf.mxu0
        %v2321 = vadd.f32 %v2280, %v2320
        %v2322 = vpop.f32.mrf.mxu0
        %v2323 = vadd.f32 %v2282, %v2322
        %v2324 = vpop.f32.mrf.mxu0
        %v2325 = vpop.f32.mrf.mxu0
        %2326 = vdwg.mxu0
        %2327 = vmatprep.subr.bf16.mxu0 %v1844
        %2328 = vmatpush1.bf16.msra.mxu0 %v1843
        %2329 = vmatprep.subr.bf16.mxu0 %v1840
        %2330 = vmatpush1.bf16.msra.mxu0 %v1839
        %2331 = vmatprep.subr.bf16.mxu0 %v1836
        %2332 = vmatpush1.bf16.msra.mxu0 %v1835
        %2333 = vmatprep.subr.bf16.mxu0 %v1832
        %2334 = vmatpush1.bf16.msra.mxu0 %v1831
        %2335 = vmatprep.subr.bf16.mxu0 %v1828
        %2336 = vmatpush1.bf16.msra.mxu0 %v1827
        %2337 = vmatprep.subr.bf16.mxu0 %v1824
        %2338 = vmatpush1.bf16.msra.mxu0 %v1823
        %2339 = vmatprep.subr.bf16.mxu0 %v1820
        %2340 = vmatpush1.bf16.msra.mxu0 %v1819
        %2341 = vmatprep.subr.bf16.mxu0 %v1816
        %2342 = vmatpush1.bf16.msra.mxu0 %v1815
        %2343 = vmatprep.subr.bf16.mxu0 %v1876
        %2344 = vmatpush2.bf16.msra.mxu0 %v1875
        %2345 = vmatprep.subr.bf16.mxu0 %v1872
        %2346 = vmatpush2.bf16.msra.mxu0 %v1871
        %2347 = vmatprep.subr.bf16.mxu0 %v1868
        %2348 = vmatpush2.bf16.msra.mxu0 %v1867
        %2349 = vmatprep.subr.bf16.mxu0 %v1864
        %2350 = vmatpush2.bf16.msra.mxu0 %v1863
        %2351 = vmatprep.subr.bf16.mxu0 %v1860
        %2352 = vmatpush2.bf16.msra.mxu0 %v1859
        %2353 = vmatprep.subr.bf16.mxu0 %v1856
        %2354 = vmatpush2.bf16.msra.mxu0 %v1855
        %2355 = vmatprep.subr.bf16.mxu0 %v1852
        %2356 = vmatpush2.bf16.msra.mxu0 %v1851
        %2357 = vmatprep.subr.bf16.mxu0 %v1848
        %2358 = vmatpush2.bf16.msra.mxu0 %v1847
        %2359 = vmatprep.mubr.bf16.mxu0 %v877
        %2360 = vmatmul.mubr.bf16.gmra.mxu0 %v876
        %v2361 = vpop.f32.mrf.mxu0
        %v2362 = vadd.f32 %v2321, %v2361
        %v2363 = vpop.f32.mrf.mxu0
        %v2364 = vadd.f32 %v2323, %v2363
        %v2365 = vpop.f32.mrf.mxu0
        %v2366 = vpop.f32.mrf.mxu0
        %2367 = vdwg.mxu0
        %2368 = vmatprep.subr.bf16.mxu0 0
        %2369 = vmatpush1.bf16.msra.mxu0 0
        %2370 = vmatprep.subr.bf16.mxu0 0
        %2371 = vmatpush1.bf16.msra.mxu0 0
        %2372 = vmatprep.subr.bf16.mxu0 0
        %2373 = vmatpush1.bf16.msra.mxu0 0
        %2374 = vmatprep.subr.bf16.mxu0 0
        %2375 = vmatpush1.bf16.msra.mxu0 0
        %2376 = vmatprep.subr.bf16.mxu0 0
        %2377 = vmatpush1.bf16.msra.mxu0 0
        %2378 = vmatprep.subr.bf16.mxu0 0
        %2379 = vmatpush1.bf16.msra.mxu0 0
        %2380 = vmatprep.subr.bf16.mxu0 0
        %2381 = vmatpush1.bf16.msra.mxu0 0
        %2382 = vmatprep.subr.bf16.mxu0 %v1880
        %2383 = vmatpush1.bf16.msra.mxu0 %v1879
        %2384 = vmatprep.subr.bf16.mxu0 0
        %2385 = vmatpush2.bf16.msra.mxu0 0
        %2386 = vmatprep.subr.bf16.mxu0 0
        %2387 = vmatpush2.bf16.msra.mxu0 0
        %2388 = vmatprep.subr.bf16.mxu0 0
        %2389 = vmatpush2.bf16.msra.mxu0 0
        %2390 = vmatprep.subr.bf16.mxu0 0
        %2391 = vmatpush2.bf16.msra.mxu0 0
        %2392 = vmatprep.subr.bf16.mxu0 0
        %2393 = vmatpush2.bf16.msra.mxu0 0
        %2394 = vmatprep.subr.bf16.mxu0 0
        %2395 = vmatpush2.bf16.msra.mxu0 0
        %2396 = vmatprep.subr.bf16.mxu0 0
        %2397 = vmatpush2.bf16.msra.mxu0 0
        %2398 = vmatprep.subr.bf16.mxu0 0
        %2399 = vmatpush2.bf16.msra.mxu0 0
        %2400 = vmatprep.mubr.bf16.mxu0 0
        %2401 = vmatmul.mubr.bf16.gmra.mxu0 %v2079
        %v2402 = vpop.f32.mrf.mxu0
        %v2403 = vadd.f32 %v2362, %v2402
        %v2404 = vpop.f32.mrf.mxu0
        %v2405 = vadd.f32 %v2364, %v2404
        %v2406 = vpop.f32.mrf.mxu0
        %v2407 = vpop.f32.mrf.mxu0
        %2408 = vdwg.mxu0
        %v2409 = vmax.f32 %v2239, 0.0
        %v2410 = vmax.f32 %v2241, 0.0
        %v2411 = vmax.f32 %v2403, 0.0
        %v2412 = vmax.f32 %v2405, 0.0
        %v2417 = vcombine.low %v2409, %v2410
        %v2418 = vcombine.low %v2411, %v2412
        %v2420 = vunpack.c.l.s4 1983009808
        %v2421 = vunpack.c.0.s8 %v2420
        %v2422 = vlaneseq
        %v2423 = vshrl.u32 %v2422, 7
        %v2424 = vsub.s32 %v2421, %v2423
        %v2425 = vrot.slane %v2417, %v2424
        %v2427 = vunpack.c.l.s4 1983009808
        %v2428 = vunpack.c.0.s8 %v2427
        %v2429 = vlaneseq
        %v2430 = vshrl.u32 %v2429, 7
        %v2431 = vsub.s32 %v2428, %v2430
        %v2432 = vrot.slane %v2418, %v2431
        %v2433 = vcombine.low %v2425, %v2432
        %2435 = vst [vmem:[%s304] sm:$0xff] %v2433
        %s2436 = smul.u32 4, %s18
        %p2437 = scmp.lt.s32.totalorder %s2436, 7
        %s2438 = scalar_select %p2437, %s2436, 7
        %s2439 = smul.addr %s2438, 2
        %s2440 = scalar_lea.vmem %s5, %s2439
        // Predicated region
        $region57: #{fcc_forward.3} parent=39 // pred_check
          %p2441 = pneg %p151
        $region58: #{fcc_forward.3} parent=39 // pred_check_branch
          %2443 = sbr.rel (%p2441) target = $region60
        $region59: #{fcc_forward.3} parent=39 // pred_region
          %s2444 = smul.u32 4, %s18
        $region60: #{fcc_forward.3} parent=39 // pred_fallthru
          _
      $region40: #{fcc_forward.3} parent=5 // pred_fallthru
        _
      %p2445 = scmp.le.s32.totalorder 2, %s13
      // Predicated region
      $region61: #{fcc_forward.3} parent=5 // pred_check
        %p2446 = pneg %p2445
      $region62: #{fcc_forward.3} parent=5 // pred_check_branch
        %2448 = sbr.rel (%p2446) target = $region64
      $region63: #{fcc_forward.3} parent=5 // pred_region
        %s2449 = ssub.s32 %s13, 2
        // Predicated region
        $region65: #{fcc_forward.3} parent=63 // pred_check
          %p2450 = pneg %p157
        $region66: #{fcc_forward.3} parent=63 // pred_check_branch
          %2452 = sbr.rel (%p2450) target = $region68
        $region67: #{fcc_forward.3} parent=63 // pred_region
          %s2453 = smul.u32 4, %s19
          %p2454 = scmp.lt.s32.totalorder %s2453, 7
          %s2455 = scalar_select %p2454, %s2453, 7
          %s2456 = smul.addr %s2455, 2
          %s2457 = scalar_lea.vmem %s5, %s2456
        $region68: #{fcc_forward.3} parent=63 // pred_fallthru
          _
      $region64: #{fcc_forward.3} parent=5 // pred_fallthru
        _
    $region6: #{fcc_forward.3} parent=1 // loop_footer
      %s17 = sadd.s32 1, %s13
    $region7: #{fcc_forward.3} parent=1 // loop_footer_branch
      %12 = sbr.rel target = $region3
    $region8: #{fcc_forward.3} parent=1 // loop_exit
      _
    %2458 = vsyncpa [#allocation3], 1
    %s2459 = scalar_lea.sflag [#allocation3], 1
    %2460 = vsyncpa %s2459, 1
    %2461 = vsyncpa [#allocation5], 1

// kernel: fcc_forward.4
$region0: #{fcc_forward.4}
  #allocation0 [shape = 'u32[]', space=smem, size = 0x4, offset = 0x4, fixed_abs, tag = 'smem constant byte address 0x4 - core index']
  #allocation1 [shape = 'u32[144,128]{1,0:T(1,128)}', space=vmem, size = 0x12000, scoped, tag = 'internal scratch']
  #allocation2 [shape = 'bf16[2,1024]{1,0:T(2,128)(2,1)}', space=vmem, size = 0x1000, scoped, tag = 'scratch operand']
  %s0 = inlined_call_operand.vmem [shape: f32[2,1024], index: 0, kind: input, shape index: {}]
  %s1 = inlined_call_operand.hbm [shape: f32[6,1,1024], index: 1, kind: input, shape index: {}]
  %s2 = inlined_call_operand.hbm [shape: f32[6,1,1024], index: 2, kind: input, shape index: {}]
  %s3 = inlined_call_operand.hbm [shape: bf16[6,1024,1024], index: 3, kind: input, shape index: {}]
  %s4 = inlined_call_operand.hbm [shape: f32[6,1,1024], index: 4, kind: input, shape index: {}]
  %s5 = inlined_call_operand.vmem [shape: f32[2,1024], index: 5, kind: output, shape index: {}]
  %s6 = sld [smem:[#allocation0]]
  $region77: #{fcc_forward.4} parent=0
    _
  %s8 = ssub.s32 1, %s6
  %s9 = scalar_select 0, %s8, %s6
  $region1: #{fcc_forward.4} parent=0
    #allocation3 [shape = 'u8[8192]{0}', space=vmem, size = 0x2000, scoped, tag = 'input window, operand 1']
    #allocation4 [shape = 's32[2]{0}', space=sflag, size = 0x8, scoped, tag = 'scoped memory for fcc_forward.4']
    #allocation5 [shape = 'u8[8192]{0}', space=vmem, size = 0x2000, scoped, tag = 'input window, operand 2']
    #allocation6 [shape = 's32[2]{0}', space=sflag, size = 0x8, scoped, tag = 'scoped memory for fcc_forward.4']
    #allocation7 [shape = 'u8[2097152]{0}', space=vmem, size = 0x200000, scoped, tag = 'input window, operand 3']
    #allocation8 [shape = 'u8[4096]{0}', space=vmem, size = 0x1000, scoped, tag = 'input window, operand 4']
    #allocation9 [shape = 's32[2]{0}', space=sflag, size = 0x8, scoped, tag = 'scoped memory for fcc_forward.4']
    %10 = vsyncpa [#allocation4], 0
    %s11 = scalar_lea.sflag [#allocation4], 1
    %12 = vsyncpa %s11, 0
    %13 = vsyncpa [#allocation6], 0
    %s14 = scalar_lea.sflag [#allocation6], 1
    %15 = vsyncpa %s14, 0
    %16 = vsyncpa [#allocation9], 0
    %s17 = scalar_lea.sflag [#allocation9], 1
    %18 = vsyncpa %s17, 0
    loop: start=0, step=1, limit=14
    $region2: #{fcc_forward.4} parent=1 // loop_pre_header
      _
    $region3: #{fcc_forward.4} parent=1 // loop_header
      %s20 = sphi 0, %s24
      %p21 = scmp.ge.s32.totalorder %s20, 14
      %s27 = sphi 0, %s39
      %s28 = sphi 0, %s35
      %s29 = sphi 0, %s27
      %s30 = sphi 0, %s28
      %s31 = sphi 0, %s29
      %s32 = sphi 0, %s30
      %s40 = sphi 0, %s40
      %s42 = sphi 0, %s40
      %s43 = sphi 0, %s42
      %s57 = sphi 0, %s43
      %s63 = sphi 0, %s65
      %s66 = sphi 0, %s63
      %s67 = sphi 0, %s66
      %s83 = sphi 0, %s67
      %s89 = sphi 0, %s91
      %s92 = sphi 0, %s89
      %s93 = sphi 0, %s92
      %s109 = sphi 0, %s93
      %s117 = sphi 0, %s119
      %s120 = sphi 0, %s117
      %s121 = sphi 0, %s120
      %s137 = sphi 0, %s121
      %s145 = sphi 0, %s147
      %s148 = sphi 0, %s145
      %s149 = sphi 0, %s148
      %s165 = sphi 0, %s149
      %s169 = sphi 0, %s169
      %s171 = sphi 0, %s169
      %s172 = sphi 0, %s171
      %s186 = sphi 0, %s172
    $region4: #{fcc_forward.4} parent=1 // loop_header_branch
      %23 = sbr.rel (%p21) target = $region8
    $region5: #{fcc_forward.4} parent=1 // loop_body
      %s25 = ssub.s32 %s20, 1
      %s26 = ssub.s32 %s20, 2
      %s33 = sadd.s32 1, %s28
      %p34 = scmp.ge.s32.totalorder %s33, 2
      %s35 = scalar_select %p34, 0, %s33
      %s36 = sadd.s32 1, %s27
      %s37 = scalar_select %p34, %s36, %s27
      %p38 = scmp.ge.s32.totalorder %s37, 6
      %s39 = scalar_select %p38, 0, %s37
      %s41 = sadd.s32 %s40, 1
      %p44 = scmp.eq.s32.totalorder %s20, 11
      %p45 = scmp.ne.s32.totalorder %s40, %s42
      %p46 = scmp.eq.s32.totalorder %s20, 0
      %p47 = por %p45, %p46
      %p48 = scmp.ne.s32.totalorder %s40, %s42
      %p49 = scmp.eq.s32.totalorder %s25, 11
      %p50 = por %p48, %p49
      %p51 = scmp.ne.s32.totalorder %s42, %s43
      %p52 = scmp.eq.s32.totalorder %s25, 0
      %p53 = por %p51, %p52
      %p54 = scmp.ne.s32.totalorder %s42, %s43
      %p55 = scmp.eq.s32.totalorder %s26, 11
      %p56 = por %p54, %p55
      %p58 = scmp.ne.s32.totalorder %s43, %s57
      %p59 = scmp.eq.s32.totalorder %s26, 0
      %p60 = por %p58, %p59
      %s61 = ssub.s32 %s27, %s39
      %p62 = scmp.eq.s32.totalorder %s61, 0
      %s64 = sadd.s32 %s63, 1
      %s65 = scalar_select %p62, %s63, %s64
      %p68 = pneg %p62
      %p69 = scmp.eq.s32.totalorder %s20, 11
      %p70 = por %p68, %p69
      %p71 = scmp.ne.s32.totalorder %s63, %s66
      %p72 = scmp.eq.s32.totalorder %s20, 0
      %p73 = por %p71, %p72
      %p74 = scmp.ne.s32.totalorder %s63, %s66
      %p75 = scmp.eq.s32.totalorder %s25, 11
      %p76 = por %p74, %p75
      %p77 = scmp.ne.s32.totalorder %s66, %s67
      %p78 = scmp.eq.s32.totalorder %s25, 0
      %p79 = por %p77, %p78
      %p80 = scmp.ne.s32.totalorder %s66, %s67
      %p81 = scmp.eq.s32.totalorder %s26, 11
      %p82 = por %p80, %p81
      %p84 = scmp.ne.s32.totalorder %s67, %s83
      %p85 = scmp.eq.s32.totalorder %s26, 0
      %p86 = por %p84, %p85
      %s87 = ssub.s32 %s27, %s39
      %p88 = scmp.eq.s32.totalorder %s87, 0
      %s90 = sadd.s32 %s89, 1
      %s91 = scalar_select %p88, %s89, %s90
      %p94 = pneg %p88
      %p95 = scmp.eq.s32.totalorder %s20, 11
      %p96 = por %p94, %p95
      %p97 = scmp.ne.s32.totalorder %s89, %s92
      %p98 = scmp.eq.s32.totalorder %s20, 0
      %p99 = por %p97, %p98
      %p100 = scmp.ne.s32.totalorder %s89, %s92
      %p101 = scmp.eq.s32.totalorder %s25, 11
      %p102 = por %p100, %p101
      %p103 = scmp.ne.s32.totalorder %s92, %s93
      %p104 = scmp.eq.s32.totalorder %s25, 0
      %p105 = por %p103, %p104
      %p106 = scmp.ne.s32.totalorder %s92, %s93
      %p107 = scmp.eq.s32.totalorder %s26, 11
      %p108 = por %p106, %p107
      %p110 = scmp.ne.s32.totalorder %s93, %s109
      %p111 = scmp.eq.s32.totalorder %s26, 0
      %p112 = por %p110, %p111
      %s113 = ssub.s32 %s27, %s39
      %s114 = ssub.s32 %s28, %s35
      %s115 = sor.u32 %s113, %s114
      %p116 = scmp.eq.s32.totalorder %s115, 0
      %s118 = sadd.s32 %s117, 1
      %s119 = scalar_select %p116, %s117, %s118
      %p122 = pneg %p116
      %p123 = scmp.eq.s32.totalorder %s20, 11
      %p124 = por %p122, %p123
      %p125 = scmp.ne.s32.totalorder %s117, %s120
      %p126 = scmp.eq.s32.totalorder %s20, 0
      %p127 = por %p125, %p126
      %p128 = scmp.ne.s32.totalorder %s117, %s120
      %p129 = scmp.eq.s32.totalorder %s25, 11
      %p130 = por %p128, %p129
      %p131 = scmp.ne.s32.totalorder %s120, %s121
      %p132 = scmp.eq.s32.totalorder %s25, 0
      %p133 = por %p131, %p132
      %p134 = scmp.ne.s32.totalorder %s120, %s121
      %p135 = scmp.eq.s32.totalorder %s26, 11
      %p136 = por %p134, %p135
      %p138 = scmp.ne.s32.totalorder %s121, %s137
      %p139 = scmp.eq.s32.totalorder %s26, 0
      %p140 = por %p138, %p139
      %s141 = ssub.s32 %s27, %s39
      %s142 = ssub.s32 %s28, %s35
      %s143 = sor.u32 %s141, %s142
      %p144 = scmp.eq.s32.totalorder %s143, 0
      %s146 = sadd.s32 %s145, 1
      %s147 = scalar_select %p144, %s145, %s146
      %p150 = pneg %p144
      %p151 = scmp.eq.s32.totalorder %s20, 11
      %p152 = por %p150, %p151
      %p153 = scmp.ne.s32.totalorder %s145, %s148
      %p154 = scmp.eq.s32.totalorder %s20, 0
      %p155 = por %p153, %p154
      %p156 = scmp.ne.s32.totalorder %s145, %s148
      %p157 = scmp.eq.s32.totalorder %s25, 11
      %p158 = por %p156, %p157
      %p159 = scmp.ne.s32.totalorder %s148, %s149
      %p160 = scmp.eq.s32.totalorder %s25, 0
      %p161 = por %p159, %p160
      %p162 = scmp.ne.s32.totalorder %s148, %s149
      %p163 = scmp.eq.s32.totalorder %s26, 11
      %p164 = por %p162, %p163
      %p166 = scmp.ne.s32.totalorder %s149, %s165
      %p167 = scmp.eq.s32.totalorder %s26, 0
      %p168 = por %p166, %p167
      %s170 = sadd.s32 %s169, 1
      %p173 = scmp.eq.s32.totalorder %s20, 11
      %p174 = scmp.ne.s32.totalorder %s169, %s171
      %p175 = scmp.eq.s32.totalorder %s20, 0
      %p176 = por %p174, %p175
      %p177 = scmp.ne.s32.totalorder %s169, %s171
      %p178 = scmp.eq.s32.totalorder %s25, 11
      %p179 = por %p177, %p178
      %p180 = scmp.ne.s32.totalorder %s171, %s172
      %p181 = scmp.eq.s32.totalorder %s25, 0
      %p182 = por %p180, %p181
      %p183 = scmp.ne.s32.totalorder %s171, %s172
      %p184 = scmp.eq.s32.totalorder %s26, 11
      %p185 = por %p183, %p184
      %p187 = scmp.ne.s32.totalorder %s172, %s186
      %p188 = scmp.eq.s32.totalorder %s26, 0
      %p189 = por %p187, %p188
      %p190 = scmp.le.s32.totalorder 1, %s20
      %p191 = scmp.lt.s32.totalorder %s20, 13
      %p192 = pnand %p190, %p191
      %p193 = pneg %p192
      // Predicated region
      $region9: #{fcc_forward.4} parent=5 // pred_check
        _
      $region10: #{fcc_forward.4} parent=5 // pred_check_branch
        %195 = sbr.rel (%p192) target = $region12
      $region11: #{fcc_forward.4} parent=5 // pred_region
        %s196 = ssub.s32 %s20, 1
        // Predicated region
        $region13: #{fcc_forward.4} parent=11 // pred_check
          %p197 = pneg %p53
        $region14: #{fcc_forward.4} parent=11 // pred_check_branch
          %199 = sbr.rel (%p197) target = $region16
        $region15: #{fcc_forward.4} parent=11 // pred_region
          _
        $region16: #{fcc_forward.4} parent=11 // pred_fallthru
          _
      $region12: #{fcc_forward.4} parent=5 // pred_fallthru
        _
      %p200 = scmp.lt.s32.totalorder %s20, 12
      // Predicated region
      $region17: #{fcc_forward.4} parent=5 // pred_check
        %p201 = pneg %p200
      $region18: #{fcc_forward.4} parent=5 // pred_check_branch
        %203 = sbr.rel (%p201) target = $region20
      $region19: #{fcc_forward.4} parent=5 // pred_region
        // Predicated region
        $region21: #{fcc_forward.4} parent=19 // pred_check
          %p204 = pneg %p73
        $region22: #{fcc_forward.4} parent=19 // pred_check_branch
          %206 = sbr.rel (%p204) target = $region24
        $region23: #{fcc_forward.4} parent=19 // pred_region
          %s207 = sand.u32 %s63, 1
          %s208 = scalar_lea.sflag [#allocation4], %s207
          %s209 = sand.u32 %s63, 1
          %s210 = smul.addr %s209, 8
          %s211 = scalar_lea.vmem [#allocation3], %s210
          %s213 = ssub.s32 128, 128
          %214 = vsyncadd %s208, %s213
          %s215 = smul.addr %s27, 8
          %s216 = smul.addr %s215, 16
          %s217 = scalar_lea.hbm %s1, %s216
          %s219 = sshll.u32 %s211, 4
          %s220 = int_to_ptr.vmem [resolvable:$true] %s219
          %222 = dma.hbm_to_vmem [thread:$0]  %s217, 128, %s220, %s208
        $region24: #{fcc_forward.4} parent=19 // pred_fallthru
          _
        // Predicated region
        $region25: #{fcc_forward.4} parent=19 // pred_check
          %p223 = pneg %p99
        $region26: #{fcc_forward.4} parent=19 // pred_check_branch
          %225 = sbr.rel (%p223) target = $region28
        $region27: #{fcc_forward.4} parent=19 // pred_region
          %s226 = sand.u32 %s20, 1
          %s227 = scalar_lea.sflag [#allocation6], %s226
          %s228 = sand.u32 %s89, 1
          %s229 = smul.addr %s228, 8
          %s230 = scalar_lea.vmem [#allocation5], %s229
          %s232 = ssub.s32 128, 128
          %233 = vsyncadd %s227, %s232
          %s234 = smul.addr %s27, 8
          %s235 = smul.addr %s234, 16
          %s236 = scalar_lea.hbm %s2, %s235
          %s238 = sshll.u32 %s230, 4
          %s239 = int_to_ptr.vmem [resolvable:$true] %s238
          %241 = dma.hbm_to_vmem [thread:$0]  %s236, 128, %s239, %s227
        $region28: #{fcc_forward.4} parent=19 // pred_fallthru
          _
        // Predicated region
        $region29: #{fcc_forward.4} parent=19 // pred_check
          %p242 = pneg %p127
        $region30: #{fcc_forward.4} parent=19 // pred_check_branch
          %244 = sbr.rel (%p242) target = $region32
        $region31: #{fcc_forward.4} parent=19 // pred_region
          %s245 = sand.u32 %s20, 1
          %s246 = scalar_lea.sflag [#allocation6], %s245
          %s247 = sand.u32 %s117, 1
          %s248 = smul.addr %s247, 2048
          %s249 = scalar_lea.vmem [#allocation7], %s248
          %s250 = smul.u32 4, %s28
          %s252 = ssub.s32 32768, 32768
          %253 = vsyncadd %s246, %s252
          %s254 = smul.addr %s27, 1024
          %s255 = sadd.s32 %s250, %s254
          %s256 = smul.addr %s255, 64
          %s257 = scalar_lea.hbm %s3, %s256
          %s258 = sshll.u32 %s249, 4
          %s259 = int_to_ptr.vmem [resolvable:$true] %s258
          %264 = dma.hbm_to_vmem [thread:$0]  %s257, 32768, %s259, %s246, 512, 256, 16
        $region32: #{fcc_forward.4} parent=19 // pred_fallthru
          _
        // Predicated region
        $region33: #{fcc_forward.4} parent=19 // pred_check
          %p265 = pneg %p155
        $region34: #{fcc_forward.4} parent=19 // pred_check_branch
          %267 = sbr.rel (%p265) target = $region36
        $region35: #{fcc_forward.4} parent=19 // pred_region
          %s268 = sand.u32 %s145, 1
          %s269 = scalar_lea.sflag [#allocation9], %s268
          %s270 = sand.u32 %s145, 1
          %s271 = smul.addr %s270, 4
          %s272 = scalar_lea.vmem [#allocation8], %s271
          %s273 = smul.u32 4, %s28
          %s275 = ssub.s32 64, 64
          %276 = vsyncadd %s269, %s275
          %s277 = smul.addr %s27, 8
          %s278 = sadd.s32 %s273, %s277
          %s279 = smul.addr %s278, 16
          %s280 = scalar_lea.hbm %s4, %s279
          %s282 = sshll.u32 %s272, 4
          %s283 = int_to_ptr.vmem [resolvable:$true] %s282
          %285 = dma.hbm_to_vmem [thread:$0]  %s280, 64, %s283, %s269
        $region36: #{fcc_forward.4} parent=19 // pred_fallthru
          _
      $region20: #{fcc_forward.4} parent=5 // pred_fallthru
        _
      %p286 = scmp.le.s32.totalorder 1, %s20
      %p287 = scmp.lt.s32.totalorder %s20, 13
      %p288 = pnand %p286, %p287
      %p289 = pneg %p288
      // Predicated region
      $region37: #{fcc_forward.4} parent=5 // pred_check
        _
      $region38: #{fcc_forward.4} parent=5 // pred_check_branch
        %291 = sbr.rel (%p288) target = $region40
      $region39: #{fcc_forward.4} parent=5 // pred_region
        %s292 = ssub.s32 %s20, 1
        %s293 = sand.u32 %s66, 1
        %s294 = scalar_lea.sflag [#allocation4], %s293
        %s295 = sand.u32 %s66, 1
        %s296 = smul.addr %s295, 8
        %s297 = scalar_lea.vmem [#allocation3], %s296
        // Predicated region
        $region41: #{fcc_forward.4} parent=39 // pred_check
          %p298 = pneg %p79
        $region42: #{fcc_forward.4} parent=39 // pred_check_branch
          %300 = sbr.rel (%p298) target = $region44
        $region43: #{fcc_forward.4} parent=39 // pred_region
          %301 = dma.done %s294, 128
        $region44: #{fcc_forward.4} parent=39 // pred_fallthru
          _
        %s302 = sand.u32 %s25, 1
        %s303 = scalar_lea.sflag [#allocation6], %s302
        %s304 = sand.u32 %s92, 1
        %s305 = smul.addr %s304, 8
        %s306 = scalar_lea.vmem [#allocation5], %s305
        // Predicated region
        $region45: #{fcc_forward.4} parent=39 // pred_check
          %p307 = pneg %p105
        $region46: #{fcc_forward.4} parent=39 // pred_check_branch
          %309 = sbr.rel (%p307) target = $region48
        $region47: #{fcc_forward.4} parent=39 // pred_region
          %310 = dma.done %s303, 128
        $region48: #{fcc_forward.4} parent=39 // pred_fallthru
          _
        %s311 = sand.u32 %s25, 1
        %s312 = scalar_lea.sflag [#allocation6], %s311
        %s313 = sand.u32 %s120, 1
        %s314 = smul.addr %s313, 2048
        %s315 = scalar_lea.vmem [#allocation7], %s314
        // Predicated region
        $region49: #{fcc_forward.4} parent=39 // pred_check
          %p316 = pneg %p133
        $region50: #{fcc_forward.4} parent=39 // pred_check_branch
          %318 = sbr.rel (%p316) target = $region52
        $region51: #{fcc_forward.4} parent=39 // pred_region
          %319 = dma.done %s312, 32768
        $region52: #{fcc_forward.4} parent=39 // pred_fallthru
          _
        %s320 = sand.u32 %s148, 1
        %s321 = scalar_lea.sflag [#allocation9], %s320
        %s322 = sand.u32 %s148, 1
        %s323 = smul.addr %s322, 4
        %s324 = scalar_lea.vmem [#allocation8], %s323
        // Predicated region
        $region53: #{fcc_forward.4} parent=39 // pred_check
          %p325 = pneg %p161
        $region54: #{fcc_forward.4} parent=39 // pred_check_branch
          %327 = sbr.rel (%p325) target = $region56
        $region55: #{fcc_forward.4} parent=39 // pred_region
          %328 = dma.done %s321, 64
        $region56: #{fcc_forward.4} parent=39 // pred_fallthru
          _
        %p329 = pneg %p53
        %p330 = pneg %p50
        %s331 = sand.u32 %s66, 1
        %s332 = scalar_lea.sflag [#allocation4], %s331
        %s333 = sand.u32 %s66, 1
        %s334 = smul.addr %s333, 8
        %s335 = scalar_lea.vmem [#allocation3], %s334
        %p336 = pneg %p79
        %p337 = pneg %p76
        %s338 = sand.u32 %s25, 1
        %s339 = scalar_lea.sflag [#allocation6], %s338
        %s340 = sand.u32 %s92, 1
        %s341 = smul.addr %s340, 8
        %s342 = scalar_lea.vmem [#allocation5], %s341
        %p343 = pneg %p105
        %p344 = pneg %p102
        %s345 = sand.u32 %s25, 1
        %s346 = scalar_lea.sflag [#allocation6], %s345
        %s347 = sand.u32 %s120, 1
        %s348 = smul.addr %s347, 2048
        %s349 = scalar_lea.vmem [#allocation7], %s348
        %p350 = pneg %p133
        %p351 = pneg %p130
        %s352 = sand.u32 %s148, 1
        %s353 = scalar_lea.sflag [#allocation9], %s352
        %s354 = sand.u32 %s148, 1
        %s355 = smul.addr %s354, 4
        %s356 = scalar_lea.vmem [#allocation8], %s355
        %p357 = pneg %p161
        %p358 = pneg %p158
        %p359 = pneg %p182
        %p360 = pneg %p179
        %s361 = smul.u32 4, %s30
        %s362 = smul.u32 4, %s30
        %p363 = scmp.eq.s32.totalorder %s29, 0
        %p364 = scmp.eq.s32.totalorder %s30, 0
        %p365 = pnand %p363, %p364
        %p366 = pneg %p365
        // Predicated region
        $region57: #{fcc_forward.4} parent=39 // pred_check
          _
        $region58: #{fcc_forward.4} parent=39 // pred_check_branch
          %368 = sbr.rel (%p365) target = $region60
        $region59: #{fcc_forward.4} parent=39 // pred_region
          %v369 = vld [vmem:[%s0] sm:$0xff]
          %v370 = vld [vmem:[%s0 + $0x8] sm:$0xff]
          %371 = vst [vmem:[%s5] sm:$0xff] %v369
          %372 = vst [vmem:[%s5 + $0x8] sm:$0xff] %v370
        $region60: #{fcc_forward.4} parent=39 // pred_fallthru
          _
        // Predicated region
        $region61: #{fcc_forward.4} parent=39 // pred_check
          %p373 = pneg %p364
        $region62: #{fcc_forward.4} parent=39 // pred_check_branch
          %375 = sbr.rel (%p373) target = $region64
        $region63: #{fcc_forward.4} parent=39 // pred_region
          %v376 = vld [vmem:[%s5] sm:$0xff]
          %v377 = vld [vmem:[%s5 + $0x8] sm:$0xff]
          %v380 = vcombine.high %v376, %v376
          %v382 = vunpack.c.l.s4 1983009808
          %v383 = vunpack.c.0.s8 %v382
          %v384 = vlaneseq
          %v385 = vshrl.u32 %v384, 7
          %v386 = vsub.s32 %v383, %v385
          %v387 = vrot.slane %v376, %v386
          %v389 = vunpack.c.l.s4 1983009808
          %v390 = vunpack.c.0.s8 %v389
          %v391 = vlaneseq
          %v392 = vshrl.u32 %v391, 7
          %v393 = vsub.s32 %v390, %v392
          %v394 = vrot.slane %v380, %v393
          %v395 = vcombine.high %v387, %v387
          %v396 = vcombine.high %v394, %v394
          %v397 = vcombine.high %v377, %v377
          %v399 = vunpack.c.l.s4 1983009808
          %v400 = vunpack.c.0.s8 %v399
          %v401 = vlaneseq
          %v402 = vshrl.u32 %v401, 7
          %v403 = vsub.s32 %v400, %v402
          %v404 = vrot.slane %v377, %v403
          %v406 = vunpack.c.l.s4 1983009808
          %v407 = vunpack.c.0.s8 %v406
          %v408 = vlaneseq
          %v409 = vshrl.u32 %v408, 7
          %v410 = vsub.s32 %v407, %v409
          %v411 = vrot.slane %v397, %v410
          %v412 = vcombine.high %v404, %v404
          %v413 = vcombine.high %v411, %v411
          %vm422 = vcmask 1041408
          %v423 = vsel %vm422, %v387, 0.0
          %v424 = vrot.slane %v423, 4
          %v425 = vadd.f32 %v423, %v424
          %v426 = vrot.slane %v425, 2
          %v427 = vadd.f32 %v425, %v426
          %v428 = vrot.slane %v427, 1
          %v429 = vadd.f32 %v427, %v428
          %v430 = vsel %vm422, %v395, 0.0
          %v431 = vrot.slane %v430, 4
          %v432 = vadd.f32 %v430, %v431
          %v433 = vrot.slane %v432, 2
          %v434 = vadd.f32 %v432, %v433
          %v435 = vrot.slane %v434, 1
          %v436 = vadd.f32 %v434, %v435
          %v437 = vsel %vm422, %v394, 0.0
          %v438 = vrot.slane %v437, 4
          %v439 = vadd.f32 %v437, %v438
          %v440 = vrot.slane %v439, 2
          %v441 = vadd.f32 %v439, %v440
          %v442 = vrot.slane %v441, 1
          %v443 = vadd.f32 %v441, %v442
          %v444 = vsel %vm422, %v396, 0.0
          %v445 = vrot.slane %v444, 4
          %v446 = vadd.f32 %v444, %v445
          %v447 = vrot.slane %v446, 2
          %v448 = vadd.f32 %v446, %v447
          %v449 = vrot.slane %v448, 1
          %v450 = vadd.f32 %v448, %v449
          %v451 = vsel %vm422, %v404, 0.0
          %v452 = vrot.slane %v451, 4
          %v453 = vadd.f32 %v451, %v452
          %v454 = vrot.slane %v453, 2
          %v455 = vadd.f32 %v453, %v454
          %v456 = vrot.slane %v455, 1
          %v457 = vadd.f32 %v455, %v456
          %v458 = vsel %vm422, %v412, 0.0
          %v459 = vrot.slane %v458, 4
          %v460 = vadd.f32 %v458, %v459
          %v461 = vrot.slane %v460, 2
          %v462 = vadd.f32 %v460, %v461
          %v463 = vrot.slane %v462, 1
          %v464 = vadd.f32 %v462, %v463
          %v465 = vsel %vm422, %v411, 0.0
          %v466 = vrot.slane %v465, 4
          %v467 = vadd.f32 %v465, %v466
          %v468 = vrot.slane %v467, 2
          %v469 = vadd.f32 %v467, %v468
          %v470 = vrot.slane %v469, 1
          %v471 = vadd.f32 %v469, %v470
          %v472 = vsel %vm422, %v413, 0.0
          %v473 = vrot.slane %v472, 4
          %v474 = vadd.f32 %v472, %v473
          %v475 = vrot.slane %v474, 2
          %v476 = vadd.f32 %v474, %v475
          %v477 = vrot.slane %v476, 1
          %v478 = vadd.f32 %v476, %v477
          %v479 = vrcp.pop 2.0
          %v480 = vmul.f32 %v429, %v479
          %v481 = vmul.f32 %v436, %v479
          %v482 = vmul.f32 %v443, %v479
          %v483 = vmul.f32 %v450, %v479
          %v484 = vmul.f32 %v457, %v479
          %v485 = vmul.f32 %v464, %v479
          %v486 = vmul.f32 %v471, %v479
          %v487 = vmul.f32 %v478, %v479
          %v496 = vcombine.low %v480, %v481
          %v497 = vcombine.low %v482, %v483
          %v499 = vunpack.c.l.s4 1983009808
          %v500 = vunpack.c.0.s8 %v499
          %v501 = vlaneseq
          %v502 = vshrl.u32 %v501, 7
          %v503 = vsub.s32 %v500, %v502
          %v504 = vrot.slane %v496, %v503
          %v506 = vunpack.c.l.s4 1983009808
          %v507 = vunpack.c.0.s8 %v506
          %v508 = vlaneseq
          %v509 = vshrl.u32 %v508, 7
          %v510 = vsub.s32 %v507, %v509
          %v511 = vrot.slane %v497, %v510
          %v512 = vcombine.low %v504, %v511
          %v513 = vcombine.low %v484, %v485
          %v514 = vcombine.low %v486, %v487
          %v516 = vunpack.c.l.s4 1983009808
          %v517 = vunpack.c.0.s8 %v516
          %v518 = vlaneseq
          %v519 = vshrl.u32 %v518, 7
          %v520 = vsub.s32 %v517, %v519
          %v521 = vrot.slane %v513, %v520
          %v523 = vunpack.c.l.s4 1983009808
          %v524 = vunpack.c.0.s8 %v523
          %v525 = vlaneseq
          %v526 = vshrl.u32 %v525, 7
          %v527 = vsub.s32 %v524, %v526
          %v528 = vrot.slane %v514, %v527
          %v529 = vcombine.low %v521, %v528
          %v532 = vsub.f32 %v376, %v512
          %v533 = vsub.f32 %v377, %v529
          %v534 = vmul.f32 %v532, %v532
          %v535 = vmul.f32 %v533, %v533
          %v538 = vcombine.high %v534, %v534
          %v540 = vunpack.c.l.s4 1983009808
          %v541 = vunpack.c.0.s8 %v540
          %v542 = vlaneseq
          %v543 = vshrl.u32 %v542, 7
          %v544 = vsub.s32 %v541, %v543
          %v545 = vrot.slane %v534, %v544
          %v547 = vunpack.c.l.s4 1983009808
          %v548 = vunpack.c.0.s8 %v547
          %v549 = vlaneseq
          %v550 = vshrl.u32 %v549, 7
          %v551 = vsub.s32 %v548, %v550
          %v552 = vrot.slane %v538, %v551
          %v553 = vcombine.high %v545, %v545
          %v554 = vcombine.high %v552, %v552
          %v555 = vcombine.high %v535, %v535
          %v557 = vunpack.c.l.s4 1983009808
          %v558 = vunpack.c.0.s8 %v557
          %v559 = vlaneseq
          %v560 = vshrl.u32 %v559, 7
          %v561 = vsub.s32 %v558, %v560
          %v562 = vrot.slane %v535, %v561
          %v564 = vunpack.c.l.s4 1983009808
          %v565 = vunpack.c.0.s8 %v564
          %v566 = vlaneseq
          %v567 = vshrl.u32 %v566, 7
          %v568 = vsub.s32 %v565, %v567
          %v569 = vrot.slane %v555, %v568
          %v570 = vcombine.high %v562, %v562
          %v571 = vcombine.high %v569, %v569
          %v580 = vsel %vm422, %v545, 0.0
          %v581 = vrot.slane %v580, 4
          %v582 = vadd.f32 %v580, %v581
          %v583 = vrot.slane %v582, 2
          %v584 = vadd.f32 %v582, %v583
          %v585 = vrot.slane %v584, 1
          %v586 = vadd.f32 %v584, %v585
          %v587 = vsel %vm422, %v553, 0.0
          %v588 = vrot.slane %v587, 4
          %v589 = vadd.f32 %v587, %v588
          %v590 = vrot.slane %v589, 2
          %v591 = vadd.f32 %v589, %v590
          %v592 = vrot.slane %v591, 1
          %v593 = vadd.f32 %v591, %v592
          %v594 = vsel %vm422, %v552, 0.0
          %v595 = vrot.slane %v594, 4
          %v596 = vadd.f32 %v594, %v595
          %v597 = vrot.slane %v596, 2
          %v598 = vadd.f32 %v596, %v597
          %v599 = vrot.slane %v598, 1
          %v600 = vadd.f32 %v598, %v599
          %v601 = vsel %vm422, %v554, 0.0
          %v602 = vrot.slane %v601, 4
          %v603 = vadd.f32 %v601, %v602
          %v604 = vrot.slane %v603, 2
          %v605 = vadd.f32 %v603, %v604
          %v606 = vrot.slane %v605, 1
          %v607 = vadd.f32 %v605, %v606
          %v608 = vsel %vm422, %v562, 0.0
          %v609 = vrot.slane %v608, 4
          %v610 = vadd.f32 %v608, %v609
          %v611 = vrot.slane %v610, 2
          %v612 = vadd.f32 %v610, %v611
          %v613 = vrot.slane %v612, 1
          %v614 = vadd.f32 %v612, %v613
          %v615 = vsel %vm422, %v570, 0.0
          %v616 = vrot.slane %v615, 4
          %v617 = vadd.f32 %v615, %v616
          %v618 = vrot.slane %v617, 2
          %v619 = vadd.f32 %v617, %v618
          %v620 = vrot.slane %v619, 1
          %v621 = vadd.f32 %v619, %v620
          %v622 = vsel %vm422, %v569, 0.0
          %v623 = vrot.slane %v622, 4
          %v624 = vadd.f32 %v622, %v623
          %v625 = vrot.slane %v624, 2
          %v626 = vadd.f32 %v624, %v625
          %v627 = vrot.slane %v626, 1
          %v628 = vadd.f32 %v626, %v627
          %v629 = vsel %vm422, %v571, 0.0
          %v630 = vrot.slane %v629, 4
          %v631 = vadd.f32 %v629, %v630
          %v632 = vrot.slane %v631, 2
          %v633 = vadd.f32 %v631, %v632
          %v634 = vrot.slane %v633, 1
          %v635 = vadd.f32 %v633, %v634
          %v636 = vmul.f32 %v586, %v479
          %v637 = vmul.f32 %v593, %v479
          %v638 = vmul.f32 %v600, %v479
          %v639 = vmul.f32 %v607, %v479
          %v640 = vmul.f32 %v614, %v479
          %v641 = vmul.f32 %v621, %v479
          %v642 = vmul.f32 %v628, %v479
          %v643 = vmul.f32 %v635, %v479
          %v644 = vld [vmem:[%s297] sm:$0xff]
          %v645 = vadd.f32 %v636, 1e-05
          %v646 = vadd.f32 %v637, 1e-05
          %v647 = vadd.f32 %v638, 1e-05
          %v648 = vadd.f32 %v639, 1e-05
          %v649 = vadd.f32 %v640, 1e-05
          %v650 = vadd.f32 %v641, 1e-05
          %v651 = vadd.f32 %v642, 1e-05
          %v652 = vadd.f32 %v643, 1e-05
          %v653 = vrsqrt.pop %v645
          %v654 = vrsqrt.pop %v646
          %v655 = vrsqrt.pop %v647
          %v656 = vrsqrt.pop %v648
          %v657 = vrsqrt.pop %v649
          %v658 = vrsqrt.pop %v650
          %v659 = vrsqrt.pop %v651
          %v660 = vrsqrt.pop %v652
          %v669 = vcombine.low %v653, %v654
          %v670 = vcombine.low %v655, %v656
          %v671 = vcombine.low %v657, %v658
          %v672 = vcombine.low %v659, %v660
          %v674 = vunpack.c.l.s4 1966171168
          %v675 = vunpack.c.0.s8 %v674
          %v676 = vlaneseq
          %v677 = vshrl.u32 %v676, 7
          %v678 = vsub.s32 %v675, %v677
          %v679 = vrot.slane %v669, %v678
          %v681 = vunpack.c.l.s4 1966171168
          %v682 = vunpack.c.0.s8 %v681
          %v683 = vlaneseq
          %v684 = vshrl.u32 %v683, 7
          %v685 = vsub.s32 %v682, %v684
          %v686 = vrot.slane %v670, %v685
          %v688 = vunpack.c.l.s4 1966171168
          %v689 = vunpack.c.0.s8 %v688
          %v690 = vlaneseq
          %v691 = vshrl.u32 %v690, 7
          %v692 = vsub.s32 %v689, %v691
          %v693 = vrot.slane %v671, %v692
          %v695 = vunpack.c.l.s4 1966171168
          %v696 = vunpack.c.0.s8 %v695
          %v697 = vlaneseq
          %v698 = vshrl.u32 %v697, 7
          %v699 = vsub.s32 %v696, %v698
          %v700 = vrot.slane %v672, %v699
          %v701 = vcombine.low %v679, %v686
          %v702 = vcombine.low %v693, %v700
          %v704 = vunpack.c.l.s4 1966171168
          %v705 = vunpack.c.0.s8 %v704
          %v706 = vlaneseq
          %v707 = vshrl.u32 %v706, 7
          %v708 = vsub.s32 %v705, %v707
          %v709 = vrot.slane %v701, %v708
          %v711 = vunpack.c.l.s4 1966171168
          %v712 = vunpack.c.0.s8 %v711
          %v713 = vlaneseq
          %v714 = vshrl.u32 %v713, 7
          %v715 = vsub.s32 %v712, %v714
          %v716 = vrot.slane %v702, %v715
          %v717 = vcombine.low %v709, %v716
          %v719 = vmul.f32 %v644, %v717
          %v720 = vld [vmem:[%s306] sm:$0xff]
          %v722 = vlaneseq
          %v723 = vshrl.u32 %v722, 7
          %v724 = vsub.s32 0, %v723
          %v725 = vrot.slane %v719, %v724
          %v726 = vlaneseq
          %v727 = vshrl.u32 %v726, 7
          %v728 = vsub.s32 1, %v727
          %v729 = vrot.slane %v719, %v728
          %v730 = vlaneseq
          %v731 = vshrl.u32 %v730, 7
          %v732 = vsub.s32 2, %v731
          %v733 = vrot.slane %v719, %v732
          %v734 = vlaneseq
          %v735 = vshrl.u32 %v734, 7
          %v736 = vsub.s32 3, %v735
          %v737 = vrot.slane %v719, %v736
          %v738 = vlaneseq
          %v739 = vshrl.u32 %v738, 7
          %v740 = vsub.s32 4, %v739
          %v741 = vrot.slane %v719, %v740
          %v742 = vlaneseq
          %v743 = vshrl.u32 %v742, 7
          %v744 = vsub.s32 5, %v743
          %v745 = vrot.slane %v719, %v744
          %v746 = vlaneseq
          %v747 = vshrl.u32 %v746, 7
          %v748 = vsub.s32 6, %v747
          %v749 = vrot.slane %v719, %v748
          %v750 = vlaneseq
          %v751 = vshrl.u32 %v750, 7
          %v752 = vsub.s32 7, %v751
          %v753 = vrot.slane %v719, %v752
          %v762 = vmul.f32 %v480, %v725
          %v763 = vmul.f32 %v481, %v729
          %v764 = vmul.f32 %v482, %v733
          %v765 = vmul.f32 %v483, %v737
          %v766 = vmul.f32 %v484, %v741
          %v767 = vmul.f32 %v485, %v745
          %v768 = vmul.f32 %v486, %v749
          %v769 = vmul.f32 %v487, %v753
          %v778 = vcombine.low %v762, %v763
          %v779 = vcombine.low %v764, %v765
          %v780 = vcombine.low %v766, %v767
          %v781 = vcombine.low %v768, %v769
          %v783 = vunpack.c.l.s4 1966171168
          %v784 = vunpack.c.0.s8 %v783
          %v785 = vlaneseq
          %v786 = vshrl.u32 %v785, 7
          %v787 = vsub.s32 %v784, %v786
          %v788 = vrot.slane %v778, %v787
          %v790 = vunpack.c.l.s4 1966171168
          %v791 = vunpack.c.0.s8 %v790
          %v792 = vlaneseq
          %v793 = vshrl.u32 %v792, 7
          %v794 = vsub.s32 %v791, %v793
          %v795 = vrot.slane %v779, %v794
          %v797 = vunpack.c.l.s4 1966171168
          %v798 = vunpack.c.0.s8 %v797
          %v799 = vlaneseq
          %v800 = vshrl.u32 %v799, 7
          %v801 = vsub.s32 %v798, %v800
          %v802 = vrot.slane %v780, %v801
          %v804 = vunpack.c.l.s4 1966171168
          %v805 = vunpack.c.0.s8 %v804
          %v806 = vlaneseq
          %v807 = vshrl.u32 %v806, 7
          %v808 = vsub.s32 %v805, %v807
          %v809 = vrot.slane %v781, %v808
          %v810 = vcombine.low %v788, %v795
          %v811 = vcombine.low %v802, %v809
          %v813 = vunpack.c.l.s4 1966171168
          %v814 = vunpack.c.0.s8 %v813
          %v815 = vlaneseq
          %v816 = vshrl.u32 %v815, 7
          %v817 = vsub.s32 %v814, %v816
          %v818 = vrot.slane %v810, %v817
          %v820 = vunpack.c.l.s4 1966171168
          %v821 = vunpack.c.0.s8 %v820
          %v822 = vlaneseq
          %v823 = vshrl.u32 %v822, 7
          %v824 = vsub.s32 %v821, %v823
          %v825 = vrot.slane %v811, %v824
          %v826 = vcombine.low %v818, %v825
          %v828 = vsub.f32 %v720, %v826
          %v829 = vcombine.low %v725, %v729
          %v830 = vcombine.low %v733, %v737
          %v832 = vunpack.c.l.s4 1983009808
          %v833 = vunpack.c.0.s8 %v832
          %v834 = vlaneseq
          %v835 = vshrl.u32 %v834, 7
          %v836 = vsub.s32 %v833, %v835
          %v837 = vrot.slane %v829, %v836
          %v839 = vunpack.c.l.s4 1983009808
          %v840 = vunpack.c.0.s8 %v839
          %v841 = vlaneseq
          %v842 = vshrl.u32 %v841, 7
          %v843 = vsub.s32 %v840, %v842
          %v844 = vrot.slane %v830, %v843
          %v845 = vcombine.low %v837, %v844
          %v846 = vcombine.low %v741, %v745
          %v847 = vcombine.low %v749, %v753
          %v849 = vunpack.c.l.s4 1983009808
          %v850 = vunpack.c.0.s8 %v849
          %v851 = vlaneseq
          %v852 = vshrl.u32 %v851, 7
          %v853 = vsub.s32 %v850, %v852
          %v854 = vrot.slane %v846, %v853
          %v856 = vunpack.c.l.s4 1983009808
          %v857 = vunpack.c.0.s8 %v856
          %v858 = vlaneseq
          %v859 = vshrl.u32 %v858, 7
          %v860 = vsub.s32 %v857, %v859
          %v861 = vrot.slane %v847, %v860
          %v862 = vcombine.low %v854, %v861
          %v865 = vmul.f32 %v376, %v845
          %v866 = vmul.f32 %v377, %v862
          %v868 = vlaneseq
          %v869 = vshrl.u32 %v868, 7
          %v870 = vsub.s32 0, %v869
          %v871 = vrot.slane %v828, %v870
          %v872 = vlaneseq
          %v873 = vshrl.u32 %v872, 7
          %v874 = vsub.s32 1, %v873
          %v875 = vrot.slane %v828, %v874
          %v876 = vlaneseq
          %v877 = vshrl.u32 %v876, 7
          %v878 = vsub.s32 2, %v877
          %v879 = vrot.slane %v828, %v878
          %v880 = vlaneseq
          %v881 = vshrl.u32 %v880, 7
          %v882 = vsub.s32 3, %v881
          %v883 = vrot.slane %v828, %v882
          %v884 = vlaneseq
          %v885 = vshrl.u32 %v884, 7
          %v886 = vsub.s32 4, %v885
          %v887 = vrot.slane %v828, %v886
          %v888 = vlaneseq
          %v889 = vshrl.u32 %v888, 7
          %v890 = vsub.s32 5, %v889
          %v891 = vrot.slane %v828, %v890
          %v892 = vlaneseq
          %v893 = vshrl.u32 %v892, 7
          %v894 = vsub.s32 6, %v893
          %v895 = vrot.slane %v828, %v894
          %v896 = vlaneseq
          %v897 = vshrl.u32 %v896, 7
          %v898 = vsub.s32 7, %v897
          %v899 = vrot.slane %v828, %v898
          %v900 = vcombine.low %v871, %v875
          %v901 = vcombine.low %v879, %v883
          %v903 = vunpack.c.l.s4 1983009808
          %v904 = vunpack.c.0.s8 %v903
          %v905 = vlaneseq
          %v906 = vshrl.u32 %v905, 7
          %v907 = vsub.s32 %v904, %v906
          %v908 = vrot.slane %v900, %v907
          %v910 = vunpack.c.l.s4 1983009808
          %v911 = vunpack.c.0.s8 %v910
          %v912 = vlaneseq
          %v913 = vshrl.u32 %v912, 7
          %v914 = vsub.s32 %v911, %v913
          %v915 = vrot.slane %v901, %v914
          %v916 = vcombine.low %v908, %v915
          %v917 = vcombine.low %v887, %v891
          %v918 = vcombine.low %v895, %v899
          %v920 = vunpack.c.l.s4 1983009808
          %v921 = vunpack.c.0.s8 %v920
          %v922 = vlaneseq
          %v923 = vshrl.u32 %v922, 7
          %v924 = vsub.s32 %v921, %v923
          %v925 = vrot.slane %v917, %v924
          %v927 = vunpack.c.l.s4 1983009808
          %v928 = vunpack.c.0.s8 %v927
          %v929 = vlaneseq
          %v930 = vshrl.u32 %v929, 7
          %v931 = vsub.s32 %v928, %v930
          %v932 = vrot.slane %v918, %v931
          %v933 = vcombine.low %v925, %v932
          %v936 = vadd.f32 %v865, %v916
          %v937 = vadd.f32 %v866, %v933
          %v940 = vcombine.high %v936, %v936
          %v942 = vunpack.c.l.s4 1983009808
          %v943 = vunpack.c.0.s8 %v942
          %v944 = vlaneseq
          %v945 = vshrl.u32 %v944, 7
          %v946 = vsub.s32 %v943, %v945
          %v947 = vrot.slane %v936, %v946
          %v949 = vunpack.c.l.s4 1983009808
          %v950 = vunpack.c.0.s8 %v949
          %v951 = vlaneseq
          %v952 = vshrl.u32 %v951, 7
          %v953 = vsub.s32 %v950, %v952
          %v954 = vrot.slane %v940, %v953
          %v955 = vcombine.high %v947, %v947
          %v956 = vcombine.high %v954, %v954
          %v957 = vcombine.high %v937, %v937
          %v959 = vunpack.c.l.s4 1983009808
          %v960 = vunpack.c.0.s8 %v959
          %v961 = vlaneseq
          %v962 = vshrl.u32 %v961, 7
          %v963 = vsub.s32 %v960, %v962
          %v964 = vrot.slane %v937, %v963
          %v966 = vunpack.c.l.s4 1983009808
          %v967 = vunpack.c.0.s8 %v966
          %v968 = vlaneseq
          %v969 = vshrl.u32 %v968, 7
          %v970 = vsub.s32 %v967, %v969
          %v971 = vrot.slane %v957, %v970
          %v972 = vcombine.high %v964, %v964
          %v973 = vcombine.high %v971, %v971
          %v982 = vpack.c.bf16 %v947, %v947
          %v983 = vpack.c.bf16 %v955, %v955
          %v984 = vpack.c.bf16 %v954, %v954
          %v985 = vpack.c.bf16 %v956, %v956
          %v986 = vpack.c.bf16 %v964, %v964
          %v987 = vpack.c.bf16 %v972, %v972
          %v988 = vpack.c.bf16 %v971, %v971
          %v989 = vpack.c.bf16 %v973, %v973
          %v998 = vcombine.low %v982, %v983
          %v999 = vcombine.low %v984, %v985
          %v1000 = vcombine.low %v986, %v987
          %v1001 = vcombine.low %v988, %v989
          %v1003 = vunpack.c.l.s4 1966171168
          %v1004 = vunpack.c.0.s8 %v1003
          %v1005 = vlaneseq
          %v1006 = vshrl.u32 %v1005, 7
          %v1007 = vsub.s32 %v1004, %v1006
          %v1008 = vrot.slane %v998, %v1007
          %v1010 = vunpack.c.l.s4 1966171168
          %v1011 = vunpack.c.0.s8 %v1010
          %v1012 = vlaneseq
          %v1013 = vshrl.u32 %v1012, 7
          %v1014 = vsub.s32 %v1011, %v1013
          %v1015 = vrot.slane %v999, %v1014
          %v1017 = vunpack.c.l.s4 1966171168
          %v1018 = vunpack.c.0.s8 %v1017
          %v1019 = vlaneseq
          %v1020 = vshrl.u32 %v1019, 7
          %v1021 = vsub.s32 %v1018, %v1020
          %v1022 = vrot.slane %v1000, %v1021
          %v1024 = vunpack.c.l.s4 1966171168
          %v1025 = vunpack.c.0.s8 %v1024
          %v1026 = vlaneseq
          %v1027 = vshrl.u32 %v1026, 7
          %v1028 = vsub.s32 %v1025, %v1027
          %v1029 = vrot.slane %v1001, %v1028
          %v1030 = vcombine.low %v1008, %v1015
          %v1031 = vcombine.low %v1022, %v1029
          %v1033 = vunpack.c.l.s4 1966171168
          %v1034 = vunpack.c.0.s8 %v1033
          %v1035 = vlaneseq
          %v1036 = vshrl.u32 %v1035, 7
          %v1037 = vsub.s32 %v1034, %v1036
          %v1038 = vrot.slane %v1030, %v1037
          %v1040 = vunpack.c.l.s4 1966171168
          %v1041 = vunpack.c.0.s8 %v1040
          %v1042 = vlaneseq
          %v1043 = vshrl.u32 %v1042, 7
          %v1044 = vsub.s32 %v1041, %v1043
          %v1045 = vrot.slane %v1031, %v1044
          %v1046 = vcombine.low %v1038, %v1045
          %1048 = vst [vmem:[#allocation2] sm:$0xff] %v1046
        $region64: #{fcc_forward.4} parent=39 // pred_fallthru
          _
        %v1049 = vld [vmem:[#allocation2] sm:$0xff]
        %v1050 = vld [vmem:[%s315] sm:$0xff]
        %v1051 = vld [vmem:[%s315 + $0x8] sm:$0xff]
        %v1052 = vld [vmem:[%s315 + $0x10] sm:$0xff]
        %v1053 = vld [vmem:[%s315 + $0x18] sm:$0xff]
        %v1054 = vld [vmem:[%s315 + $0x20] sm:$0xff]
        %v1055 = vld [vmem:[%s315 + $0x28] sm:$0xff]
        %v1056 = vld [vmem:[%s315 + $0x30] sm:$0xff]
        %v1057 = vld [vmem:[%s315 + $0x38] sm:$0xff]
        %v1058 = vld [vmem:[%s315 + $0x40] sm:$0xff]
        %v1059 = vld [vmem:[%s315 + $0x48] sm:$0xff]
        %v1060 = vld [vmem:[%s315 + $0x50] sm:$0xff]
        %v1061 = vld [vmem:[%s315 + $0x58] sm:$0xff]
        %v1062 = vld [vmem:[%s315 + $0x60] sm:$0xff]
        %v1063 = vld [vmem:[%s315 + $0x68] sm:$0xff]
        %v1064 = vld [vmem:[%s315 + $0x70] sm:$0xff]
        %v1065 = vld [vmem:[%s315 + $0x78] sm:$0xff]
        %v1066 = vld [vmem:[%s315 + $0x80] sm:$0xff]
        %v1067 = vld [vmem:[%s315 + $0x88] sm:$0xff]
        %v1068 = vld [vmem:[%s315 + $0x90] sm:$0xff]
        %v1069 = vld [vmem:[%s315 + $0x98] sm:$0xff]
        %v1070 = vld [vmem:[%s315 + $0xa0] sm:$0xff]
        %v1071 = vld [vmem:[%s315 + $0xa8] sm:$0xff]
        %v1072 = vld [vmem:[%s315 + $0xb0] sm:$0xff]
        %v1073 = vld [vmem:[%s315 + $0xb8] sm:$0xff]
        %v1074 = vld [vmem:[%s315 + $0xc0] sm:$0xff]
        %v1075 = vld [vmem:[%s315 + $0xc8] sm:$0xff]
        %v1076 = vld [vmem:[%s315 + $0xd0] sm:$0xff]
        %v1077 = vld [vmem:[%s315 + $0xd8] sm:$0xff]
        %v1078 = vld [vmem:[%s315 + $0xe0] sm:$0xff]
        %v1079 = vld [vmem:[%s315 + $0xe8] sm:$0xff]
        %v1080 = vld [vmem:[%s315 + $0xf0] sm:$0xff]
        %v1081 = vld [vmem:[%s315 + $0xf8] sm:$0xff]
        %v1082 = vld [vmem:[%s315 + $0x100] sm:$0xff]
        %v1083 = vld [vmem:[%s315 + $0x108] sm:$0xff]
        %v1084 = vld [vmem:[%s315 + $0x110] sm:$0xff]
        %v1085 = vld [vmem:[%s315 + $0x118] sm:$0xff]
        %v1086 = vld [vmem:[%s315 + $0x120] sm:$0xff]
        %v1087 = vld [vmem:[%s315 + $0x128] sm:$0xff]
        %v1088 = vld [vmem:[%s315 + $0x130] sm:$0xff]
        %v1089 = vld [vmem:[%s315 + $0x138] sm:$0xff]
        %v1090 = vld [vmem:[%s315 + $0x140] sm:$0xff]
        %v1091 = vld [vmem:[%s315 + $0x148] sm:$0xff]
        %v1092 = vld [vmem:[%s315 + $0x150] sm:$0xff]
        %v1093 = vld [vmem:[%s315 + $0x158] sm:$0xff]
        %v1094 = vld [vmem:[%s315 + $0x160] sm:$0xff]
        %v1095 = vld [vmem:[%s315 + $0x168] sm:$0xff]
        %v1096 = vld [vmem:[%s315 + $0x170] sm:$0xff]
        %v1097 = vld [vmem:[%s315 + $0x178] sm:$0xff]
        %v1098 = vld [vmem:[%s315 + $0x180] sm:$0xff]
        %v1099 = vld [vmem:[%s315 + $0x188] sm:$0xff]
        %v1100 = vld [vmem:[%s315 + $0x190] sm:$0xff]
        %v1101 = vld [vmem:[%s315 + $0x198] sm:$0xff]
        %v1102 = vld [vmem:[%s315 + $0x1a0] sm:$0xff]
        %v1103 = vld [vmem:[%s315 + $0x1a8] sm:$0xff]
        %v1104 = vld [vmem:[%s315 + $0x1b0] sm:$0xff]
        %v1105 = vld [vmem:[%s315 + $0x1b8] sm:$0xff]
        %v1106 = vld [vmem:[%s315 + $0x1c0] sm:$0xff]
        %v1107 = vld [vmem:[%s315 + $0x1c8] sm:$0xff]
        %v1108 = vld [vmem:[%s315 + $0x1d0] sm:$0xff]
        %v1109 = vld [vmem:[%s315 + $0x1d8] sm:$0xff]
        %v1110 = vld [vmem:[%s315 + $0x1e0] sm:$0xff]
        %v1111 = vld [vmem:[%s315 + $0x1e8] sm:$0xff]
        %v1112 = vld [vmem:[%s315 + $0x1f0] sm:$0xff]
        %v1113 = vld [vmem:[%s315 + $0x1f8] sm:$0xff]
        %v1114 = vld [vmem:[%s315 + $0x200] sm:$0xff]
        %v1115 = vld [vmem:[%s315 + $0x208] sm:$0xff]
        %v1116 = vld [vmem:[%s315 + $0x210] sm:$0xff]
        %v1117 = vld [vmem:[%s315 + $0x218] sm:$0xff]
        %v1118 = vld [vmem:[%s315 + $0x220] sm:$0xff]
        %v1119 = vld [vmem:[%s315 + $0x228] sm:$0xff]
        %v1120 = vld [vmem:[%s315 + $0x230] sm:$0xff]
        %v1121 = vld [vmem:[%s315 + $0x238] sm:$0xff]
        %v1122 = vld [vmem:[%s315 + $0x240] sm:$0xff]
        %v1123 = vld [vmem:[%s315 + $0x248] sm:$0xff]
        %v1124 = vld [vmem:[%s315 + $0x250] sm:$0xff]
        %v1125 = vld [vmem:[%s315 + $0x258] sm:$0xff]
        %v1126 = vld [vmem:[%s315 + $0x260] sm:$0xff]
        %v1127 = vld [vmem:[%s315 + $0x268] sm:$0xff]
        %v1128 = vld [vmem:[%s315 + $0x270] sm:$0xff]
        %v1129 = vld [vmem:[%s315 + $0x278] sm:$0xff]
        %v1130 = vld [vmem:[%s315 + $0x280] sm:$0xff]
        %v1131 = vld [vmem:[%s315 + $0x288] sm:$0xff]
        %v1132 = vld [vmem:[%s315 + $0x290] sm:$0xff]
        %v1133 = vld [vmem:[%s315 + $0x298] sm:$0xff]
        %v1134 = vld [vmem:[%s315 + $0x2a0] sm:$0xff]
        %v1135 = vld [vmem:[%s315 + $0x2a8] sm:$0xff]
        %v1136 = vld [vmem:[%s315 + $0x2b0] sm:$0xff]
        %v1137 = vld [vmem:[%s315 + $0x2b8] sm:$0xff]
        %v1138 = vld [vmem:[%s315 + $0x2c0] sm:$0xff]
        %v1139 = vld [vmem:[%s315 + $0x2c8] sm:$0xff]
        %v1140 = vld [vmem:[%s315 + $0x2d0] sm:$0xff]
        %v1141 = vld [vmem:[%s315 + $0x2d8] sm:$0xff]
        %v1142 = vld [vmem:[%s315 + $0x2e0] sm:$0xff]
        %v1143 = vld [vmem:[%s315 + $0x2e8] sm:$0xff]
        %v1144 = vld [vmem:[%s315 + $0x2f0] sm:$0xff]
        %v1145 = vld [vmem:[%s315 + $0x2f8] sm:$0xff]
        %v1146 = vld [vmem:[%s315 + $0x300] sm:$0xff]
        %v1147 = vld [vmem:[%s315 + $0x308] sm:$0xff]
        %v1148 = vld [vmem:[%s315 + $0x310] sm:$0xff]
        %v1149 = vld [vmem:[%s315 + $0x318] sm:$0xff]
        %v1150 = vld [vmem:[%s315 + $0x320] sm:$0xff]
        %v1151 = vld [vmem:[%s315 + $0x328] sm:$0xff]
        %v1152 = vld [vmem:[%s315 + $0x330] sm:$0xff]
        %v1153 = vld [vmem:[%s315 + $0x338] sm:$0xff]
        %v1154 = vld [vmem:[%s315 + $0x340] sm:$0xff]
        %v1155 = vld [vmem:[%s315 + $0x348] sm:$0xff]
        %v1156 = vld [vmem:[%s315 + $0x350] sm:$0xff]
        %v1157 = vld [vmem:[%s315 + $0x358] sm:$0xff]
        %v1158 = vld [vmem:[%s315 + $0x360] sm:$0xff]
        %v1159 = vld [vmem:[%s315 + $0x368] sm:$0xff]
        %v1160 = vld [vmem:[%s315 + $0x370] sm:$0xff]
        %v1161 = vld [vmem:[%s315 + $0x378] sm:$0xff]
        %v1162 = vld [vmem:[%s315 + $0x380] sm:$0xff]
        %v1163 = vld [vmem:[%s315 + $0x388] sm:$0xff]
        %v1164 = vld [vmem:[%s315 + $0x390] sm:$0xff]
        %v1165 = vld [vmem:[%s315 + $0x398] sm:$0xff]
        %v1166 = vld [vmem:[%s315 + $0x3a0] sm:$0xff]
        %v1167 = vld [vmem:[%s315 + $0x3a8] sm:$0xff]
        %v1168 = vld [vmem:[%s315 + $0x3b0] sm:$0xff]
        %v1169 = vld [vmem:[%s315 + $0x3b8] sm:$0xff]
        %v1170 = vld [vmem:[%s315 + $0x3c0] sm:$0xff]
        %v1171 = vld [vmem:[%s315 + $0x3c8] sm:$0xff]
        %v1172 = vld [vmem:[%s315 + $0x3d0] sm:$0xff]
        %v1173 = vld [vmem:[%s315 + $0x3d8] sm:$0xff]
        %v1174 = vld [vmem:[%s315 + $0x3e0] sm:$0xff]
        %v1175 = vld [vmem:[%s315 + $0x3e8] sm:$0xff]
        %v1176 = vld [vmem:[%s315 + $0x3f0] sm:$0xff]
        %v1177 = vld [vmem:[%s315 + $0x3f8] sm:$0xff]
        %v1178 = vld [vmem:[%s315 + $0x400] sm:$0xff]
        %v1179 = vld [vmem:[%s315 + $0x408] sm:$0xff]
        %v1180 = vld [vmem:[%s315 + $0x410] sm:$0xff]
        %v1181 = vld [vmem:[%s315 + $0x418] sm:$0xff]
        %v1182 = vld [vmem:[%s315 + $0x420] sm:$0xff]
        %v1183 = vld [vmem:[%s315 + $0x428] sm:$0xff]
        %v1184 = vld [vmem:[%s315 + $0x430] sm:$0xff]
        %v1185 = vld [vmem:[%s315 + $0x438] sm:$0xff]
        %v1186 = vld [vmem:[%s315 + $0x440] sm:$0xff]
        %v1187 = vld [vmem:[%s315 + $0x448] sm:$0xff]
        %v1188 = vld [vmem:[%s315 + $0x450] sm:$0xff]
        %v1189 = vld [vmem:[%s315 + $0x458] sm:$0xff]
        %v1190 = vld [vmem:[%s315 + $0x460] sm:$0xff]
        %v1191 = vld [vmem:[%s315 + $0x468] sm:$0xff]
        %v1192 = vld [vmem:[%s315 + $0x470] sm:$0xff]
        %v1193 = vld [vmem:[%s315 + $0x478] sm:$0xff]
        %v1194 = vld [vmem:[%s315 + $0x480] sm:$0xff]
        %v1195 = vld [vmem:[%s315 + $0x488] sm:$0xff]
        %v1196 = vld [vmem:[%s315 + $0x490] sm:$0xff]
        %v1197 = vld [vmem:[%s315 + $0x498] sm:$0xff]
        %v1198 = vld [vmem:[%s315 + $0x4a0] sm:$0xff]
        %v1199 = vld [vmem:[%s315 + $0x4a8] sm:$0xff]
        %v1200 = vld [vmem:[%s315 + $0x4b0] sm:$0xff]
        %v1201 = vld [vmem:[%s315 + $0x4b8] sm:$0xff]
        %v1202 = vld [vmem:[%s315 + $0x4c0] sm:$0xff]
        %v1203 = vld [vmem:[%s315 + $0x4c8] sm:$0xff]
        %v1204 = vld [vmem:[%s315 + $0x4d0] sm:$0xff]
        %v1205 = vld [vmem:[%s315 + $0x4d8] sm:$0xff]
        %v1206 = vld [vmem:[%s315 + $0x4e0] sm:$0xff]
        %v1207 = vld [vmem:[%s315 + $0x4e8] sm:$0xff]
        %v1208 = vld [vmem:[%s315 + $0x4f0] sm:$0xff]
        %v1209 = vld [vmem:[%s315 + $0x4f8] sm:$0xff]
        %v1210 = vld [vmem:[%s315 + $0x500] sm:$0xff]
        %v1211 = vld [vmem:[%s315 + $0x508] sm:$0xff]
        %v1212 = vld [vmem:[%s315 + $0x510] sm:$0xff]
        %v1213 = vld [vmem:[%s315 + $0x518] sm:$0xff]
        %v1214 = vld [vmem:[%s315 + $0x520] sm:$0xff]
        %v1215 = vld [vmem:[%s315 + $0x528] sm:$0xff]
        %v1216 = vld [vmem:[%s315 + $0x530] sm:$0xff]
        %v1217 = vld [vmem:[%s315 + $0x538] sm:$0xff]
        %v1218 = vld [vmem:[%s315 + $0x540] sm:$0xff]
        %v1219 = vld [vmem:[%s315 + $0x548] sm:$0xff]
        %v1220 = vld [vmem:[%s315 + $0x550] sm:$0xff]
        %v1221 = vld [vmem:[%s315 + $0x558] sm:$0xff]
        %v1222 = vld [vmem:[%s315 + $0x560] sm:$0xff]
        %v1223 = vld [vmem:[%s315 + $0x568] sm:$0xff]
        %v1224 = vld [vmem:[%s315 + $0x570] sm:$0xff]
        %v1225 = vld [vmem:[%s315 + $0x578] sm:$0xff]
        %v1226 = vld [vmem:[%s315 + $0x580] sm:$0xff]
        %v1227 = vld [vmem:[%s315 + $0x588] sm:$0xff]
        %v1228 = vld [vmem:[%s315 + $0x590] sm:$0xff]
        %v1229 = vld [vmem:[%s315 + $0x598] sm:$0xff]
        %v1230 = vld [vmem:[%s315 + $0x5a0] sm:$0xff]
        %v1231 = vld [vmem:[%s315 + $0x5a8] sm:$0xff]
        %v1232 = vld [vmem:[%s315 + $0x5b0] sm:$0xff]
        %v1233 = vld [vmem:[%s315 + $0x5b8] sm:$0xff]
        %v1234 = vld [vmem:[%s315 + $0x5c0] sm:$0xff]
        %v1235 = vld [vmem:[%s315 + $0x5c8] sm:$0xff]
        %v1236 = vld [vmem:[%s315 + $0x5d0] sm:$0xff]
        %v1237 = vld [vmem:[%s315 + $0x5d8] sm:$0xff]
        %v1238 = vld [vmem:[%s315 + $0x5e0] sm:$0xff]
        %v1239 = vld [vmem:[%s315 + $0x5e8] sm:$0xff]
        %v1240 = vld [vmem:[%s315 + $0x5f0] sm:$0xff]
        %v1241 = vld [vmem:[%s315 + $0x5f8] sm:$0xff]
        %v1242 = vld [vmem:[%s315 + $0x600] sm:$0xff]
        %v1243 = vld [vmem:[%s315 + $0x608] sm:$0xff]
        %v1244 = vld [vmem:[%s315 + $0x610] sm:$0xff]
        %v1245 = vld [vmem:[%s315 + $0x618] sm:$0xff]
        %v1246 = vld [vmem:[%s315 + $0x620] sm:$0xff]
        %v1247 = vld [vmem:[%s315 + $0x628] sm:$0xff]
        %v1248 = vld [vmem:[%s315 + $0x630] sm:$0xff]
        %v1249 = vld [vmem:[%s315 + $0x638] sm:$0xff]
        %v1250 = vld [vmem:[%s315 + $0x640] sm:$0xff]
        %v1251 = vld [vmem:[%s315 + $0x648] sm:$0xff]
        %v1252 = vld [vmem:[%s315 + $0x650] sm:$0xff]
        %v1253 = vld [vmem:[%s315 + $0x658] sm:$0xff]
        %v1254 = vld [vmem:[%s315 + $0x660] sm:$0xff]
        %v1255 = vld [vmem:[%s315 + $0x668] sm:$0xff]
        %v1256 = vld [vmem:[%s315 + $0x670] sm:$0xff]
        %v1257 = vld [vmem:[%s315 + $0x678] sm:$0xff]
        %v1258 = vld [vmem:[%s315 + $0x680] sm:$0xff]
        %v1259 = vld [vmem:[%s315 + $0x688] sm:$0xff]
        %v1260 = vld [vmem:[%s315 + $0x690] sm:$0xff]
        %v1261 = vld [vmem:[%s315 + $0x698] sm:$0xff]
        %v1262 = vld [vmem:[%s315 + $0x6a0] sm:$0xff]
        %v1263 = vld [vmem:[%s315 + $0x6a8] sm:$0xff]
        %v1264 = vld [vmem:[%s315 + $0x6b0] sm:$0xff]
        %v1265 = vld [vmem:[%s315 + $0x6b8] sm:$0xff]
        %v1266 = vld [vmem:[%s315 + $0x6c0] sm:$0xff]
        %v1267 = vld [vmem:[%s315 + $0x6c8] sm:$0xff]
        %v1268 = vld [vmem:[%s315 + $0x6d0] sm:$0xff]
        %v1269 = vld [vmem:[%s315 + $0x6d8] sm:$0xff]
        %v1270 = vld [vmem:[%s315 + $0x6e0] sm:$0xff]
        %v1271 = vld [vmem:[%s315 + $0x6e8] sm:$0xff]
        %v1272 = vld [vmem:[%s315 + $0x6f0] sm:$0xff]
        %v1273 = vld [vmem:[%s315 + $0x6f8] sm:$0xff]
        %v1274 = vld [vmem:[%s315 + $0x700] sm:$0xff]
        %v1275 = vld [vmem:[%s315 + $0x708] sm:$0xff]
        %v1276 = vld [vmem:[%s315 + $0x710] sm:$0xff]
        %v1277 = vld [vmem:[%s315 + $0x718] sm:$0xff]
        %v1278 = vld [vmem:[%s315 + $0x720] sm:$0xff]
        %v1279 = vld [vmem:[%s315 + $0x728] sm:$0xff]
        %v1280 = vld [vmem:[%s315 + $0x730] sm:$0xff]
        %v1281 = vld [vmem:[%s315 + $0x738] sm:$0xff]
        %v1282 = vld [vmem:[%s315 + $0x740] sm:$0xff]
        %v1283 = vld [vmem:[%s315 + $0x748] sm:$0xff]
        %v1284 = vld [vmem:[%s315 + $0x750] sm:$0xff]
        %v1285 = vld [vmem:[%s315 + $0x758] sm:$0xff]
        %v1286 = vld [vmem:[%s315 + $0x760] sm:$0xff]
        %v1287 = vld [vmem:[%s315 + $0x768] sm:$0xff]
        %v1288 = vld [vmem:[%s315 + $0x770] sm:$0xff]
        %v1289 = vld [vmem:[%s315 + $0x778] sm:$0xff]
        %v1290 = vld [vmem:[%s315 + $0x780] sm:$0xff]
        %v1291 = vld [vmem:[%s315 + $0x788] sm:$0xff]
        %v1292 = vld [vmem:[%s315 + $0x790] sm:$0xff]
        %v1293 = vld [vmem:[%s315 + $0x798] sm:$0xff]
        %v1294 = vld [vmem:[%s315 + $0x7a0] sm:$0xff]
        %v1295 = vld [vmem:[%s315 + $0x7a8] sm:$0xff]
        %v1296 = vld [vmem:[%s315 + $0x7b0] sm:$0xff]
        %v1297 = vld [vmem:[%s315 + $0x7b8] sm:$0xff]
        %v1298 = vld [vmem:[%s315 + $0x7c0] sm:$0xff]
        %v1299 = vld [vmem:[%s315 + $0x7c8] sm:$0xff]
        %v1300 = vld [vmem:[%s315 + $0x7d0] sm:$0xff]
        %v1301 = vld [vmem:[%s315 + $0x7d8] sm:$0xff]
        %v1302 = vld [vmem:[%s315 + $0x7e0] sm:$0xff]
        %v1303 = vld [vmem:[%s315 + $0x7e8] sm:$0xff]
        %v1304 = vld [vmem:[%s315 + $0x7f0] sm:$0xff]
        %v1305 = vld [vmem:[%s315 + $0x7f8] sm:$0xff]
        %v1306 = vld [vmem:[%s324] sm:$0xf]
        %v1308 = vlaneseq
        %v1309 = vshrl.u32 %v1308, 7
        %v1310 = vsub.s32 0, %v1309
        %v1311 = vrot.slane %v1306, %v1310
        %v1312 = vlaneseq
        %v1313 = vshrl.u32 %v1312, 7
        %v1314 = vsub.s32 1, %v1313
        %v1315 = vrot.slane %v1306, %v1314
        %v1316 = vlaneseq
        %v1317 = vshrl.u32 %v1316, 7
        %v1318 = vsub.s32 2, %v1317
        %v1319 = vrot.slane %v1306, %v1318
        %v1320 = vlaneseq
        %v1321 = vshrl.u32 %v1320, 7
        %v1322 = vsub.s32 3, %v1321
        %v1323 = vrot.slane %v1306, %v1322
        %v1329 = vcombine.high %v1049, %v1049
        %v1331 = vunpack.c.l.s4 1966171168
        %v1332 = vunpack.c.0.s8 %v1331
        %v1333 = vlaneseq
        %v1334 = vshrl.u32 %v1333, 7
        %v1335 = vsub.s32 %v1332, %v1334
        %v1336 = vrot.slane %v1049, %v1335
        %v1338 = vunpack.c.l.s4 1966171168
        %v1339 = vunpack.c.0.s8 %v1338
        %v1340 = vlaneseq
        %v1341 = vshrl.u32 %v1340, 7
        %v1342 = vsub.s32 %v1339, %v1341
        %v1343 = vrot.slane %v1329, %v1342
        %v1344 = vcombine.high %v1336, %v1336
        %v1345 = vcombine.high %v1343, %v1343
        %v1347 = vunpack.c.l.s4 1966171168
        %v1348 = vunpack.c.0.s8 %v1347
        %v1349 = vlaneseq
        %v1350 = vshrl.u32 %v1349, 7
        %v1351 = vsub.s32 %v1348, %v1350
        %v1352 = vrot.slane %v1336, %v1351
        %v1354 = vunpack.c.l.s4 1966171168
        %v1355 = vunpack.c.0.s8 %v1354
        %v1356 = vlaneseq
        %v1357 = vshrl.u32 %v1356, 7
        %v1358 = vsub.s32 %v1355, %v1357
        %v1359 = vrot.slane %v1343, %v1358
        %v1361 = vunpack.c.l.s4 1966171168
        %v1362 = vunpack.c.0.s8 %v1361
        %v1363 = vlaneseq
        %v1364 = vshrl.u32 %v1363, 7
        %v1365 = vsub.s32 %v1362, %v1364
        %v1366 = vrot.slane %v1344, %v1365
        %v1368 = vunpack.c.l.s4 1966171168
        %v1369 = vunpack.c.0.s8 %v1368
        %v1370 = vlaneseq
        %v1371 = vshrl.u32 %v1370, 7
        %v1372 = vsub.s32 %v1369, %v1371
        %v1373 = vrot.slane %v1345, %v1372
        %v1374 = vcombine.high %v1352, %v1352
        %v1375 = vcombine.high %v1359, %v1359
        %v1376 = vcombine.high %v1366, %v1366
        %v1377 = vcombine.high %v1373, %v1373
        %v1642 = vunpack.c.l.b16 %v1050
        %v1643 = vunpack.c.h.b16 %v1050
        %v1644 = vunpack.c.l.b16 %v1051
        %v1645 = vunpack.c.h.b16 %v1051
        %v1646 = vunpack.c.l.b16 %v1052
        %v1647 = vunpack.c.h.b16 %v1052
        %v1648 = vunpack.c.l.b16 %v1053
        %v1649 = vunpack.c.h.b16 %v1053
        %v1650 = vunpack.c.l.b16 %v1054
        %v1651 = vunpack.c.h.b16 %v1054
        %v1652 = vunpack.c.l.b16 %v1055
        %v1653 = vunpack.c.h.b16 %v1055
        %v1654 = vunpack.c.l.b16 %v1056
        %v1655 = vunpack.c.h.b16 %v1056
        %v1656 = vunpack.c.l.b16 %v1057
        %v1657 = vunpack.c.h.b16 %v1057
        %v1658 = vunpack.c.l.b16 %v1058
        %v1659 = vunpack.c.h.b16 %v1058
        %v1660 = vunpack.c.l.b16 %v1059
        %v1661 = vunpack.c.h.b16 %v1059
        %v1662 = vunpack.c.l.b16 %v1060
        %v1663 = vunpack.c.h.b16 %v1060
        %v1664 = vunpack.c.l.b16 %v1061
        %v1665 = vunpack.c.h.b16 %v1061
        %v1666 = vunpack.c.l.b16 %v1062
        %v1667 = vunpack.c.h.b16 %v1062
        %v1668 = vunpack.c.l.b16 %v1063
        %v1669 = vunpack.c.h.b16 %v1063
        %v1670 = vunpack.c.l.b16 %v1064
        %v1671 = vunpack.c.h.b16 %v1064
        %v1672 = vunpack.c.l.b16 %v1065
        %v1673 = vunpack.c.h.b16 %v1065
        %v1674 = vunpack.c.l.b16 %v1066
        %v1675 = vunpack.c.h.b16 %v1066
        %v1676 = vunpack.c.l.b16 %v1067
        %v1677 = vunpack.c.h.b16 %v1067
        %v1678 = vunpack.c.l.b16 %v1068
        %v1679 = vunpack.c.h.b16 %v1068
        %v1680 = vunpack.c.l.b16 %v1069
        %v1681 = vunpack.c.h.b16 %v1069
        %v1682 = vunpack.c.l.b16 %v1070
        %v1683 = vunpack.c.h.b16 %v1070
        %v1684 = vunpack.c.l.b16 %v1071
        %v1685 = vunpack.c.h.b16 %v1071
        %v1686 = vunpack.c.l.b16 %v1072
        %v1687 = vunpack.c.h.b16 %v1072
        %v1688 = vunpack.c.l.b16 %v1073
        %v1689 = vunpack.c.h.b16 %v1073
        %v1690 = vunpack.c.l.b16 %v1074
        %v1691 = vunpack.c.h.b16 %v1074
        %v1692 = vunpack.c.l.b16 %v1075
        %v1693 = vunpack.c.h.b16 %v1075
        %v1694 = vunpack.c.l.b16 %v1076
        %v1695 = vunpack.c.h.b16 %v1076
        %v1696 = vunpack.c.l.b16 %v1077
        %v1697 = vunpack.c.h.b16 %v1077
        %v1698 = vunpack.c.l.b16 %v1078
        %v1699 = vunpack.c.h.b16 %v1078
        %v1700 = vunpack.c.l.b16 %v1079
        %v1701 = vunpack.c.h.b16 %v1079
        %v1702 = vunpack.c.l.b16 %v1080
        %v1703 = vunpack.c.h.b16 %v1080
        %v1704 = vunpack.c.l.b16 %v1081
        %v1705 = vunpack.c.h.b16 %v1081
        %v1706 = vunpack.c.l.b16 %v1082
        %v1707 = vunpack.c.h.b16 %v1082
        %v1708 = vunpack.c.l.b16 %v1083
        %v1709 = vunpack.c.h.b16 %v1083
        %v1710 = vunpack.c.l.b16 %v1084
        %v1711 = vunpack.c.h.b16 %v1084
        %v1712 = vunpack.c.l.b16 %v1085
        %v1713 = vunpack.c.h.b16 %v1085
        %v1714 = vunpack.c.l.b16 %v1086
        %v1715 = vunpack.c.h.b16 %v1086
        %v1716 = vunpack.c.l.b16 %v1087
        %v1717 = vunpack.c.h.b16 %v1087
        %v1718 = vunpack.c.l.b16 %v1088
        %v1719 = vunpack.c.h.b16 %v1088
        %v1720 = vunpack.c.l.b16 %v1089
        %v1721 = vunpack.c.h.b16 %v1089
        %v1722 = vunpack.c.l.b16 %v1090
        %v1723 = vunpack.c.h.b16 %v1090
        %v1724 = vunpack.c.l.b16 %v1091
        %v1725 = vunpack.c.h.b16 %v1091
        %v1726 = vunpack.c.l.b16 %v1092
        %v1727 = vunpack.c.h.b16 %v1092
        %v1728 = vunpack.c.l.b16 %v1093
        %v1729 = vunpack.c.h.b16 %v1093
        %v1730 = vunpack.c.l.b16 %v1094
        %v1731 = vunpack.c.h.b16 %v1094
        %v1732 = vunpack.c.l.b16 %v1095
        %v1733 = vunpack.c.h.b16 %v1095
        %v1734 = vunpack.c.l.b16 %v1096
        %v1735 = vunpack.c.h.b16 %v1096
        %v1736 = vunpack.c.l.b16 %v1097
        %v1737 = vunpack.c.h.b16 %v1097
        %v1738 = vunpack.c.l.b16 %v1098
        %v1739 = vunpack.c.h.b16 %v1098
        %v1740 = vunpack.c.l.b16 %v1099
        %v1741 = vunpack.c.h.b16 %v1099
        %v1742 = vunpack.c.l.b16 %v1100
        %v1743 = vunpack.c.h.b16 %v1100
        %v1744 = vunpack.c.l.b16 %v1101
        %v1745 = vunpack.c.h.b16 %v1101
        %v1746 = vunpack.c.l.b16 %v1102
        %v1747 = vunpack.c.h.b16 %v1102
        %v1748 = vunpack.c.l.b16 %v1103
        %v1749 = vunpack.c.h.b16 %v1103
        %v1750 = vunpack.c.l.b16 %v1104
        %v1751 = vunpack.c.h.b16 %v1104
        %v1752 = vunpack.c.l.b16 %v1105
        %v1753 = vunpack.c.h.b16 %v1105
        %v1754 = vunpack.c.l.b16 %v1106
        %v1755 = vunpack.c.h.b16 %v1106
        %v1756 = vunpack.c.l.b16 %v1107
        %v1757 = vunpack.c.h.b16 %v1107
        %v1758 = vunpack.c.l.b16 %v1108
        %v1759 = vunpack.c.h.b16 %v1108
        %v1760 = vunpack.c.l.b16 %v1109
        %v1761 = vunpack.c.h.b16 %v1109
        %v1762 = vunpack.c.l.b16 %v1110
        %v1763 = vunpack.c.h.b16 %v1110
        %v1764 = vunpack.c.l.b16 %v1111
        %v1765 = vunpack.c.h.b16 %v1111
        %v1766 = vunpack.c.l.b16 %v1112
        %v1767 = vunpack.c.h.b16 %v1112
        %v1768 = vunpack.c.l.b16 %v1113
        %v1769 = vunpack.c.h.b16 %v1113
        %v1770 = vunpack.c.l.b16 %v1114
        %v1771 = vunpack.c.h.b16 %v1114
        %v1772 = vunpack.c.l.b16 %v1115
        %v1773 = vunpack.c.h.b16 %v1115
        %v1774 = vunpack.c.l.b16 %v1116
        %v1775 = vunpack.c.h.b16 %v1116
        %v1776 = vunpack.c.l.b16 %v1117
        %v1777 = vunpack.c.h.b16 %v1117
        %v1778 = vunpack.c.l.b16 %v1118
        %v1779 = vunpack.c.h.b16 %v1118
        %v1780 = vunpack.c.l.b16 %v1119
        %v1781 = vunpack.c.h.b16 %v1119
        %v1782 = vunpack.c.l.b16 %v1120
        %v1783 = vunpack.c.h.b16 %v1120
        %v1784 = vunpack.c.l.b16 %v1121
        %v1785 = vunpack.c.h.b16 %v1121
        %v1786 = vunpack.c.l.b16 %v1122
        %v1787 = vunpack.c.h.b16 %v1122
        %v1788 = vunpack.c.l.b16 %v1123
        %v1789 = vunpack.c.h.b16 %v1123
        %v1790 = vunpack.c.l.b16 %v1124
        %v1791 = vunpack.c.h.b16 %v1124
        %v1792 = vunpack.c.l.b16 %v1125
        %v1793 = vunpack.c.h.b16 %v1125
        %v1794 = vunpack.c.l.b16 %v1126
        %v1795 = vunpack.c.h.b16 %v1126
        %v1796 = vunpack.c.l.b16 %v1127
        %v1797 = vunpack.c.h.b16 %v1127
        %v1798 = vunpack.c.l.b16 %v1128
        %v1799 = vunpack.c.h.b16 %v1128
        %v1800 = vunpack.c.l.b16 %v1129
        %v1801 = vunpack.c.h.b16 %v1129
        %v1802 = vunpack.c.l.b16 %v1130
        %v1803 = vunpack.c.h.b16 %v1130
        %v1804 = vunpack.c.l.b16 %v1131
        %v1805 = vunpack.c.h.b16 %v1131
        %v1806 = vunpack.c.l.b16 %v1132
        %v1807 = vunpack.c.h.b16 %v1132
        %v1808 = vunpack.c.l.b16 %v1133
        %v1809 = vunpack.c.h.b16 %v1133
        %v1810 = vunpack.c.l.b16 %v1134
        %v1811 = vunpack.c.h.b16 %v1134
        %v1812 = vunpack.c.l.b16 %v1135
        %v1813 = vunpack.c.h.b16 %v1135
        %v1814 = vunpack.c.l.b16 %v1136
        %v1815 = vunpack.c.h.b16 %v1136
        %v1816 = vunpack.c.l.b16 %v1137
        %v1817 = vunpack.c.h.b16 %v1137
        %v1818 = vunpack.c.l.b16 %v1138
        %v1819 = vunpack.c.h.b16 %v1138
        %v1820 = vunpack.c.l.b16 %v1139
        %v1821 = vunpack.c.h.b16 %v1139
        %v1822 = vunpack.c.l.b16 %v1140
        %v1823 = vunpack.c.h.b16 %v1140
        %v1824 = vunpack.c.l.b16 %v1141
        %v1825 = vunpack.c.h.b16 %v1141
        %v1826 = vunpack.c.l.b16 %v1142
        %v1827 = vunpack.c.h.b16 %v1142
        %v1828 = vunpack.c.l.b16 %v1143
        %v1829 = vunpack.c.h.b16 %v1143
        %v1830 = vunpack.c.l.b16 %v1144
        %v1831 = vunpack.c.h.b16 %v1144
        %v1832 = vunpack.c.l.b16 %v1145
        %v1833 = vunpack.c.h.b16 %v1145
        %v1834 = vunpack.c.l.b16 %v1146
        %v1835 = vunpack.c.h.b16 %v1146
        %v1836 = vunpack.c.l.b16 %v1147
        %v1837 = vunpack.c.h.b16 %v1147
        %v1838 = vunpack.c.l.b16 %v1148
        %v1839 = vunpack.c.h.b16 %v1148
        %v1840 = vunpack.c.l.b16 %v1149
        %v1841 = vunpack.c.h.b16 %v1149
        %v1842 = vunpack.c.l.b16 %v1150
        %v1843 = vunpack.c.h.b16 %v1150
        %v1844 = vunpack.c.l.b16 %v1151
        %v1845 = vunpack.c.h.b16 %v1151
        %v1846 = vunpack.c.l.b16 %v1152
        %v1847 = vunpack.c.h.b16 %v1152
        %v1848 = vunpack.c.l.b16 %v1153
        %v1849 = vunpack.c.h.b16 %v1153
        %v1850 = vunpack.c.l.b16 %v1154
        %v1851 = vunpack.c.h.b16 %v1154
        %v1852 = vunpack.c.l.b16 %v1155
        %v1853 = vunpack.c.h.b16 %v1155
        %v1854 = vunpack.c.l.b16 %v1156
        %v1855 = vunpack.c.h.b16 %v1156
        %v1856 = vunpack.c.l.b16 %v1157
        %v1857 = vunpack.c.h.b16 %v1157
        %v1858 = vunpack.c.l.b16 %v1158
        %v1859 = vunpack.c.h.b16 %v1158
        %v1860 = vunpack.c.l.b16 %v1159
        %v1861 = vunpack.c.h.b16 %v1159
        %v1862 = vunpack.c.l.b16 %v1160
        %v1863 = vunpack.c.h.b16 %v1160
        %v1864 = vunpack.c.l.b16 %v1161
        %v1865 = vunpack.c.h.b16 %v1161
        %v1866 = vunpack.c.l.b16 %v1162
        %v1867 = vunpack.c.h.b16 %v1162
        %v1868 = vunpack.c.l.b16 %v1163
        %v1869 = vunpack.c.h.b16 %v1163
        %v1870 = vunpack.c.l.b16 %v1164
        %v1871 = vunpack.c.h.b16 %v1164
        %v1872 = vunpack.c.l.b16 %v1165
        %v1873 = vunpack.c.h.b16 %v1165
        %v1874 = vunpack.c.l.b16 %v1166
        %v1875 = vunpack.c.h.b16 %v1166
        %v1876 = vunpack.c.l.b16 %v1167
        %v1877 = vunpack.c.h.b16 %v1167
        %v1878 = vunpack.c.l.b16 %v1168
        %v1879 = vunpack.c.h.b16 %v1168
        %v1880 = vunpack.c.l.b16 %v1169
        %v1881 = vunpack.c.h.b16 %v1169
        %v1882 = vunpack.c.l.b16 %v1170
        %v1883 = vunpack.c.h.b16 %v1170
        %v1884 = vunpack.c.l.b16 %v1171
        %v1885 = vunpack.c.h.b16 %v1171
        %v1886 = vunpack.c.l.b16 %v1172
        %v1887 = vunpack.c.h.b16 %v1172
        %v1888 = vunpack.c.l.b16 %v1173
        %v1889 = vunpack.c.h.b16 %v1173
        %v1890 = vunpack.c.l.b16 %v1174
        %v1891 = vunpack.c.h.b16 %v1174
        %v1892 = vunpack.c.l.b16 %v1175
        %v1893 = vunpack.c.h.b16 %v1175
        %v1894 = vunpack.c.l.b16 %v1176
        %v1895 = vunpack.c.h.b16 %v1176
        %v1896 = vunpack.c.l.b16 %v1177
        %v1897 = vunpack.c.h.b16 %v1177
        %v1898 = vunpack.c.l.b16 %v1178
        %v1899 = vunpack.c.h.b16 %v1178
        %v1900 = vunpack.c.l.b16 %v1179
        %v1901 = vunpack.c.h.b16 %v1179
        %v1902 = vunpack.c.l.b16 %v1180
        %v1903 = vunpack.c.h.b16 %v1180
        %v1904 = vunpack.c.l.b16 %v1181
        %v1905 = vunpack.c.h.b16 %v1181
        %v1906 = vunpack.c.l.b16 %v1182
        %v1907 = vunpack.c.h.b16 %v1182
        %v1908 = vunpack.c.l.b16 %v1183
        %v1909 = vunpack.c.h.b16 %v1183
        %v1910 = vunpack.c.l.b16 %v1184
        %v1911 = vunpack.c.h.b16 %v1184
        %v1912 = vunpack.c.l.b16 %v1185
        %v1913 = vunpack.c.h.b16 %v1185
        %v1914 = vunpack.c.l.b16 %v1186
        %v1915 = vunpack.c.h.b16 %v1186
        %v1916 = vunpack.c.l.b16 %v1187
        %v1917 = vunpack.c.h.b16 %v1187
        %v1918 = vunpack.c.l.b16 %v1188
        %v1919 = vunpack.c.h.b16 %v1188
        %v1920 = vunpack.c.l.b16 %v1189
        %v1921 = vunpack.c.h.b16 %v1189
        %v1922 = vunpack.c.l.b16 %v1190
        %v1923 = vunpack.c.h.b16 %v1190
        %v1924 = vunpack.c.l.b16 %v1191
        %v1925 = vunpack.c.h.b16 %v1191
        %v1926 = vunpack.c.l.b16 %v1192
        %v1927 = vunpack.c.h.b16 %v1192
        %v1928 = vunpack.c.l.b16 %v1193
        %v1929 = vunpack.c.h.b16 %v1193
        %v1930 = vunpack.c.l.b16 %v1194
        %v1931 = vunpack.c.h.b16 %v1194
        %v1932 = vunpack.c.l.b16 %v1195
        %v1933 = vunpack.c.h.b16 %v1195
        %v1934 = vunpack.c.l.b16 %v1196
        %v1935 = vunpack.c.h.b16 %v1196
        %v1936 = vunpack.c.l.b16 %v1197
        %v1937 = vunpack.c.h.b16 %v1197
        %v1938 = vunpack.c.l.b16 %v1198
        %v1939 = vunpack.c.h.b16 %v1198
        %v1940 = vunpack.c.l.b16 %v1199
        %v1941 = vunpack.c.h.b16 %v1199
        %v1942 = vunpack.c.l.b16 %v1200
        %v1943 = vunpack.c.h.b16 %v1200
        %v1944 = vunpack.c.l.b16 %v1201
        %v1945 = vunpack.c.h.b16 %v1201
        %v1946 = vunpack.c.l.b16 %v1202
        %v1947 = vunpack.c.h.b16 %v1202
        %v1948 = vunpack.c.l.b16 %v1203
        %v1949 = vunpack.c.h.b16 %v1203
        %v1950 = vunpack.c.l.b16 %v1204
        %v1951 = vunpack.c.h.b16 %v1204
        %v1952 = vunpack.c.l.b16 %v1205
        %v1953 = vunpack.c.h.b16 %v1205
        %v1954 = vunpack.c.l.b16 %v1206
        %v1955 = vunpack.c.h.b16 %v1206
        %v1956 = vunpack.c.l.b16 %v1207
        %v1957 = vunpack.c.h.b16 %v1207
        %v1958 = vunpack.c.l.b16 %v1208
        %v1959 = vunpack.c.h.b16 %v1208
        %v1960 = vunpack.c.l.b16 %v1209
        %v1961 = vunpack.c.h.b16 %v1209
        %v1962 = vunpack.c.l.b16 %v1210
        %v1963 = vunpack.c.h.b16 %v1210
        %v1964 = vunpack.c.l.b16 %v1211
        %v1965 = vunpack.c.h.b16 %v1211
        %v1966 = vunpack.c.l.b16 %v1212
        %v1967 = vunpack.c.h.b16 %v1212
        %v1968 = vunpack.c.l.b16 %v1213
        %v1969 = vunpack.c.h.b16 %v1213
        %v1970 = vunpack.c.l.b16 %v1214
        %v1971 = vunpack.c.h.b16 %v1214
        %v1972 = vunpack.c.l.b16 %v1215
        %v1973 = vunpack.c.h.b16 %v1215
        %v1974 = vunpack.c.l.b16 %v1216
        %v1975 = vunpack.c.h.b16 %v1216
        %v1976 = vunpack.c.l.b16 %v1217
        %v1977 = vunpack.c.h.b16 %v1217
        %v1978 = vunpack.c.l.b16 %v1218
        %v1979 = vunpack.c.h.b16 %v1218
        %v1980 = vunpack.c.l.b16 %v1219
        %v1981 = vunpack.c.h.b16 %v1219
        %v1982 = vunpack.c.l.b16 %v1220
        %v1983 = vunpack.c.h.b16 %v1220
        %v1984 = vunpack.c.l.b16 %v1221
        %v1985 = vunpack.c.h.b16 %v1221
        %v1986 = vunpack.c.l.b16 %v1222
        %v1987 = vunpack.c.h.b16 %v1222
        %v1988 = vunpack.c.l.b16 %v1223
        %v1989 = vunpack.c.h.b16 %v1223
        %v1990 = vunpack.c.l.b16 %v1224
        %v1991 = vunpack.c.h.b16 %v1224
        %v1992 = vunpack.c.l.b16 %v1225
        %v1993 = vunpack.c.h.b16 %v1225
        %v1994 = vunpack.c.l.b16 %v1226
        %v1995 = vunpack.c.h.b16 %v1226
        %v1996 = vunpack.c.l.b16 %v1227
        %v1997 = vunpack.c.h.b16 %v1227
        %v1998 = vunpack.c.l.b16 %v1228
        %v1999 = vunpack.c.h.b16 %v1228
        %v2000 = vunpack.c.l.b16 %v1229
        %v2001 = vunpack.c.h.b16 %v1229
        %v2002 = vunpack.c.l.b16 %v1230
        %v2003 = vunpack.c.h.b16 %v1230
        %v2004 = vunpack.c.l.b16 %v1231
        %v2005 = vunpack.c.h.b16 %v1231
        %v2006 = vunpack.c.l.b16 %v1232
        %v2007 = vunpack.c.h.b16 %v1232
        %v2008 = vunpack.c.l.b16 %v1233
        %v2009 = vunpack.c.h.b16 %v1233
        %v2010 = vunpack.c.l.b16 %v1234
        %v2011 = vunpack.c.h.b16 %v1234
        %v2012 = vunpack.c.l.b16 %v1235
        %v2013 = vunpack.c.h.b16 %v1235
        %v2014 = vunpack.c.l.b16 %v1236
        %v2015 = vunpack.c.h.b16 %v1236
        %v2016 = vunpack.c.l.b16 %v1237
        %v2017 = vunpack.c.h.b16 %v1237
        %v2018 = vunpack.c.l.b16 %v1238
        %v2019 = vunpack.c.h.b16 %v1238
        %v2020 = vunpack.c.l.b16 %v1239
        %v2021 = vunpack.c.h.b16 %v1239
        %v2022 = vunpack.c.l.b16 %v1240
        %v2023 = vunpack.c.h.b16 %v1240
        %v2024 = vunpack.c.l.b16 %v1241
        %v2025 = vunpack.c.h.b16 %v1241
        %v2026 = vunpack.c.l.b16 %v1242
        %v2027 = vunpack.c.h.b16 %v1242
        %v2028 = vunpack.c.l.b16 %v1243
        %v2029 = vunpack.c.h.b16 %v1243
        %v2030 = vunpack.c.l.b16 %v1244
        %v2031 = vunpack.c.h.b16 %v1244
        %v2032 = vunpack.c.l.b16 %v1245
        %v2033 = vunpack.c.h.b16 %v1245
        %v2034 = vunpack.c.l.b16 %v1246
        %v2035 = vunpack.c.h.b16 %v1246
        %v2036 = vunpack.c.l.b16 %v1247
        %v2037 = vunpack.c.h.b16 %v1247
        %v2038 = vunpack.c.l.b16 %v1248
        %v2039 = vunpack.c.h.b16 %v1248
        %v2040 = vunpack.c.l.b16 %v1249
        %v2041 = vunpack.c.h.b16 %v1249
        %v2042 = vunpack.c.l.b16 %v1250
        %v2043 = vunpack.c.h.b16 %v1250
        %v2044 = vunpack.c.l.b16 %v1251
        %v2045 = vunpack.c.h.b16 %v1251
        %v2046 = vunpack.c.l.b16 %v1252
        %v2047 = vunpack.c.h.b16 %v1252
        %v2048 = vunpack.c.l.b16 %v1253
        %v2049 = vunpack.c.h.b16 %v1253
        %v2050 = vunpack.c.l.b16 %v1254
        %v2051 = vunpack.c.h.b16 %v1254
        %v2052 = vunpack.c.l.b16 %v1255
        %v2053 = vunpack.c.h.b16 %v1255
        %v2054 = vunpack.c.l.b16 %v1256
        %v2055 = vunpack.c.h.b16 %v1256
        %v2056 = vunpack.c.l.b16 %v1257
        %v2057 = vunpack.c.h.b16 %v1257
        %v2058 = vunpack.c.l.b16 %v1258
        %v2059 = vunpack.c.h.b16 %v1258
        %v2060 = vunpack.c.l.b16 %v1259
        %v2061 = vunpack.c.h.b16 %v1259
        %v2062 = vunpack.c.l.b16 %v1260
        %v2063 = vunpack.c.h.b16 %v1260
        %v2064 = vunpack.c.l.b16 %v1261
        %v2065 = vunpack.c.h.b16 %v1261
        %v2066 = vunpack.c.l.b16 %v1262
        %v2067 = vunpack.c.h.b16 %v1262
        %v2068 = vunpack.c.l.b16 %v1263
        %v2069 = vunpack.c.h.b16 %v1263
        %v2070 = vunpack.c.l.b16 %v1264
        %v2071 = vunpack.c.h.b16 %v1264
        %v2072 = vunpack.c.l.b16 %v1265
        %v2073 = vunpack.c.h.b16 %v1265
        %v2074 = vunpack.c.l.b16 %v1266
        %v2075 = vunpack.c.h.b16 %v1266
        %v2076 = vunpack.c.l.b16 %v1267
        %v2077 = vunpack.c.h.b16 %v1267
        %v2078 = vunpack.c.l.b16 %v1268
        %v2079 = vunpack.c.h.b16 %v1268
        %v2080 = vunpack.c.l.b16 %v1269
        %v2081 = vunpack.c.h.b16 %v1269
        %v2082 = vunpack.c.l.b16 %v1270
        %v2083 = vunpack.c.h.b16 %v1270
        %v2084 = vunpack.c.l.b16 %v1271
        %v2085 = vunpack.c.h.b16 %v1271
        %v2086 = vunpack.c.l.b16 %v1272
        %v2087 = vunpack.c.h.b16 %v1272
        %v2088 = vunpack.c.l.b16 %v1273
        %v2089 = vunpack.c.h.b16 %v1273
        %v2090 = vunpack.c.l.b16 %v1274
        %v2091 = vunpack.c.h.b16 %v1274
        %v2092 = vunpack.c.l.b16 %v1275
        %v2093 = vunpack.c.h.b16 %v1275
        %v2094 = vunpack.c.l.b16 %v1276
        %v2095 = vunpack.c.h.b16 %v1276
        %v2096 = vunpack.c.l.b16 %v1277
        %v2097 = vunpack.c.h.b16 %v1277
        %v2098 = vunpack.c.l.b16 %v1278
        %v2099 = vunpack.c.h.b16 %v1278
        %v2100 = vunpack.c.l.b16 %v1279
        %v2101 = vunpack.c.h.b16 %v1279
        %v2102 = vunpack.c.l.b16 %v1280
        %v2103 = vunpack.c.h.b16 %v1280
        %v2104 = vunpack.c.l.b16 %v1281
        %v2105 = vunpack.c.h.b16 %v1281
        %v2106 = vunpack.c.l.b16 %v1282
        %v2107 = vunpack.c.h.b16 %v1282
        %v2108 = vunpack.c.l.b16 %v1283
        %v2109 = vunpack.c.h.b16 %v1283
        %v2110 = vunpack.c.l.b16 %v1284
        %v2111 = vunpack.c.h.b16 %v1284
        %v2112 = vunpack.c.l.b16 %v1285
        %v2113 = vunpack.c.h.b16 %v1285
        %v2114 = vunpack.c.l.b16 %v1286
        %v2115 = vunpack.c.h.b16 %v1286
        %v2116 = vunpack.c.l.b16 %v1287
        %v2117 = vunpack.c.h.b16 %v1287
        %v2118 = vunpack.c.l.b16 %v1288
        %v2119 = vunpack.c.h.b16 %v1288
        %v2120 = vunpack.c.l.b16 %v1289
        %v2121 = vunpack.c.h.b16 %v1289
        %v2122 = vunpack.c.l.b16 %v1290
        %v2123 = vunpack.c.h.b16 %v1290
        %v2124 = vunpack.c.l.b16 %v1291
        %v2125 = vunpack.c.h.b16 %v1291
        %v2126 = vunpack.c.l.b16 %v1292
        %v2127 = vunpack.c.h.b16 %v1292
        %v2128 = vunpack.c.l.b16 %v1293
        %v2129 = vunpack.c.h.b16 %v1293
        %v2130 = vunpack.c.l.b16 %v1294
        %v2131 = vunpack.c.h.b16 %v1294
        %v2132 = vunpack.c.l.b16 %v1295
        %v2133 = vunpack.c.h.b16 %v1295
        %v2134 = vunpack.c.l.b16 %v1296
        %v2135 = vunpack.c.h.b16 %v1296
        %v2136 = vunpack.c.l.b16 %v1297
        %v2137 = vunpack.c.h.b16 %v1297
        %v2138 = vunpack.c.l.b16 %v1298
        %v2139 = vunpack.c.h.b16 %v1298
        %v2140 = vunpack.c.l.b16 %v1299
        %v2141 = vunpack.c.h.b16 %v1299
        %v2142 = vunpack.c.l.b16 %v1300
        %v2143 = vunpack.c.h.b16 %v1300
        %v2144 = vunpack.c.l.b16 %v1301
        %v2145 = vunpack.c.h.b16 %v1301
        %v2146 = vunpack.c.l.b16 %v1302
        %v2147 = vunpack.c.h.b16 %v1302
        %v2148 = vunpack.c.l.b16 %v1303
        %v2149 = vunpack.c.h.b16 %v1303
        %v2150 = vunpack.c.l.b16 %v1304
        %v2151 = vunpack.c.h.b16 %v1304
        %v2152 = vunpack.c.l.b16 %v1305
        %v2153 = vunpack.c.h.b16 %v1305
        %v2154 = vpack.c.b16 %v1646, %v1642
        %v2155 = vpack.c.b16 %v1647, %v1643
        %v2156 = vpack.c.b16 %v1648, %v1644
        %v2157 = vpack.c.b16 %v1649, %v1645
        %v2158 = vpack.c.b16 %v1654, %v1650
        %v2159 = vpack.c.b16 %v1655, %v1651
        %v2160 = vpack.c.b16 %v1656, %v1652
        %v2161 = vpack.c.b16 %v1657, %v1653
        %v2162 = vpack.c.b16 %v1662, %v1658
        %v2163 = vpack.c.b16 %v1663, %v1659
        %v2164 = vpack.c.b16 %v1664, %v1660
        %v2165 = vpack.c.b16 %v1665, %v1661
        %v2166 = vpack.c.b16 %v1670, %v1666
        %v2167 = vpack.c.b16 %v1671, %v1667
        %v2168 = vpack.c.b16 %v1672, %v1668
        %v2169 = vpack.c.b16 %v1673, %v1669
        %v2170 = vpack.c.b16 %v1678, %v1674
        %v2171 = vpack.c.b16 %v1679, %v1675
        %v2172 = vpack.c.b16 %v1680, %v1676
        %v2173 = vpack.c.b16 %v1681, %v1677
        %v2174 = vpack.c.b16 %v1686, %v1682
        %v2175 = vpack.c.b16 %v1687, %v1683
        %v2176 = vpack.c.b16 %v1688, %v1684
        %v2177 = vpack.c.b16 %v1689, %v1685
        %v2178 = vpack.c.b16 %v1694, %v1690
        %v2179 = vpack.c.b16 %v1695, %v1691
        %v2180 = vpack.c.b16 %v1696, %v1692
        %v2181 = vpack.c.b16 %v1697, %v1693
        %v2182 = vpack.c.b16 %v1702, %v1698
        %v2183 = vpack.c.b16 %v1703, %v1699
        %v2184 = vpack.c.b16 %v1704, %v1700
        %v2185 = vpack.c.b16 %v1705, %v1701
        %v2186 = vpack.c.b16 %v1710, %v1706
        %v2187 = vpack.c.b16 %v1711, %v1707
        %v2188 = vpack.c.b16 %v1712, %v1708
        %v2189 = vpack.c.b16 %v1713, %v1709
        %v2190 = vpack.c.b16 %v1718, %v1714
        %v2191 = vpack.c.b16 %v1719, %v1715
        %v2192 = vpack.c.b16 %v1720, %v1716
        %v2193 = vpack.c.b16 %v1721, %v1717
        %v2194 = vpack.c.b16 %v1726, %v1722
        %v2195 = vpack.c.b16 %v1727, %v1723
        %v2196 = vpack.c.b16 %v1728, %v1724
        %v2197 = vpack.c.b16 %v1729, %v1725
        %v2198 = vpack.c.b16 %v1734, %v1730
        %v2199 = vpack.c.b16 %v1735, %v1731
        %v2200 = vpack.c.b16 %v1736, %v1732
        %v2201 = vpack.c.b16 %v1737, %v1733
        %v2202 = vpack.c.b16 %v1742, %v1738
        %v2203 = vpack.c.b16 %v1743, %v1739
        %v2204 = vpack.c.b16 %v1744, %v1740
        %v2205 = vpack.c.b16 %v1745, %v1741
        %v2206 = vpack.c.b16 %v1750, %v1746
        %v2207 = vpack.c.b16 %v1751, %v1747
        %v2208 = vpack.c.b16 %v1752, %v1748
        %v2209 = vpack.c.b16 %v1753, %v1749
        %v2210 = vpack.c.b16 %v1758, %v1754
        %v2211 = vpack.c.b16 %v1759, %v1755
        %v2212 = vpack.c.b16 %v1760, %v1756
        %v2213 = vpack.c.b16 %v1761, %v1757
        %v2214 = vpack.c.b16 %v1766, %v1762
        %v2215 = vpack.c.b16 %v1767, %v1763
        %v2216 = vpack.c.b16 %v1768, %v1764
        %v2217 = vpack.c.b16 %v1769, %v1765
        %v2218 = vpack.c.b16 %v1774, %v1770
        %v2219 = vpack.c.b16 %v1775, %v1771
        %v2220 = vpack.c.b16 %v1776, %v1772
        %v2221 = vpack.c.b16 %v1777, %v1773
        %v2222 = vpack.c.b16 %v1782, %v1778
        %v2223 = vpack.c.b16 %v1783, %v1779
        %v2224 = vpack.c.b16 %v1784, %v1780
        %v2225 = vpack.c.b16 %v1785, %v1781
        %v2226 = vpack.c.b16 %v1790, %v1786
        %v2227 = vpack.c.b16 %v1791, %v1787
        %v2228 = vpack.c.b16 %v1792, %v1788
        %v2229 = vpack.c.b16 %v1793, %v1789
        %v2230 = vpack.c.b16 %v1798, %v1794
        %v2231 = vpack.c.b16 %v1799, %v1795
        %v2232 = vpack.c.b16 %v1800, %v1796
        %v2233 = vpack.c.b16 %v1801, %v1797
        %v2234 = vpack.c.b16 %v1806, %v1802
        %v2235 = vpack.c.b16 %v1807, %v1803
        %v2236 = vpack.c.b16 %v1808, %v1804
        %v2237 = vpack.c.b16 %v1809, %v1805
        %v2238 = vpack.c.b16 %v1814, %v1810
        %v2239 = vpack.c.b16 %v1815, %v1811
        %v2240 = vpack.c.b16 %v1816, %v1812
        %v2241 = vpack.c.b16 %v1817, %v1813
        %v2242 = vpack.c.b16 %v1822, %v1818
        %v2243 = vpack.c.b16 %v1823, %v1819
        %v2244 = vpack.c.b16 %v1824, %v1820
        %v2245 = vpack.c.b16 %v1825, %v1821
        %v2246 = vpack.c.b16 %v1830, %v1826
        %v2247 = vpack.c.b16 %v1831, %v1827
        %v2248 = vpack.c.b16 %v1832, %v1828
        %v2249 = vpack.c.b16 %v1833, %v1829
        %v2250 = vpack.c.b16 %v1838, %v1834
        %v2251 = vpack.c.b16 %v1839, %v1835
        %v2252 = vpack.c.b16 %v1840, %v1836
        %v2253 = vpack.c.b16 %v1841, %v1837
        %v2254 = vpack.c.b16 %v1846, %v1842
        %v2255 = vpack.c.b16 %v1847, %v1843
        %v2256 = vpack.c.b16 %v1848, %v1844
        %v2257 = vpack.c.b16 %v1849, %v1845
        %v2258 = vpack.c.b16 %v1854, %v1850
        %v2259 = vpack.c.b16 %v1855, %v1851
        %v2260 = vpack.c.b16 %v1856, %v1852
        %v2261 = vpack.c.b16 %v1857, %v1853
        %v2262 = vpack.c.b16 %v1862, %v1858
        %v2263 = vpack.c.b16 %v1863, %v1859
        %v2264 = vpack.c.b16 %v1864, %v1860
        %v2265 = vpack.c.b16 %v1865, %v1861
        %v2266 = vpack.c.b16 %v1870, %v1866
        %v2267 = vpack.c.b16 %v1871, %v1867
        %v2268 = vpack.c.b16 %v1872, %v1868
        %v2269 = vpack.c.b16 %v1873, %v1869
        %v2270 = vpack.c.b16 %v1878, %v1874
        %v2271 = vpack.c.b16 %v1879, %v1875
        %v2272 = vpack.c.b16 %v1880, %v1876
        %v2273 = vpack.c.b16 %v1881, %v1877
        %v2274 = vpack.c.b16 %v1886, %v1882
        %v2275 = vpack.c.b16 %v1887, %v1883
        %v2276 = vpack.c.b16 %v1888, %v1884
        %v2277 = vpack.c.b16 %v1889, %v1885
        %v2278 = vpack.c.b16 %v1894, %v1890
        %v2279 = vpack.c.b16 %v1895, %v1891
        %v2280 = vpack.c.b16 %v1896, %v1892
        %v2281 = vpack.c.b16 %v1897, %v1893
        %v2282 = vpack.c.b16 %v1902, %v1898
        %v2283 = vpack.c.b16 %v1903, %v1899
        %v2284 = vpack.c.b16 %v1904, %v1900
        %v2285 = vpack.c.b16 %v1905, %v1901
        %v2286 = vpack.c.b16 %v1910, %v1906
        %v2287 = vpack.c.b16 %v1911, %v1907
        %v2288 = vpack.c.b16 %v1912, %v1908
        %v2289 = vpack.c.b16 %v1913, %v1909
        %v2290 = vpack.c.b16 %v1918, %v1914
        %v2291 = vpack.c.b16 %v1919, %v1915
        %v2292 = vpack.c.b16 %v1920, %v1916
        %v2293 = vpack.c.b16 %v1921, %v1917
        %v2294 = vpack.c.b16 %v1926, %v1922
        %v2295 = vpack.c.b16 %v1927, %v1923
        %v2296 = vpack.c.b16 %v1928, %v1924
        %v2297 = vpack.c.b16 %v1929, %v1925
        %v2298 = vpack.c.b16 %v1934, %v1930
        %v2299 = vpack.c.b16 %v1935, %v1931
        %v2300 = vpack.c.b16 %v1936, %v1932
        %v2301 = vpack.c.b16 %v1937, %v1933
        %v2302 = vpack.c.b16 %v1942, %v1938
        %v2303 = vpack.c.b16 %v1943, %v1939
        %v2304 = vpack.c.b16 %v1944, %v1940
        %v2305 = vpack.c.b16 %v1945, %v1941
        %v2306 = vpack.c.b16 %v1950, %v1946
        %v2307 = vpack.c.b16 %v1951, %v1947
        %v2308 = vpack.c.b16 %v1952, %v1948
        %v2309 = vpack.c.b16 %v1953, %v1949
        %v2310 = vpack.c.b16 %v1958, %v1954
        %v2311 = vpack.c.b16 %v1959, %v1955
        %v2312 = vpack.c.b16 %v1960, %v1956
        %v2313 = vpack.c.b16 %v1961, %v1957
        %v2314 = vpack.c.b16 %v1966, %v1962
        %v2315 = vpack.c.b16 %v1967, %v1963
        %v2316 = vpack.c.b16 %v1968, %v1964
        %v2317 = vpack.c.b16 %v1969, %v1965
        %v2318 = vpack.c.b16 %v1974, %v1970
        %v2319 = vpack.c.b16 %v1975, %v1971
        %v2320 = vpack.c.b16 %v1976, %v1972
        %v2321 = vpack.c.b16 %v1977, %v1973
        %v2322 = vpack.c.b16 %v1982, %v1978
        %v2323 = vpack.c.b16 %v1983, %v1979
        %v2324 = vpack.c.b16 %v1984, %v1980
        %v2325 = vpack.c.b16 %v1985, %v1981
        %v2326 = vpack.c.b16 %v1990, %v1986
        %v2327 = vpack.c.b16 %v1991, %v1987
        %v2328 = vpack.c.b16 %v1992, %v1988
        %v2329 = vpack.c.b16 %v1993, %v1989
        %v2330 = vpack.c.b16 %v1998, %v1994
        %v2331 = vpack.c.b16 %v1999, %v1995
        %v2332 = vpack.c.b16 %v2000, %v1996
        %v2333 = vpack.c.b16 %v2001, %v1997
        %v2334 = vpack.c.b16 %v2006, %v2002
        %v2335 = vpack.c.b16 %v2007, %v2003
        %v2336 = vpack.c.b16 %v2008, %v2004
        %v2337 = vpack.c.b16 %v2009, %v2005
        %v2338 = vpack.c.b16 %v2014, %v2010
        %v2339 = vpack.c.b16 %v2015, %v2011
        %v2340 = vpack.c.b16 %v2016, %v2012
        %v2341 = vpack.c.b16 %v2017, %v2013
        %v2342 = vpack.c.b16 %v2022, %v2018
        %v2343 = vpack.c.b16 %v2023, %v2019
        %v2344 = vpack.c.b16 %v2024, %v2020
        %v2345 = vpack.c.b16 %v2025, %v2021
        %v2346 = vpack.c.b16 %v2030, %v2026
        %v2347 = vpack.c.b16 %v2031, %v2027
        %v2348 = vpack.c.b16 %v2032, %v2028
        %v2349 = vpack.c.b16 %v2033, %v2029
        %v2350 = vpack.c.b16 %v2038, %v2034
        %v2351 = vpack.c.b16 %v2039, %v2035
        %v2352 = vpack.c.b16 %v2040, %v2036
        %v2353 = vpack.c.b16 %v2041, %v2037
        %v2354 = vpack.c.b16 %v2046, %v2042
        %v2355 = vpack.c.b16 %v2047, %v2043
        %v2356 = vpack.c.b16 %v2048, %v2044
        %v2357 = vpack.c.b16 %v2049, %v2045
        %v2358 = vpack.c.b16 %v2054, %v2050
        %v2359 = vpack.c.b16 %v2055, %v2051
        %v2360 = vpack.c.b16 %v2056, %v2052
        %v2361 = vpack.c.b16 %v2057, %v2053
        %v2362 = vpack.c.b16 %v2062, %v2058
        %v2363 = vpack.c.b16 %v2063, %v2059
        %v2364 = vpack.c.b16 %v2064, %v2060
        %v2365 = vpack.c.b16 %v2065, %v2061
        %v2366 = vpack.c.b16 %v2070, %v2066
        %v2367 = vpack.c.b16 %v2071, %v2067
        %v2368 = vpack.c.b16 %v2072, %v2068
        %v2369 = vpack.c.b16 %v2073, %v2069
        %v2370 = vpack.c.b16 %v2078, %v2074
        %v2371 = vpack.c.b16 %v2079, %v2075
        %v2372 = vpack.c.b16 %v2080, %v2076
        %v2373 = vpack.c.b16 %v2081, %v2077
        %v2374 = vpack.c.b16 %v2086, %v2082
        %v2375 = vpack.c.b16 %v2087, %v2083
        %v2376 = vpack.c.b16 %v2088, %v2084
        %v2377 = vpack.c.b16 %v2089, %v2085
        %v2378 = vpack.c.b16 %v2094, %v2090
        %v2379 = vpack.c.b16 %v2095, %v2091
        %v2380 = vpack.c.b16 %v2096, %v2092
        %v2381 = vpack.c.b16 %v2097, %v2093
        %v2382 = vpack.c.b16 %v2102, %v2098
        %v2383 = vpack.c.b16 %v2103, %v2099
        %v2384 = vpack.c.b16 %v2104, %v2100
        %v2385 = vpack.c.b16 %v2105, %v2101
        %v2386 = vpack.c.b16 %v2110, %v2106
        %v2387 = vpack.c.b16 %v2111, %v2107
        %v2388 = vpack.c.b16 %v2112, %v2108
        %v2389 = vpack.c.b16 %v2113, %v2109
        %v2390 = vpack.c.b16 %v2118, %v2114
        %v2391 = vpack.c.b16 %v2119, %v2115
        %v2392 = vpack.c.b16 %v2120, %v2116
        %v2393 = vpack.c.b16 %v2121, %v2117
        %v2394 = vpack.c.b16 %v2126, %v2122
        %v2395 = vpack.c.b16 %v2127, %v2123
        %v2396 = vpack.c.b16 %v2128, %v2124
        %v2397 = vpack.c.b16 %v2129, %v2125
        %v2398 = vpack.c.b16 %v2134, %v2130
        %v2399 = vpack.c.b16 %v2135, %v2131
        %v2400 = vpack.c.b16 %v2136, %v2132
        %v2401 = vpack.c.b16 %v2137, %v2133
        %v2402 = vpack.c.b16 %v2142, %v2138
        %v2403 = vpack.c.b16 %v2143, %v2139
        %v2404 = vpack.c.b16 %v2144, %v2140
        %v2405 = vpack.c.b16 %v2145, %v2141
        %v2406 = vpack.c.b16 %v2150, %v2146
        %v2407 = vpack.c.b16 %v2151, %v2147
        %v2408 = vpack.c.b16 %v2152, %v2148
        %v2409 = vpack.c.b16 %v2153, %v2149
        %2666 = vmatprep.subr.bf16.mxu0 %v2183
        %2667 = vmatpush1.bf16.msra.mxu0 %v2182
        %2668 = vmatprep.subr.bf16.mxu0 %v2179
        %2669 = vmatpush1.bf16.msra.mxu0 %v2178
        %2670 = vmatprep.subr.bf16.mxu0 %v2175
        %2671 = vmatpush1.bf16.msra.mxu0 %v2174
        %2672 = vmatprep.subr.bf16.mxu0 %v2171
        %2673 = vmatpush1.bf16.msra.mxu0 %v2170
        %2674 = vmatprep.subr.bf16.mxu0 %v2167
        %2675 = vmatpush1.bf16.msra.mxu0 %v2166
        %2676 = vmatprep.subr.bf16.mxu0 %v2163
        %2677 = vmatpush1.bf16.msra.mxu0 %v2162
        %2678 = vmatprep.subr.bf16.mxu0 %v2159
        %2679 = vmatpush1.bf16.msra.mxu0 %v2158
        %2680 = vmatprep.subr.bf16.mxu0 %v2155
        %2681 = vmatpush1.bf16.msra.mxu0 %v2154
        %2682 = vmatprep.subr.bf16.mxu0 %v2215
        %2683 = vmatpush2.bf16.msra.mxu0 %v2214
        %2684 = vmatprep.subr.bf16.mxu0 %v2211
        %2685 = vmatpush2.bf16.msra.mxu0 %v2210
        %2686 = vmatprep.subr.bf16.mxu0 %v2207
        %2687 = vmatpush2.bf16.msra.mxu0 %v2206
        %2688 = vmatprep.subr.bf16.mxu0 %v2203
        %2689 = vmatpush2.bf16.msra.mxu0 %v2202
        %2690 = vmatprep.subr.bf16.mxu0 %v2199
        %2691 = vmatpush2.bf16.msra.mxu0 %v2198
        %2692 = vmatprep.subr.bf16.mxu0 %v2195
        %2693 = vmatpush2.bf16.msra.mxu0 %v2194
        %2694 = vmatprep.subr.bf16.mxu0 %v2191
        %2695 = vmatpush2.bf16.msra.mxu0 %v2190
        %2696 = vmatprep.subr.bf16.mxu0 %v2187
        %2697 = vmatpush2.bf16.msra.mxu0 %v2186
        %2698 = vmatprep.mubr.bf16.mxu0 %v1366
        %2699 = vmatmul.mubr.bf16.gmra.mxu0 %v1352
        %v2700 = vpop.f32.mrf.mxu0
        %v2701 = vadd.f32 %v1311, %v2700
        %v2702 = vpop.f32.mrf.mxu0
        %v2703 = vadd.f32 %v1315, %v2702
        %v2704 = vpop.f32.mrf.mxu0
        %v2705 = vpop.f32.mrf.mxu0
        %2706 = vdwg.mxu0
        %2707 = vmatprep.subr.bf16.mxu0 %v2247
        %2708 = vmatpush1.bf16.msra.mxu0 %v2246
        %2709 = vmatprep.subr.bf16.mxu0 %v2243
        %2710 = vmatpush1.bf16.msra.mxu0 %v2242
        %2711 = vmatprep.subr.bf16.mxu0 %v2239
        %2712 = vmatpush1.bf16.msra.mxu0 %v2238
        %2713 = vmatprep.subr.bf16.mxu0 %v2235
        %2714 = vmatpush1.bf16.msra.mxu0 %v2234
        %2715 = vmatprep.subr.bf16.mxu0 %v2231
        %2716 = vmatpush1.bf16.msra.mxu0 %v2230
        %2717 = vmatprep.subr.bf16.mxu0 %v2227
        %2718 = vmatpush1.bf16.msra.mxu0 %v2226
        %2719 = vmatprep.subr.bf16.mxu0 %v2223
        %2720 = vmatpush1.bf16.msra.mxu0 %v2222
        %2721 = vmatprep.subr.bf16.mxu0 %v2219
        %2722 = vmatpush1.bf16.msra.mxu0 %v2218
        %2723 = vmatprep.subr.bf16.mxu0 %v2279
        %2724 = vmatpush2.bf16.msra.mxu0 %v2278
        %2725 = vmatprep.subr.bf16.mxu0 %v2275
        %2726 = vmatpush2.bf16.msra.mxu0 %v2274
        %2727 = vmatprep.subr.bf16.mxu0 %v2271
        %2728 = vmatpush2.bf16.msra.mxu0 %v2270
        %2729 = vmatprep.subr.bf16.mxu0 %v2267
        %2730 = vmatpush2.bf16.msra.mxu0 %v2266
        %2731 = vmatprep.subr.bf16.mxu0 %v2263
        %2732 = vmatpush2.bf16.msra.mxu0 %v2262
        %2733 = vmatprep.subr.bf16.mxu0 %v2259
        %2734 = vmatpush2.bf16.msra.mxu0 %v2258
        %2735 = vmatprep.subr.bf16.mxu0 %v2255
        %2736 = vmatpush2.bf16.msra.mxu0 %v2254
        %2737 = vmatprep.subr.bf16.mxu0 %v2251
        %2738 = vmatpush2.bf16.msra.mxu0 %v2250
        %2739 = vmatprep.mubr.bf16.mxu0 %v1376
        %2740 = vmatmul.mubr.bf16.gmra.mxu0 %v1374
        %v2741 = vpop.f32.mrf.mxu0
        %v2742 = vadd.f32 %v2701, %v2741
        %v2743 = vpop.f32.mrf.mxu0
        %v2744 = vadd.f32 %v2703, %v2743
        %v2745 = vpop.f32.mrf.mxu0
        %v2746 = vpop.f32.mrf.mxu0
        %2747 = vdwg.mxu0
        %2748 = vmatprep.subr.bf16.mxu0 %v2311
        %2749 = vmatpush1.bf16.msra.mxu0 %v2310
        %2750 = vmatprep.subr.bf16.mxu0 %v2307
        %2751 = vmatpush1.bf16.msra.mxu0 %v2306
        %2752 = vmatprep.subr.bf16.mxu0 %v2303
        %2753 = vmatpush1.bf16.msra.mxu0 %v2302
        %2754 = vmatprep.subr.bf16.mxu0 %v2299
        %2755 = vmatpush1.bf16.msra.mxu0 %v2298
        %2756 = vmatprep.subr.bf16.mxu0 %v2295
        %2757 = vmatpush1.bf16.msra.mxu0 %v2294
        %2758 = vmatprep.subr.bf16.mxu0 %v2291
        %2759 = vmatpush1.bf16.msra.mxu0 %v2290
        %2760 = vmatprep.subr.bf16.mxu0 %v2287
        %2761 = vmatpush1.bf16.msra.mxu0 %v2286
        %2762 = vmatprep.subr.bf16.mxu0 %v2283
        %2763 = vmatpush1.bf16.msra.mxu0 %v2282
        %2764 = vmatprep.subr.bf16.mxu0 %v2343
        %2765 = vmatpush2.bf16.msra.mxu0 %v2342
        %2766 = vmatprep.subr.bf16.mxu0 %v2339
        %2767 = vmatpush2.bf16.msra.mxu0 %v2338
        %2768 = vmatprep.subr.bf16.mxu0 %v2335
        %2769 = vmatpush2.bf16.msra.mxu0 %v2334
        %2770 = vmatprep.subr.bf16.mxu0 %v2331
        %2771 = vmatpush2.bf16.msra.mxu0 %v2330
        %2772 = vmatprep.subr.bf16.mxu0 %v2327
        %2773 = vmatpush2.bf16.msra.mxu0 %v2326
        %2774 = vmatprep.subr.bf16.mxu0 %v2323
        %2775 = vmatpush2.bf16.msra.mxu0 %v2322
        %2776 = vmatprep.subr.bf16.mxu0 %v2319
        %2777 = vmatpush2.bf16.msra.mxu0 %v2318
        %2778 = vmatprep.subr.bf16.mxu0 %v2315
        %2779 = vmatpush2.bf16.msra.mxu0 %v2314
        %2780 = vmatprep.mubr.bf16.mxu0 %v1373
        %2781 = vmatmul.mubr.bf16.gmra.mxu0 %v1359
        %v2782 = vpop.f32.mrf.mxu0
        %v2783 = vadd.f32 %v2742, %v2782
        %v2784 = vpop.f32.mrf.mxu0
        %v2785 = vadd.f32 %v2744, %v2784
        %v2786 = vpop.f32.mrf.mxu0
        %v2787 = vpop.f32.mrf.mxu0
        %2788 = vdwg.mxu0
        %2789 = vmatprep.subr.bf16.mxu0 %v2375
        %2790 = vmatpush1.bf16.msra.mxu0 %v2374
        %2791 = vmatprep.subr.bf16.mxu0 %v2371
        %2792 = vmatpush1.bf16.msra.mxu0 %v2370
        %2793 = vmatprep.subr.bf16.mxu0 %v2367
        %2794 = vmatpush1.bf16.msra.mxu0 %v2366
        %2795 = vmatprep.subr.bf16.mxu0 %v2363
        %2796 = vmatpush1.bf16.msra.mxu0 %v2362
        %2797 = vmatprep.subr.bf16.mxu0 %v2359
        %2798 = vmatpush1.bf16.msra.mxu0 %v2358
        %2799 = vmatprep.subr.bf16.mxu0 %v2355
        %2800 = vmatpush1.bf16.msra.mxu0 %v2354
        %2801 = vmatprep.subr.bf16.mxu0 %v2351
        %2802 = vmatpush1.bf16.msra.mxu0 %v2350
        %2803 = vmatprep.subr.bf16.mxu0 %v2347
        %2804 = vmatpush1.bf16.msra.mxu0 %v2346
        %2805 = vmatprep.subr.bf16.mxu0 %v2407
        %2806 = vmatpush2.bf16.msra.mxu0 %v2406
        %2807 = vmatprep.subr.bf16.mxu0 %v2403
        %2808 = vmatpush2.bf16.msra.mxu0 %v2402
        %2809 = vmatprep.subr.bf16.mxu0 %v2399
        %2810 = vmatpush2.bf16.msra.mxu0 %v2398
        %2811 = vmatprep.subr.bf16.mxu0 %v2395
        %2812 = vmatpush2.bf16.msra.mxu0 %v2394
        %2813 = vmatprep.subr.bf16.mxu0 %v2391
        %2814 = vmatpush2.bf16.msra.mxu0 %v2390
        %2815 = vmatprep.subr.bf16.mxu0 %v2387
        %2816 = vmatpush2.bf16.msra.mxu0 %v2386
        %2817 = vmatprep.subr.bf16.mxu0 %v2383
        %2818 = vmatpush2.bf16.msra.mxu0 %v2382
        %2819 = vmatprep.subr.bf16.mxu0 %v2379
        %2820 = vmatpush2.bf16.msra.mxu0 %v2378
        %2821 = vmatprep.mubr.bf16.mxu0 %v1377
        %2822 = vmatmul.mubr.bf16.gmra.mxu0 %v1375
        %v2823 = vpop.f32.mrf.mxu0
        %v2824 = vadd.f32 %v2783, %v2823
        %v2825 = vpop.f32.mrf.mxu0
        %v2826 = vadd.f32 %v2785, %v2825
        %v2827 = vpop.f32.mrf.mxu0
        %v2828 = vpop.f32.mrf.mxu0
        %2829 = vdwg.mxu0
        %2830 = vmatprep.subr.bf16.mxu0 %v2185
        %2831 = vmatpush1.bf16.msra.mxu0 %v2184
        %2832 = vmatprep.subr.bf16.mxu0 %v2181
        %2833 = vmatpush1.bf16.msra.mxu0 %v2180
        %2834 = vmatprep.subr.bf16.mxu0 %v2177
        %2835 = vmatpush1.bf16.msra.mxu0 %v2176
        %2836 = vmatprep.subr.bf16.mxu0 %v2173
        %2837 = vmatpush1.bf16.msra.mxu0 %v2172
        %2838 = vmatprep.subr.bf16.mxu0 %v2169
        %2839 = vmatpush1.bf16.msra.mxu0 %v2168
        %2840 = vmatprep.subr.bf16.mxu0 %v2165
        %2841 = vmatpush1.bf16.msra.mxu0 %v2164
        %2842 = vmatprep.subr.bf16.mxu0 %v2161
        %2843 = vmatpush1.bf16.msra.mxu0 %v2160
        %2844 = vmatprep.subr.bf16.mxu0 %v2157
        %2845 = vmatpush1.bf16.msra.mxu0 %v2156
        %2846 = vmatprep.subr.bf16.mxu0 %v2217
        %2847 = vmatpush2.bf16.msra.mxu0 %v2216
        %2848 = vmatprep.subr.bf16.mxu0 %v2213
        %2849 = vmatpush2.bf16.msra.mxu0 %v2212
        %2850 = vmatprep.subr.bf16.mxu0 %v2209
        %2851 = vmatpush2.bf16.msra.mxu0 %v2208
        %2852 = vmatprep.subr.bf16.mxu0 %v2205
        %2853 = vmatpush2.bf16.msra.mxu0 %v2204
        %2854 = vmatprep.subr.bf16.mxu0 %v2201
        %2855 = vmatpush2.bf16.msra.mxu0 %v2200
        %2856 = vmatprep.subr.bf16.mxu0 %v2197
        %2857 = vmatpush2.bf16.msra.mxu0 %v2196
        %2858 = vmatprep.subr.bf16.mxu0 %v2193
        %2859 = vmatpush2.bf16.msra.mxu0 %v2192
        %2860 = vmatprep.subr.bf16.mxu0 %v2189
        %2861 = vmatpush2.bf16.msra.mxu0 %v2188
        %2862 = vmatprep.mubr.bf16.mxu0 %v1366
        %2863 = vmatmul.mubr.bf16.gmra.mxu0 %v1352
        %v2864 = vpop.f32.mrf.mxu0
        %v2865 = vadd.f32 %v1319, %v2864
        %v2866 = vpop.f32.mrf.mxu0
        %v2867 = vadd.f32 %v1323, %v2866
        %v2868 = vpop.f32.mrf.mxu0
        %v2869 = vpop.f32.mrf.mxu0
        %2870 = vdwg.mxu0
        %2871 = vmatprep.subr.bf16.mxu0 %v2249
        %2872 = vmatpush1.bf16.msra.mxu0 %v2248
        %2873 = vmatprep.subr.bf16.mxu0 %v2245
        %2874 = vmatpush1.bf16.msra.mxu0 %v2244
        %2875 = vmatprep.subr.bf16.mxu0 %v2241
        %2876 = vmatpush1.bf16.msra.mxu0 %v2240
        %2877 = vmatprep.subr.bf16.mxu0 %v2237
        %2878 = vmatpush1.bf16.msra.mxu0 %v2236
        %2879 = vmatprep.subr.bf16.mxu0 %v2233
        %2880 = vmatpush1.bf16.msra.mxu0 %v2232
        %2881 = vmatprep.subr.bf16.mxu0 %v2229
        %2882 = vmatpush1.bf16.msra.mxu0 %v2228
        %2883 = vmatprep.subr.bf16.mxu0 %v2225
        %2884 = vmatpush1.bf16.msra.mxu0 %v2224
        %2885 = vmatprep.subr.bf16.mxu0 %v2221
        %2886 = vmatpush1.bf16.msra.mxu0 %v2220
        %2887 = vmatprep.subr.bf16.mxu0 %v2281
        %2888 = vmatpush2.bf16.msra.mxu0 %v2280
        %2889 = vmatprep.subr.bf16.mxu0 %v2277
        %2890 = vmatpush2.bf16.msra.mxu0 %v2276
        %2891 = vmatprep.subr.bf16.mxu0 %v2273
        %2892 = vmatpush2.bf16.msra.mxu0 %v2272
        %2893 = vmatprep.subr.bf16.mxu0 %v2269
        %2894 = vmatpush2.bf16.msra.mxu0 %v2268
        %2895 = vmatprep.subr.bf16.mxu0 %v2265
        %2896 = vmatpush2.bf16.msra.mxu0 %v2264
        %2897 = vmatprep.subr.bf16.mxu0 %v2261
        %2898 = vmatpush2.bf16.msra.mxu0 %v2260
        %2899 = vmatprep.subr.bf16.mxu0 %v2257
        %2900 = vmatpush2.bf16.msra.mxu0 %v2256
        %2901 = vmatprep.subr.bf16.mxu0 %v2253
        %2902 = vmatpush2.bf16.msra.mxu0 %v2252
        %2903 = vmatprep.mubr.bf16.mxu0 %v1376
        %2904 = vmatmul.mubr.bf16.gmra.mxu0 %v1374
        %v2905 = vpop.f32.mrf.mxu0
        %v2906 = vadd.f32 %v2865, %v2905
        %v2907 = vpop.f32.mrf.mxu0
        %v2908 = vadd.f32 %v2867, %v2907
        %v2909 = vpop.f32.mrf.mxu0
        %v2910 = vpop.f32.mrf.mxu0
        %2911 = vdwg.mxu0
        %2912 = vmatprep.subr.bf16.mxu0 %v2313
        %2913 = vmatpush1.bf16.msra.mxu0 %v2312
        %2914 = vmatprep.subr.bf16.mxu0 %v2309
        %2915 = vmatpush1.bf16.msra.mxu0 %v2308
        %2916 = vmatprep.subr.bf16.mxu0 %v2305
        %2917 = vmatpush1.bf16.msra.mxu0 %v2304
        %2918 = vmatprep.subr.bf16.mxu0 %v2301
        %2919 = vmatpush1.bf16.msra.mxu0 %v2300
        %2920 = vmatprep.subr.bf16.mxu0 %v2297
        %2921 = vmatpush1.bf16.msra.mxu0 %v2296
        %2922 = vmatprep.subr.bf16.mxu0 %v2293
        %2923 = vmatpush1.bf16.msra.mxu0 %v2292
        %2924 = vmatprep.subr.bf16.mxu0 %v2289
        %2925 = vmatpush1.bf16.msra.mxu0 %v2288
        %2926 = vmatprep.subr.bf16.mxu0 %v2285
        %2927 = vmatpush1.bf16.msra.mxu0 %v2284
        %2928 = vmatprep.subr.bf16.mxu0 %v2345
        %2929 = vmatpush2.bf16.msra.mxu0 %v2344
        %2930 = vmatprep.subr.bf16.mxu0 %v2341
        %2931 = vmatpush2.bf16.msra.mxu0 %v2340
        %2932 = vmatprep.subr.bf16.mxu0 %v2337
        %2933 = vmatpush2.bf16.msra.mxu0 %v2336
        %2934 = vmatprep.subr.bf16.mxu0 %v2333
        %2935 = vmatpush2.bf16.msra.mxu0 %v2332
        %2936 = vmatprep.subr.bf16.mxu0 %v2329
        %2937 = vmatpush2.bf16.msra.mxu0 %v2328
        %2938 = vmatprep.subr.bf16.mxu0 %v2325
        %2939 = vmatpush2.bf16.msra.mxu0 %v2324
        %2940 = vmatprep.subr.bf16.mxu0 %v2321
        %2941 = vmatpush2.bf16.msra.mxu0 %v2320
        %2942 = vmatprep.subr.bf16.mxu0 %v2317
        %2943 = vmatpush2.bf16.msra.mxu0 %v2316
        %2944 = vmatprep.mubr.bf16.mxu0 %v1373
        %2945 = vmatmul.mubr.bf16.gmra.mxu0 %v1359
        %v2946 = vpop.f32.mrf.mxu0
        %v2947 = vadd.f32 %v2906, %v2946
        %v2948 = vpop.f32.mrf.mxu0
        %v2949 = vadd.f32 %v2908, %v2948
        %v2950 = vpop.f32.mrf.mxu0
        %v2951 = vpop.f32.mrf.mxu0
        %2952 = vdwg.mxu0
        %2953 = vmatprep.subr.bf16.mxu0 %v2377
        %2954 = vmatpush1.bf16.msra.mxu0 %v2376
        %2955 = vmatprep.subr.bf16.mxu0 %v2373
        %2956 = vmatpush1.bf16.msra.mxu0 %v2372
        %2957 = vmatprep.subr.bf16.mxu0 %v2369
        %2958 = vmatpush1.bf16.msra.mxu0 %v2368
        %2959 = vmatprep.subr.bf16.mxu0 %v2365
        %2960 = vmatpush1.bf16.msra.mxu0 %v2364
        %2961 = vmatprep.subr.bf16.mxu0 %v2361
        %2962 = vmatpush1.bf16.msra.mxu0 %v2360
        %2963 = vmatprep.subr.bf16.mxu0 %v2357
        %2964 = vmatpush1.bf16.msra.mxu0 %v2356
        %2965 = vmatprep.subr.bf16.mxu0 %v2353
        %2966 = vmatpush1.bf16.msra.mxu0 %v2352
        %2967 = vmatprep.subr.bf16.mxu0 %v2349
        %2968 = vmatpush1.bf16.msra.mxu0 %v2348
        %2969 = vmatprep.subr.bf16.mxu0 %v2409
        %2970 = vmatpush2.bf16.msra.mxu0 %v2408
        %2971 = vmatprep.subr.bf16.mxu0 %v2405
        %2972 = vmatpush2.bf16.msra.mxu0 %v2404
        %2973 = vmatprep.subr.bf16.mxu0 %v2401
        %2974 = vmatpush2.bf16.msra.mxu0 %v2400
        %2975 = vmatprep.subr.bf16.mxu0 %v2397
        %2976 = vmatpush2.bf16.msra.mxu0 %v2396
        %2977 = vmatprep.subr.bf16.mxu0 %v2393
        %2978 = vmatpush2.bf16.msra.mxu0 %v2392
        %2979 = vmatprep.subr.bf16.mxu0 %v2389
        %2980 = vmatpush2.bf16.msra.mxu0 %v2388
        %2981 = vmatprep.subr.bf16.mxu0 %v2385
        %2982 = vmatpush2.bf16.msra.mxu0 %v2384
        %2983 = vmatprep.subr.bf16.mxu0 %v2381
        %2984 = vmatpush2.bf16.msra.mxu0 %v2380
        %2985 = vmatprep.mubr.bf16.mxu0 %v1377
        %2986 = vmatmul.mubr.bf16.gmra.mxu0 %v1375
        %v2987 = vpop.f32.mrf.mxu0
        %v2988 = vadd.f32 %v2947, %v2987
        %v2989 = vpop.f32.mrf.mxu0
        %v2990 = vadd.f32 %v2949, %v2989
        %v2991 = vpop.f32.mrf.mxu0
        %v2992 = vpop.f32.mrf.mxu0
        %2993 = vdwg.mxu0
        %v2994 = vmax.f32 %v2824, 0.0
        %v2995 = vmax.f32 %v2826, 0.0
        %v2996 = vmax.f32 %v2988, 0.0
        %v2997 = vmax.f32 %v2990, 0.0
        %s2998 = smul.u32 %s30, 512
        %v3003 = vcombine.low %v2994, %v2995
        %v3004 = vcombine.low %v2996, %v2997
        %v3006 = vunpack.c.l.s4 1983009808
        %v3007 = vunpack.c.0.s8 %v3006
        %v3008 = vlaneseq
        %v3009 = vshrl.u32 %v3008, 7
        %v3010 = vsub.s32 %v3007, %v3009
        %v3011 = vrot.slane %v3003, %v3010
        %v3013 = vunpack.c.l.s4 1983009808
        %v3014 = vunpack.c.0.s8 %v3013
        %v3015 = vlaneseq
        %v3016 = vshrl.u32 %v3015, 7
        %v3017 = vsub.s32 %v3014, %v3016
        %v3018 = vrot.slane %v3004, %v3017
        %v3019 = vcombine.low %v3011, %v3018
        %s3021 = sshra.s32 %s2998, 7
        %s3022 = sand.u32 %s2998, 127
        %s3023 = smul.addr %s3021, 2
        %s3024 = scalar_lea.vmem %s5, %s3023
        %3025 = vst [vmem:[%s3024] sm:$0xff] %v3019
        // Predicated region
        $region65: #{fcc_forward.4} parent=39 // pred_check
          %p3026 = pneg %p179
        $region66: #{fcc_forward.4} parent=39 // pred_check_branch
          %3028 = sbr.rel (%p3026) target = $region68
        $region67: #{fcc_forward.4} parent=39 // pred_region
          _
        $region68: #{fcc_forward.4} parent=39 // pred_fallthru
          _
        // Predicated region
        $region69: #{fcc_forward.4} parent=39 // pred_check
          %p3029 = pneg %p179
        $region70: #{fcc_forward.4} parent=39 // pred_check_branch
          %3031 = sbr.rel (%p3029) target = $region72
        $region71: #{fcc_forward.4} parent=39 // pred_region
          _
        $region72: #{fcc_forward.4} parent=39 // pred_fallthru
          _
      $region40: #{fcc_forward.4} parent=5 // pred_fallthru
        _
      %p3032 = scmp.le.s32.totalorder 2, %s20
      // Predicated region
      $region73: #{fcc_forward.4} parent=5 // pred_check
        %p3033 = pneg %p3032
      $region74: #{fcc_forward.4} parent=5 // pred_check_branch
        %3035 = sbr.rel (%p3033) target = $region76
      $region75: #{fcc_forward.4} parent=5 // pred_region
        %s3036 = ssub.s32 %s20, 2
      $region76: #{fcc_forward.4} parent=5 // pred_fallthru
        _
    $region6: #{fcc_forward.4} parent=1 // loop_footer
      %s24 = sadd.s32 1, %s20
    $region7: #{fcc_forward.4} parent=1 // loop_footer_branch
      %19 = sbr.rel target = $region3
    $region8: #{fcc_forward.4} parent=1 // loop_exit
      _
    %3037 = vsyncpa [#allocation4], 1
    %s3038 = scalar_lea.sflag [#allocation4], 1
    %3039 = vsyncpa %s3038, 1
    %3040 = vsyncpa [#allocation6], 1
    %s3041 = scalar_lea.sflag [#allocation6], 1
    %3042 = vsyncpa %s3041, 1
    %3043 = vsyncpa [#allocation9], 1
    %s3044 = scalar_lea.sflag [#allocation9], 1
    %3045 = vsyncpa %s3044, 1

</llo_original>
